<compile_context>
chip_gen: v7x
topology: tpu7x:2x2x1
jax: 0.10.0
libtpu: 0.0.40
codegen_flags: <defaults>
</compile_context>

<pallas_src>
import functools

import jax
import jax.numpy as jnp
from jax.experimental import pallas as pl
from jax.experimental.pallas import tpu as pltpu

# Small-shape stand-ins for the module's M = 320 and N = 256.
M = 20
N = 32
B = 2  # batch

_INV_SQRT2 = 0.7071067811865476


@functools.lru_cache(maxsize=None)
def _vmem_capacity_bytes():
    """Per-core VMEM capacity; conservative (v7x, 64 MiB) fallback if unknown."""
    try:
        cap = getattr(pltpu.get_tpu_info(), "vmem_capacity_bytes", None)
        if cap:
            return int(cap)
    except Exception:
        pass
    return 64 * 1024 * 1024


def _weight_tile_budget_bytes():
    # 128 MiB parts (v5e/v6e): 16 MiB weight tiles; 64 MiB parts (v7x): 8 MiB.
    # Double-buffered weight tiles + activations then stay well under the
    # per-core physical VMEM on every generation.
    big = _vmem_capacity_bytes() >= 96 * 1024 * 1024
    return (16 if big else 8) * 1024 * 1024


def _divisible_tile(dim, cap, quantum):
    """Largest multiple of `quantum` <= cap dividing dim, else dim itself."""
    if dim <= cap:
        return dim
    t = (cap // quantum) * quantum
    while t >= quantum:
        if dim % t == 0:
            return t
        t -= quantum
    return dim


def _pick_tn(k_dim, n_dim, budget):
    """Output-column tile width.  Budgeted on tk*tn int8 bytes; keeps nj >= 2
    where possible so v7x can megacore-shard the output-tile grid axis."""
    if n_dim <= 128:
        return n_dim
    cap = max(128, n_dim // 2)                 # nj >= 2 for megacore sharding
    if k_dim * 128 <= budget:                  # full-K column slabs fit budget
        cap = min(cap, max(128, (budget // k_dim // 128) * 128))
    else:                                      # K will be tiled; keep tn modest
        cap = min(cap, 1024)
    return _divisible_tile(n_dim, cap, 128)


def _pick_tk(k_dim, tn, budget):
    cap = max(256, budget // tn)
    return _divisible_tile(k_dim, cap, 256)


def _gelu_exact(y):
    # exact (erf-based) GELU — matches torch.nn.GELU() default
    return 0.5 * y * (1.0 + jax.lax.erf(y * _INV_SQRT2))


def _quantize_weight(w, tn):
    """Symmetric per-output-column int8 quantization + block-contiguous layout.

    Returns (w_blk int8 [nj, K, tn], scale f32 [1, Nout]).  With this layout
    each streamed (tk, tn) weight tile is a single contiguous HBM read.
    """
    k_dim, n_dim = w.shape
    nj = n_dim // tn
    amax = jnp.max(jnp.abs(w), axis=0)
    scale = jnp.maximum(amax, 1e-12) / 127.0
    wq = jnp.clip(jnp.round(w / scale), -127.0, 127.0).astype(jnp.int8)
    w_blk = wq.reshape(k_dim, nj, tn).transpose(1, 0, 2)
    return w_blk, scale.reshape(1, n_dim).astype(jnp.float32)


def _linear_q1_kernel(x_ref, w_ref, s_ref, b_ref, o_ref, *, apply_gelu):
    """y = act((x @ w_int8) * col_scale + b); whole K in one tile (no acc)."""
    w = w_ref[...].astype(jnp.bfloat16)   # VPU dequant; no int-MXU assumption
    y = jnp.dot(x_ref[...], w, preferred_element_type=jnp.float32)
    y = y * s_ref[...] + b_ref[...]
    if apply_gelu:
        y = _gelu_exact(y)
    o_ref[...] = y.astype(o_ref.dtype)


def _linear_qk_kernel(x_ref, w_ref, s_ref, b_ref, o_ref, acc_ref, *, apply_gelu):
    """K-tiled variant: x and int8 weight tiles both stream; f32 accumulation."""
    k = pl.program_id(1)

    @pl.when(k == 0)
    def _():
        acc_ref[...] = jnp.zeros_like(acc_ref)

    w = w_ref[...].astype(jnp.bfloat16)
    acc_ref[...] += jnp.dot(x_ref[...], w, preferred_element_type=jnp.float32)

    @pl.when(k == pl.num_programs(1) - 1)
    def _():
        y = acc_ref[...] * s_ref[...] + b_ref[...]
        if apply_gelu:
            y = _gelu_exact(y)
        o_ref[...] = y.astype(o_ref.dtype)


def linear_pallas(x, w_blk, scale, bias, *, apply_gelu, out_dtype=jnp.float32,
                  tk=None):
    """x: (B, K); w_blk: int8 (nj, K, tn); scale/bias over Nout -> (B, Nout)."""
    b_rows, k_dim = x.shape
    nj, kw, tn = w_blk.shape
    assert k_dim == kw
    n_dim = nj * tn

    budget = _weight_tile_budget_bytes()
    if tk is None:
        tk = _pick_tk(k_dim, tn, budget)
    assert k_dim % tk == 0
    nk = k_dim // tk

    # Pad batch to a full f32 sublane count (8): unmasked stores.
    b_pad = max(8, ((b_rows + 7) // 8) * 8)
    if b_pad != b_rows:
        x = jnp.pad(x, ((0, b_pad - b_rows), (0, 0)))
    if x.dtype != jnp.bfloat16:
        x = x.astype(jnp.bfloat16)
    scale2 = scale.reshape(1, n_dim).astype(jnp.float32)
    bias2 = bias.reshape(1, n_dim).astype(jnp.float32)

    out_bytes = jnp.dtype(out_dtype).itemsize
    cost = pl.CostEstimate(
        flops=2 * b_pad * k_dim * n_dim,
        transcendentals=b_pad * n_dim if apply_gelu else 0,
        bytes_accessed=(b_pad * k_dim * 2 * nj + k_dim * n_dim * 1
                        + 2 * n_dim * 4 + b_pad * n_dim * out_bytes),
    )

    if nk == 1:
        # Small-K fast path: 1-D grid over output tiles, no accumulator.
        kernel = functools.partial(_linear_q1_kernel, apply_gelu=apply_gelu)
        grid_spec = pltpu.PrefetchScalarGridSpec(
            num_scalar_prefetch=0,
            grid=(nj,),
            in_specs=[
                pl.BlockSpec((b_pad, k_dim), lambda j: (0, 0)),       # x resident
                pl.BlockSpec((None, k_dim, tn), lambda j: (j, 0, 0)),  # int8 w stream
                pl.BlockSpec((1, tn), lambda j: (0, j)),               # col scale
                pl.BlockSpec((1, tn), lambda j: (0, j)),               # bias
            ],
            out_specs=pl.BlockSpec((b_pad, tn), lambda j: (0, j)),
        )
        dim_sem = ("parallel",)
        acc_bytes = 0
        x_tile_bytes = b_pad * k_dim * 2
    else:
        # Large-K path (real-shape layer 1): big contiguous int8 weight tiles,
        # x streamed per K-tile, f32 accumulation in scratch.
        kernel = functools.partial(_linear_qk_kernel, apply_gelu=apply_gelu)
        grid_spec = pltpu.PrefetchScalarGridSpec(
            num_scalar_prefetch=0,
            grid=(nj, nk),
            in_specs=[
                pl.BlockSpec((b_pad, tk), lambda j, k: (0, k)),        # x stream
                pl.BlockSpec((None, tk, tn), lambda j, k: (j, k, 0)),  # int8 w stream
                pl.BlockSpec((1, tn), lambda j, k: (0, j)),            # col scale
                pl.BlockSpec((1, tn), lambda j, k: (0, j)),            # bias
            ],
            out_specs=pl.BlockSpec((b_pad, tn), lambda j, k: (0, j)),
            scratch_shapes=[pltpu.VMEM((b_pad, tn), jnp.float32)],
        )
        dim_sem = ("parallel", "arbitrary")
        acc_bytes = b_pad * tn * 4
        x_tile_bytes = b_pad * tk * 2

    # Size the VMEM limit from actual use (+50% and 8 MiB headroom), capped at
    # 3/4 of the physical per-core VMEM — never the whole v7x VMEM.
    need = (2 * tk * tn + 2 * x_tile_bytes + 2 * b_pad * tn * out_bytes
            + 4 * tn * 4 + acc_bytes)
    vmem_limit = max(16 * 1024 * 1024,
                     min(int(need * 1.5) + 8 * 1024 * 1024,
                         _vmem_capacity_bytes() * 3 // 4))

    out = pl.pallas_call(
        kernel,
        out_shape=jax.ShapeDtypeStruct((b_pad, n_dim), out_dtype),
        grid_spec=grid_spec,
        compiler_params=pltpu.CompilerParams(
            dimension_semantics=dim_sem,
            vmem_limit_bytes=vmem_limit),
        cost_estimate=cost,
    )(x, w_blk, scale2, bias2)
    return out[:b_rows]


def init_params(key):
    """PyTorch-style U(+/-1/sqrt(fan_in)) init, then per-output-column int8
    quantization and block-contiguous (nj, K, tn) weight layout."""
    budget = _weight_tile_budget_bytes()
    dims = [2 * M * N, 8 * N, 4 * N, 4 * N, 2 * N * N]
    params = []
    for i in range(4):
        key, kw, kb = jax.random.split(key, 3)
        fan_in, fan_out = dims[i], dims[i + 1]
        bound = 1.0 / float(fan_in) ** 0.5
        w = jax.random.uniform(kw, (fan_in, fan_out), jnp.float32, -bound, bound)
        b = jax.random.uniform(kb, (fan_out,), jnp.float32, -bound, bound)
        tn = _pick_tn(fan_in, fan_out, budget)
        w_blk, w_scale = _quantize_weight(w, tn)
        params.append((w_blk, w_scale, b))
    return params


def modu_network_forward(H, params):
    """Mirrors moduNetwork.forward: Flatten -> [Linear,GELU]x3 -> Linear -> QR."""
    batch = H.shape[0]
    x = H.reshape(batch, -1)                      # nn.Flatten (row-major)
    n_layers = len(params)
    for i, (w_blk, w_scale, b) in enumerate(params):
        last = i == n_layers - 1
        # intermediate layers emit bf16 so the next layer streams bf16 directly
        x = linear_pallas(x, w_blk, w_scale, b, apply_gelu=not last,
                          out_dtype=jnp.float32 if last else jnp.bfloat16)
    out = x.reshape(batch, 2, N, N)
    mtx_c = (out[:, 0, :, :] + 1j * out[:, 1, :, :]).astype(jnp.complex64)
    # TODO(synk): torch.linalg.qr (complex Householder QR) is iterative /
    # data-dependent; no clean Pallas equivalent — computed in plain JAX.
    q, _ = jnp.linalg.qr(mtx_c, mode="reduced")
    return jnp.stack([q.real, q.imag], axis=1).astype(jnp.float32)


if __name__ == "__main__":
    key = jax.random.PRNGKey(0)
    kH, kP = jax.random.split(key)
    H = jax.random.normal(kH, (B, 2, M, N), dtype=jnp.float32)
    params = init_params(kP)

    fwd = jax.jit(modu_network_forward)
    out = fwd(H, params)
    jax.block_until_ready(out)
    assert out.shape == (B, 2, N, N), out.shape
    assert out.dtype == jnp.float32
    assert bool(jnp.all(jnp.isfinite(out)))

    # Exercise both kernel paths (single-K and the K-tiled accumulation path
    # that real-shape layer 1 uses) and check against plain JAX on the same
    # int8-dequantized weights.
    w_blk, w_scale, bias = params[0]
    nj, k_dim, tn = w_blk.shape
    xs = H.reshape(B, -1)
    y_single = linear_pallas(xs, w_blk, w_scale, bias, apply_gelu=True)          # nk == 1
    y_multi = linear_pallas(xs, w_blk, w_scale, bias, apply_gelu=True, tk=256)   # nk == 5
    w_deq = (w_blk.transpose(1, 0, 2).reshape(k_dim, nj * tn).astype(jnp.float32)
             * w_scale)
    x_bf = xs.astype(jnp.bfloat16).astype(jnp.float32)
    y_ref = _gelu_exact(
        jnp.dot(x_bf, w_deq, precision=jax.lax.Precision.HIGHEST)
        + bias.reshape(1, -1))
    jax.block_until_ready((y_single, y_multi, y_ref))
    assert bool(jnp.allclose(y_single, y_multi, atol=2e-3, rtol=2e-3))
    assert bool(jnp.allclose(y_single, y_ref, atol=1e-2, rtol=1e-2))

    print("KERNEL_OK")
</pallas_src>

<mosaic_0001>
module attributes {stable_mosaic.version = 11 : i64} {
  func.func @_linear_q1_kernel(%arg0: i32, %arg1: memref<8x1280xbf16, #tpu.memory_space<vmem>>, %arg2: memref<1x1280x128xi8, #tpu.memory_space<vmem>>, %arg3: memref<1x128xf32, #tpu.memory_space<vmem>>, %arg4: memref<1x128xf32, #tpu.memory_space<vmem>>, %arg5: memref<8x128xbf16, #tpu.memory_space<vmem>>) attributes {dimension_semantics = [#tpu.dimension_semantics<parallel>], iteration_bounds = array<i64: 2>, scalar_prefetch = 0 : i64, scratch_operands = 0 : i64, tpu.core_type = #tpu.core_type<tc>, window_params = [{pipeline_mode = #tpu.pipeline_mode<synchronous>, transform_indices = @transform_0, window_bounds = array<i64: 8, 1280>}, {transform_indices = @transform_1, window_bounds = array<i64: 1, 1280, 128>}, {transform_indices = @transform_2, window_bounds = array<i64: 1, 128>}, {transform_indices = @transform_3, window_bounds = array<i64: 1, 128>}, {transform_indices = @transform_4, window_bounds = array<i64: 8, 128>}]} {
    %c0 = arith.constant 0 : index
    %c0_0 = arith.constant 0 : index
    %c0_1 = arith.constant 0 : index
    %0 = vector.load %arg2[%c0, %c0_0, %c0_1] : memref<1x1280x128xi8, #tpu.memory_space<vmem>>, vector<1x1280x128xi8>
    %1 = vector.shape_cast %0 : vector<1x1280x128xi8> to vector<1280x128xi8>
    %2 = arith.sitofp %1 : vector<1280x128xi8> to vector<1280x128xbf16>
    %c0_2 = arith.constant 0 : index
    %c0_3 = arith.constant 0 : index
    %3 = vector.load %arg1[%c0_2, %c0_3] : memref<8x1280xbf16, #tpu.memory_space<vmem>>, vector<8x1280xbf16>
    %cst = arith.constant dense<0.000000e+00> : vector<8x128xf32>
    %4 = tpu.matmul %3, %2, %cst {dimension_numbers = #tpu.dot_dimension_numbers<[1], [0], [0], [1], [0, 0, 1, 1], [], []>} : vector<8x1280xbf16>, vector<1280x128xbf16>, vector<8x128xf32> -> vector<8x128xf32>
    %c0_4 = arith.constant 0 : index
    %c0_5 = arith.constant 0 : index
    %5 = vector.load %arg3[%c0_4, %c0_5] : memref<1x128xf32, #tpu.memory_space<vmem>>, vector<1x128xf32>
    %6 = vector.broadcast %5 : vector<1x128xf32> to vector<8x128xf32>
    %7 = arith.mulf %4, %6 : vector<8x128xf32>
    %c0_6 = arith.constant 0 : index
    %c0_7 = arith.constant 0 : index
    %8 = vector.load %arg4[%c0_6, %c0_7] : memref<1x128xf32, #tpu.memory_space<vmem>>, vector<1x128xf32>
    %9 = vector.broadcast %8 : vector<1x128xf32> to vector<8x128xf32>
    %10 = arith.addf %7, %9 : vector<8x128xf32>
    %cst_8 = arith.constant 5.000000e-01 : f32
    %11 = vector.broadcast %cst_8 : f32 to vector<8x128xf32>
    %12 = arith.mulf %11, %10 : vector<8x128xf32>
    %cst_9 = arith.constant 0.707106769 : f32
    %13 = vector.broadcast %cst_9 : f32 to vector<8x128xf32>
    %14 = arith.mulf %10, %13 : vector<8x128xf32>
    %15 = math.erf %14 : vector<8x128xf32>
    %cst_10 = arith.constant 1.000000e+00 : f32
    %16 = vector.broadcast %cst_10 : f32 to vector<8x128xf32>
    %17 = arith.addf %16, %15 : vector<8x128xf32>
    %18 = arith.mulf %12, %17 : vector<8x128xf32>
    %19 = arith.truncf %18 : vector<8x128xf32> to vector<8x128xbf16>
    %c0_11 = arith.constant 0 : index
    %c0_12 = arith.constant 0 : index
    %20 = vector.load %arg5[%c0_11, %c0_12] : memref<8x128xbf16, #tpu.memory_space<vmem>>, vector<8x128xbf16>
    tpu.vector_store %arg5[%c0_11, %c0_12], %19 {strides = array<i32>} : memref<8x128xbf16, #tpu.memory_space<vmem>>, vector<8x128xbf16>,
    return
  }
  func.func @transform_0(%arg0: i32) -> (i32, i32) {
    %c0_i32 = arith.constant 0 : i32
    %c0_i32_0 = arith.constant 0 : i32
    %c0_i32_1 = arith.constant 0 : i32
    return %c0_i32, %c0_i32_0 : i32, i32
  }
  func.func @transform_1(%arg0: i32) -> (i32, i32, i32) {
    %c0_i32 = arith.constant 0 : i32
    %c0_i32_0 = arith.constant 0 : i32
    %c0_i32_1 = arith.constant 0 : i32
    return %arg0, %c0_i32, %c0_i32_0 : i32, i32, i32
  }
  func.func @transform_2(%arg0: i32) -> (i32, i32) {
    %c0_i32 = arith.constant 0 : i32
    %c0_i32_0 = arith.constant 0 : i32
    return %c0_i32, %arg0 : i32, i32
  }
  func.func @transform_3(%arg0: i32) -> (i32, i32) {
    %c0_i32 = arith.constant 0 : i32
    %c0_i32_0 = arith.constant 0 : i32
    return %c0_i32, %arg0 : i32, i32
  }
  func.func @transform_4(%arg0: i32) -> (i32, i32) {
    %c0_i32 = arith.constant 0 : i32
    %c0_i32_0 = arith.constant 0 : i32
    return %c0_i32, %arg0 : i32, i32
  }
}

module attributes {stable_mosaic.version = 11 : i64} {
  func.func @_linear_q1_kernel(%arg0: i32, %arg1: memref<8x128xbf16, #tpu.memory_space<vmem>>, %arg2: memref<1x128x128xi8, #tpu.memory_space<vmem>>, %arg3: memref<1x128xf32, #tpu.memory_space<vmem>>, %arg4: memref<1x128xf32, #tpu.memory_space<vmem>>, %arg5: memref<8x128xbf16, #tpu.memory_space<vmem>>) attributes {dimension_semantics = [#tpu.dimension_semantics<parallel>], iteration_bounds = array<i64: 1>, scalar_prefetch = 0 : i64, scratch_operands = 0 : i64, tpu.core_type = #tpu.core_type<tc>, window_params = [{pipeline_mode = #tpu.pipeline_mode<synchronous>, transform_indices = @transform_0, window_bounds = array<i64: 8, 128>}, {transform_indices = @transform_1, window_bounds = array<i64: 1, 128, 128>}, {transform_indices = @transform_2, window_bounds = array<i64: 1, 128>}, {transform_indices = @transform_3, window_bounds = array<i64: 1, 128>}, {transform_indices = @transform_4, window_bounds = array<i64: 8, 128>}]} {
    %c0 = arith.constant 0 : index
    %c0_0 = arith.constant 0 : index
    %c0_1 = arith.constant 0 : index
    %0 = vector.load %arg2[%c0, %c0_0, %c0_1] : memref<1x128x128xi8, #tpu.memory_space<vmem>>, vector<1x128x128xi8>
    %1 = vector.shape_cast %0 : vector<1x128x128xi8> to vector<128x128xi8>
    %2 = arith.sitofp %1 : vector<128x128xi8> to vector<128x128xbf16>
    %c0_2 = arith.constant 0 : index
    %c0_3 = arith.constant 0 : index
    %3 = vector.load %arg1[%c0_2, %c0_3] : memref<8x128xbf16, #tpu.memory_space<vmem>>, vector<8x128xbf16>
    %cst = arith.constant dense<0.000000e+00> : vector<8x128xf32>
    %4 = tpu.matmul %3, %2, %cst {dimension_numbers = #tpu.dot_dimension_numbers<[1], [0], [0], [1], [0, 0, 1, 1], [], []>} : vector<8x128xbf16>, vector<128x128xbf16>, vector<8x128xf32> -> vector<8x128xf32>
    %c0_4 = arith.constant 0 : index
    %c0_5 = arith.constant 0 : index
    %5 = vector.load %arg3[%c0_4, %c0_5] : memref<1x128xf32, #tpu.memory_space<vmem>>, vector<1x128xf32>
    %6 = vector.broadcast %5 : vector<1x128xf32> to vector<8x128xf32>
    %7 = arith.mulf %4, %6 : vector<8x128xf32>
    %c0_6 = arith.constant 0 : index
    %c0_7 = arith.constant 0 : index
    %8 = vector.load %arg4[%c0_6, %c0_7] : memref<1x128xf32, #tpu.memory_space<vmem>>, vector<1x128xf32>
    %9 = vector.broadcast %8 : vector<1x128xf32> to vector<8x128xf32>
    %10 = arith.addf %7, %9 : vector<8x128xf32>
    %cst_8 = arith.constant 5.000000e-01 : f32
    %11 = vector.broadcast %cst_8 : f32 to vector<8x128xf32>
    %12 = arith.mulf %11, %10 : vector<8x128xf32>
    %cst_9 = arith.constant 0.707106769 : f32
    %13 = vector.broadcast %cst_9 : f32 to vector<8x128xf32>
    %14 = arith.mulf %10, %13 : vector<8x128xf32>
    %15 = math.erf %14 : vector<8x128xf32>
    %cst_10 = arith.constant 1.000000e+00 : f32
    %16 = vector.broadcast %cst_10 : f32 to vector<8x128xf32>
    %17 = arith.addf %16, %15 : vector<8x128xf32>
    %18 = arith.mulf %12, %17 : vector<8x128xf32>
    %19 = arith.truncf %18 : vector<8x128xf32> to vector<8x128xbf16>
    %c0_11 = arith.constant 0 : index
    %c0_12 = arith.constant 0 : index
    %20 = vector.load %arg5[%c0_11, %c0_12] : memref<8x128xbf16, #tpu.memory_space<vmem>>, vector<8x128xbf16>
    tpu.vector_store %arg5[%c0_11, %c0_12], %19 {strides = array<i32>} : memref<8x128xbf16, #tpu.memory_space<vmem>>, vector<8x128xbf16>,
    return
  }
  func.func @transform_0(%arg0: i32) -> (i32, i32) {
    %c0_i32 = arith.constant 0 : i32
    %c0_i32_0 = arith.constant 0 : i32
    %c0_i32_1 = arith.constant 0 : i32
    return %c0_i32, %c0_i32_0 : i32, i32
  }
  func.func @transform_1(%arg0: i32) -> (i32, i32, i32) {
    %c0_i32 = arith.constant 0 : i32
    %c0_i32_0 = arith.constant 0 : i32
    %c0_i32_1 = arith.constant 0 : i32
    return %arg0, %c0_i32, %c0_i32_0 : i32, i32, i32
  }
  func.func @transform_2(%arg0: i32) -> (i32, i32) {
    %c0_i32 = arith.constant 0 : i32
    %c0_i32_0 = arith.constant 0 : i32
    return %c0_i32, %arg0 : i32, i32
  }
  func.func @transform_3(%arg0: i32) -> (i32, i32) {
    %c0_i32 = arith.constant 0 : i32
    %c0_i32_0 = arith.constant 0 : i32
    return %c0_i32, %arg0 : i32, i32
  }
  func.func @transform_4(%arg0: i32) -> (i32, i32) {
    %c0_i32 = arith.constant 0 : i32
    %c0_i32_0 = arith.constant 0 : i32
    return %c0_i32, %arg0 : i32, i32
  }
}

module attributes {stable_mosaic.version = 11 : i64} {
  func.func @_linear_q1_kernel(%arg0: i32, %arg1: memref<8x256xbf16, #tpu.memory_space<vmem>>, %arg2: memref<1x256x128xi8, #tpu.memory_space<vmem>>, %arg3: memref<1x128xf32, #tpu.memory_space<vmem>>, %arg4: memref<1x128xf32, #tpu.memory_space<vmem>>, %arg5: memref<8x128xbf16, #tpu.memory_space<vmem>>) attributes {dimension_semantics = [#tpu.dimension_semantics<parallel>], iteration_bounds = array<i64: 1>, scalar_prefetch = 0 : i64, scratch_operands = 0 : i64, tpu.core_type = #tpu.core_type<tc>, window_params = [{pipeline_mode = #tpu.pipeline_mode<synchronous>, transform_indices = @transform_0, window_bounds = array<i64: 8, 256>}, {transform_indices = @transform_1, window_bounds = array<i64: 1, 256, 128>}, {transform_indices = @transform_2, window_bounds = array<i64: 1, 128>}, {transform_indices = @transform_3, window_bounds = array<i64: 1, 128>}, {transform_indices = @transform_4, window_bounds = array<i64: 8, 128>}]} {
    %c0 = arith.constant 0 : index
    %c0_0 = arith.constant 0 : index
    %c0_1 = arith.constant 0 : index
    %0 = vector.load %arg2[%c0, %c0_0, %c0_1] : memref<1x256x128xi8, #tpu.memory_space<vmem>>, vector<1x256x128xi8>
    %1 = vector.shape_cast %0 : vector<1x256x128xi8> to vector<256x128xi8>
    %2 = arith.sitofp %1 : vector<256x128xi8> to vector<256x128xbf16>
    %c0_2 = arith.constant 0 : index
    %c0_3 = arith.constant 0 : index
    %3 = vector.load %arg1[%c0_2, %c0_3] : memref<8x256xbf16, #tpu.memory_space<vmem>>, vector<8x256xbf16>
    %cst = arith.constant dense<0.000000e+00> : vector<8x128xf32>
    %4 = tpu.matmul %3, %2, %cst {dimension_numbers = #tpu.dot_dimension_numbers<[1], [0], [0], [1], [0, 0, 1, 1], [], []>} : vector<8x256xbf16>, vector<256x128xbf16>, vector<8x128xf32> -> vector<8x128xf32>
    %c0_4 = arith.constant 0 : index
    %c0_5 = arith.constant 0 : index
    %5 = vector.load %arg3[%c0_4, %c0_5] : memref<1x128xf32, #tpu.memory_space<vmem>>, vector<1x128xf32>
    %6 = vector.broadcast %5 : vector<1x128xf32> to vector<8x128xf32>
    %7 = arith.mulf %4, %6 : vector<8x128xf32>
    %c0_6 = arith.constant 0 : index
    %c0_7 = arith.constant 0 : index
    %8 = vector.load %arg4[%c0_6, %c0_7] : memref<1x128xf32, #tpu.memory_space<vmem>>, vector<1x128xf32>
    %9 = vector.broadcast %8 : vector<1x128xf32> to vector<8x128xf32>
    %10 = arith.addf %7, %9 : vector<8x128xf32>
    %cst_8 = arith.constant 5.000000e-01 : f32
    %11 = vector.broadcast %cst_8 : f32 to vector<8x128xf32>
    %12 = arith.mulf %11, %10 : vector<8x128xf32>
    %cst_9 = arith.constant 0.707106769 : f32
    %13 = vector.broadcast %cst_9 : f32 to vector<8x128xf32>
    %14 = arith.mulf %10, %13 : vector<8x128xf32>
    %15 = math.erf %14 : vector<8x128xf32>
    %cst_10 = arith.constant 1.000000e+00 : f32
    %16 = vector.broadcast %cst_10 : f32 to vector<8x128xf32>
    %17 = arith.addf %16, %15 : vector<8x128xf32>
    %18 = arith.mulf %12, %17 : vector<8x128xf32>
    %19 = arith.truncf %18 : vector<8x128xf32> to vector<8x128xbf16>
    %c0_11 = arith.constant 0 : index
    %c0_12 = arith.constant 0 : index
    %20 = vector.load %arg5[%c0_11, %c0_12] : memref<8x128xbf16, #tpu.memory_space<vmem>>, vector<8x128xbf16>
    tpu.vector_store %arg5[%c0_11, %c0_12], %19 {strides = array<i32>} : memref<8x128xbf16, #tpu.memory_space<vmem>>, vector<8x128xbf16>,
    return
  }
  func.func @transform_0(%arg0: i32) -> (i32, i32) {
    %c0_i32 = arith.constant 0 : i32
    %c0_i32_0 = arith.constant 0 : i32
    %c0_i32_1 = arith.constant 0 : i32
    return %c0_i32, %c0_i32_0 : i32, i32
  }
  func.func @transform_1(%arg0: i32) -> (i32, i32, i32) {
    %c0_i32 = arith.constant 0 : i32
    %c0_i32_0 = arith.constant 0 : i32
    %c0_i32_1 = arith.constant 0 : i32
    return %arg0, %c0_i32, %c0_i32_0 : i32, i32, i32
  }
  func.func @transform_2(%arg0: i32) -> (i32, i32) {
    %c0_i32 = arith.constant 0 : i32
    %c0_i32_0 = arith.constant 0 : i32
    return %c0_i32, %arg0 : i32, i32
  }
  func.func @transform_3(%arg0: i32) -> (i32, i32) {
    %c0_i32 = arith.constant 0 : i32
    %c0_i32_0 = arith.constant 0 : i32
    return %c0_i32, %arg0 : i32, i32
  }
  func.func @transform_4(%arg0: i32) -> (i32, i32) {
    %c0_i32 = arith.constant 0 : i32
    %c0_i32_0 = arith.constant 0 : i32
    return %c0_i32, %arg0 : i32, i32
  }
}

module attributes {stable_mosaic.version = 11 : i64} {
  func.func @_linear_q1_kernel(%arg0: i32, %arg1: memref<8x128xbf16, #tpu.memory_space<vmem>>, %arg2: memref<1x128x1024xi8, #tpu.memory_space<vmem>>, %arg3: memref<1x1024xf32, #tpu.memory_space<vmem>>, %arg4: memref<1x1024xf32, #tpu.memory_space<vmem>>, %arg5: memref<8x1024xf32, #tpu.memory_space<vmem>>) attributes {dimension_semantics = [#tpu.dimension_semantics<parallel>], iteration_bounds = array<i64: 2>, scalar_prefetch = 0 : i64, scratch_operands = 0 : i64, tpu.core_type = #tpu.core_type<tc>, window_params = [{pipeline_mode = #tpu.pipeline_mode<synchronous>, transform_indices = @transform_0, window_bounds = array<i64: 8, 128>}, {transform_indices = @transform_1, window_bounds = array<i64: 1, 128, 1024>}, {transform_indices = @transform_2, window_bounds = array<i64: 1, 1024>}, {transform_indices = @transform_3, window_bounds = array<i64: 1, 1024>}, {transform_indices = @transform_4, window_bounds = array<i64: 8, 1024>}]} {
    %c0 = arith.constant 0 : index
    %c0_0 = arith.constant 0 : index
    %c0_1 = arith.constant 0 : index
    %0 = vector.load %arg2[%c0, %c0_0, %c0_1] : memref<1x128x1024xi8, #tpu.memory_space<vmem>>, vector<1x128x1024xi8>
    %1 = vector.shape_cast %0 : vector<1x128x1024xi8> to vector<128x1024xi8>
    %2 = arith.sitofp %1 : vector<128x1024xi8> to vector<128x1024xbf16>
    %c0_2 = arith.constant 0 : index
    %c0_3 = arith.constant 0 : index
    %3 = vector.load %arg1[%c0_2, %c0_3] : memref<8x128xbf16, #tpu.memory_space<vmem>>, vector<8x128xbf16>
    %cst = arith.constant dense<0.000000e+00> : vector<8x1024xf32>
    %4 = tpu.matmul %3, %2, %cst {dimension_numbers = #tpu.dot_dimension_numbers<[1], [0], [0], [1], [0, 0, 1, 1], [], []>} : vector<8x128xbf16>, vector<128x1024xbf16>, vector<8x1024xf32> -> vector<8x1024xf32>
    %c0_4 = arith.constant 0 : index
    %c0_5 = arith.constant 0 : index
    %5 = vector.load %arg3[%c0_4, %c0_5] : memref<1x1024xf32, #tpu.memory_space<vmem>>, vector<1x1024xf32>
    %6 = vector.broadcast %5 : vector<1x1024xf32> to vector<8x1024xf32>
    %7 = arith.mulf %4, %6 : vector<8x1024xf32>
    %c0_6 = arith.constant 0 : index
    %c0_7 = arith.constant 0 : index
    %8 = vector.load %arg4[%c0_6, %c0_7] : memref<1x1024xf32, #tpu.memory_space<vmem>>, vector<1x1024xf32>
    %9 = vector.broadcast %8 : vector<1x1024xf32> to vector<8x1024xf32>
    %10 = arith.addf %7, %9 : vector<8x1024xf32>
    %c0_8 = arith.constant 0 : index
    %c0_9 = arith.constant 0 : index
    %11 = vector.load %arg5[%c0_8, %c0_9] : memref<8x1024xf32, #tpu.memory_space<vmem>>, vector<8x1024xf32>
    tpu.vector_store %arg5[%c0_8, %c0_9], %10 {strides = array<i32>} : memref<8x1024xf32, #tpu.memory_space<vmem>>, vector<8x1024xf32>,
    return
  }
  func.func @transform_0(%arg0: i32) -> (i32, i32) {
    %c0_i32 = arith.constant 0 : i32
    %c0_i32_0 = arith.constant 0 : i32
    %c0_i32_1 = arith.constant 0 : i32
    return %c0_i32, %c0_i32_0 : i32, i32
  }
  func.func @transform_1(%arg0: i32) -> (i32, i32, i32) {
    %c0_i32 = arith.constant 0 : i32
    %c0_i32_0 = arith.constant 0 : i32
    %c0_i32_1 = arith.constant 0 : i32
    return %arg0, %c0_i32, %c0_i32_0 : i32, i32, i32
  }
  func.func @transform_2(%arg0: i32) -> (i32, i32) {
    %c0_i32 = arith.constant 0 : i32
    %c0_i32_0 = arith.constant 0 : i32
    return %c0_i32, %arg0 : i32, i32
  }
  func.func @transform_3(%arg0: i32) -> (i32, i32) {
    %c0_i32 = arith.constant 0 : i32
    %c0_i32_0 = arith.constant 0 : i32
    return %c0_i32, %arg0 : i32, i32
  }
  func.func @transform_4(%arg0: i32) -> (i32, i32) {
    %c0_i32 = arith.constant 0 : i32
    %c0_i32_0 = arith.constant 0 : i32
    return %c0_i32, %arg0 : i32, i32
  }
}

</mosaic_0001>

<llo_original>
// kernel: modu_network_forward.5
$region0: #{modu_network_forward.5}
  #allocation0 [shape = 'u32[]', space=smem, size = 0x4, offset = 0x4, fixed_abs, tag = 'smem constant byte address 0x4 - core index']
  #allocation1 [shape = 'u32[144,128]{1,0:T(1,128)}', space=vmem, size = 0x12000, scoped, tag = 'internal scratch']
  %s0 = inlined_call_operand.vmem [shape: bf16[8,256], index: 0, kind: input, shape index: {}]
  %s1 = inlined_call_operand.vmem [shape: s8[1,256,128], index: 1, kind: input, shape index: {}]
  %s2 = inlined_call_operand.vmem [shape: f32[1,128], index: 2, kind: input, shape index: {}]
  %s3 = inlined_call_operand.vmem [shape: f32[1,128], index: 3, kind: input, shape index: {}]
  %s4 = inlined_call_operand.vmem [shape: bf16[8,128], index: 4, kind: output, shape index: {}]
  %s5 = sld [smem:[#allocation0]]
  $region26: #{modu_network_forward.5} parent=0
    _
  %s7 = ssub.s32 1, %s5
  %s8 = scalar_select 0, %s7, %s5
  // Predicated region
  $region2: #{modu_network_forward.5} parent=0 // pred_check
    _
  $region3: #{modu_network_forward.5} parent=0 // pred_check_branch
    %10 = sbr.rel (0) target = $region5
  $region4: #{modu_network_forward.5} parent=0 // pred_region
    _
  $region5: #{modu_network_forward.5} parent=0 // pred_fallthru
    _
  // Predicated region
  $region6: #{modu_network_forward.5} parent=0 // pred_check
    _
  $region7: #{modu_network_forward.5} parent=0 // pred_check_branch
    %12 = sbr.rel (0) target = $region9
  $region8: #{modu_network_forward.5} parent=0 // pred_region
    _
  $region9: #{modu_network_forward.5} parent=0 // pred_fallthru
    _
  // Predicated region
  $region10: #{modu_network_forward.5} parent=0 // pred_check
    _
  $region11: #{modu_network_forward.5} parent=0 // pred_check_branch
    %14 = sbr.rel (0) target = $region13
  $region12: #{modu_network_forward.5} parent=0 // pred_region
    _
  $region13: #{modu_network_forward.5} parent=0 // pred_fallthru
    _
  // Predicated region
  $region14: #{modu_network_forward.5} parent=0 // pred_check
    _
  $region15: #{modu_network_forward.5} parent=0 // pred_check_branch
    %16 = sbr.rel (0) target = $region17
  $region16: #{modu_network_forward.5} parent=0 // pred_region
    _
  $region17: #{modu_network_forward.5} parent=0 // pred_fallthru
    _
  %v18 = vld [vmem:[%s1] sm:$0xff]
  %v19 = vld [vmem:[%s1 + $0x8] sm:$0xff]
  %v20 = vld [vmem:[%s1 + $0x10] sm:$0xff]
  %v21 = vld [vmem:[%s1 + $0x18] sm:$0xff]
  %v22 = vld [vmem:[%s1 + $0x20] sm:$0xff]
  %v23 = vld [vmem:[%s1 + $0x28] sm:$0xff]
  %v24 = vld [vmem:[%s1 + $0x30] sm:$0xff]
  %v25 = vld [vmem:[%s1 + $0x38] sm:$0xff]
  %v26 = vunpack.c.l.s8.bf16 %v18
  %v27 = vunpack.c.h.s8.bf16 %v18
  %v28 = vunpack.c.l.s8.bf16 %v19
  %v29 = vunpack.c.h.s8.bf16 %v19
  %v30 = vunpack.c.l.s8.bf16 %v20
  %v31 = vunpack.c.h.s8.bf16 %v20
  %v32 = vunpack.c.l.s8.bf16 %v21
  %v33 = vunpack.c.h.s8.bf16 %v21
  %v34 = vunpack.c.l.s8.bf16 %v22
  %v35 = vunpack.c.h.s8.bf16 %v22
  %v36 = vunpack.c.l.s8.bf16 %v23
  %v37 = vunpack.c.h.s8.bf16 %v23
  %v38 = vunpack.c.l.s8.bf16 %v24
  %v39 = vunpack.c.h.s8.bf16 %v24
  %v40 = vunpack.c.l.s8.bf16 %v25
  %v41 = vunpack.c.h.s8.bf16 %v25
  %v42 = vld [vmem:[%s0] sm:$0xff]
  %v44 = vunpack.c.l.b16 %v42
  %v45 = vunpack.c.h.b16 %v42
  %v46 = vpack.c.b16 %v44, %v44
  %v47 = vpack.c.b16 %v45, %v45
  %50 = vmatprep.subr.bf16.mxu0 0
  %51 = vmatpush1.bf16.msra.mxu0 %v26
  %52 = vmatprep.subr.bf16.mxu0 0
  %53 = vmatpush1.bf16.msra.mxu0 %v27
  %54 = vmatprep.subr.bf16.mxu0 0
  %55 = vmatpush1.bf16.msra.mxu0 %v28
  %56 = vmatprep.subr.bf16.mxu0 0
  %57 = vmatpush1.bf16.msra.mxu0 %v29
  %58 = vmatprep.subr.bf16.mxu0 0
  %59 = vmatpush1.bf16.msra.mxu0 %v30
  %60 = vmatprep.subr.bf16.mxu0 0
  %61 = vmatpush1.bf16.msra.mxu0 %v31
  %62 = vmatprep.subr.bf16.mxu0 0
  %63 = vmatpush1.bf16.msra.mxu0 %v32
  %64 = vmatprep.subr.bf16.mxu0 0
  %65 = vmatpush1.bf16.msra.mxu0 %v33
  %66 = vmatprep.subr.bf16.mxu0 0
  %67 = vmatpush1.bf16.msra.mxu0 %v34
  %68 = vmatprep.subr.bf16.mxu0 0
  %69 = vmatpush1.bf16.msra.mxu0 %v35
  %70 = vmatprep.subr.bf16.mxu0 0
  %71 = vmatpush1.bf16.msra.mxu0 %v36
  %72 = vmatprep.subr.bf16.mxu0 0
  %73 = vmatpush1.bf16.msra.mxu0 %v37
  %74 = vmatprep.subr.bf16.mxu0 0
  %75 = vmatpush1.bf16.msra.mxu0 %v38
  %76 = vmatprep.subr.bf16.mxu0 0
  %77 = vmatpush1.bf16.msra.mxu0 %v39
  %78 = vmatprep.subr.bf16.mxu0 0
  %79 = vmatpush1.bf16.msra.mxu0 %v40
  %80 = vmatprep.subr.bf16.mxu0 0
  %81 = vmatpush1.bf16.msra.mxu0 %v41
  %82 = vmatprep.mubr.bf16.mxu0 %v47
  %83 = vmatmul.mubr.bf16.gmra.mrb[0].mxu0 %v46
  %v84 = vpop.f32.mrb[0].mxu0
  %v85 = vadd.f32 0.0, %v84
  %v86 = vpop.f32.mrb[0].mxu0
  %v87 = vpop.f32.mrb[0].mxu0
  %v88 = vpop.f32.mrb[0].mxu0
  %89 = vdwg.mxu0
  %v90 = vld [vmem:[%s2] sm:$0x1]
  %v92 = vlaneseq
  %v93 = vshrl.u32 %v92, 7
  %v94 = vsub.s32 0, %v93
  %v95 = vrot.slane %v90, %v94
  %v97 = vmul.f32 %v85, %v95
  %v98 = vld [vmem:[%s3] sm:$0x1]
  %v100 = vlaneseq
  %v101 = vshrl.u32 %v100, 7
  %v102 = vsub.s32 0, %v101
  %v103 = vrot.slane %v98, %v102
  %v105 = vadd.f32 %v97, %v103
  %v106 = vmul.f32 %v105, 0.5
  %v107 = vmul.f32 %v105, 0.70710677
  %v108 = verf.f32.pop %v107
  %v109 = vadd.f32 %v108, 1.0
  %v110 = vmul.f32 %v106, %v109
  %v111 = vpack.c.bf16 %v110, %v110
  %112 = vst [vmem:[%s4] sm:$0xf] %v111
  // Predicated region
  $region18: #{modu_network_forward.5} parent=0 // pred_check
    _
  $region19: #{modu_network_forward.5} parent=0 // pred_check_branch
    %114 = sbr.rel (0) target = $region21
  $region20: #{modu_network_forward.5} parent=0 // pred_region
    _
  $region21: #{modu_network_forward.5} parent=0 // pred_fallthru
    _
  // Predicated region
  $region22: #{modu_network_forward.5} parent=0 // pred_check
    _
  $region23: #{modu_network_forward.5} parent=0 // pred_check_branch
    %116 = sbr.rel (0) target = $region25
  $region24: #{modu_network_forward.5} parent=0 // pred_region
    _
  $region25: #{modu_network_forward.5} parent=0 // pred_fallthru
    _

// kernel: modu_network_forward.6
$region0: #{modu_network_forward.6}
  #allocation0 [shape = 'u32[]', space=smem, size = 0x4, offset = 0x4, fixed_abs, tag = 'smem constant byte address 0x4 - core index']
  #allocation1 [shape = 'u32[144,128]{1,0:T(1,128)}', space=vmem, size = 0x12000, scoped, tag = 'internal scratch']
  %s0 = inlined_call_operand.vmem [shape: bf16[8,128], index: 0, kind: input, shape index: {}]
  %s1 = inlined_call_operand.vmem [shape: s8[1,128,128], index: 1, kind: input, shape index: {}]
  %s2 = inlined_call_operand.vmem [shape: f32[1,128], index: 2, kind: input, shape index: {}]
  %s3 = inlined_call_operand.vmem [shape: f32[1,128], index: 3, kind: input, shape index: {}]
  %s4 = inlined_call_operand.vmem [shape: bf16[8,128], index: 4, kind: output, shape index: {}]
  %s5 = sld [smem:[#allocation0]]
  $region26: #{modu_network_forward.6} parent=0
    _
  %s7 = ssub.s32 1, %s5
  %s8 = scalar_select 0, %s7, %s5
  // Predicated region
  $region2: #{modu_network_forward.6} parent=0 // pred_check
    _
  $region3: #{modu_network_forward.6} parent=0 // pred_check_branch
    %10 = sbr.rel (0) target = $region5
  $region4: #{modu_network_forward.6} parent=0 // pred_region
    _
  $region5: #{modu_network_forward.6} parent=0 // pred_fallthru
    _
  // Predicated region
  $region6: #{modu_network_forward.6} parent=0 // pred_check
    _
  $region7: #{modu_network_forward.6} parent=0 // pred_check_branch
    %12 = sbr.rel (0) target = $region9
  $region8: #{modu_network_forward.6} parent=0 // pred_region
    _
  $region9: #{modu_network_forward.6} parent=0 // pred_fallthru
    _
  // Predicated region
  $region10: #{modu_network_forward.6} parent=0 // pred_check
    _
  $region11: #{modu_network_forward.6} parent=0 // pred_check_branch
    %14 = sbr.rel (0) target = $region13
  $region12: #{modu_network_forward.6} parent=0 // pred_region
    _
  $region13: #{modu_network_forward.6} parent=0 // pred_fallthru
    _
  // Predicated region
  $region14: #{modu_network_forward.6} parent=0 // pred_check
    _
  $region15: #{modu_network_forward.6} parent=0 // pred_check_branch
    %16 = sbr.rel (0) target = $region17
  $region16: #{modu_network_forward.6} parent=0 // pred_region
    _
  $region17: #{modu_network_forward.6} parent=0 // pred_fallthru
    _
  %v18 = vld [vmem:[%s1] sm:$0xff]
  %v19 = vld [vmem:[%s1 + $0x8] sm:$0xff]
  %v20 = vld [vmem:[%s1 + $0x10] sm:$0xff]
  %v21 = vld [vmem:[%s1 + $0x18] sm:$0xff]
  %v22 = vunpack.c.l.s8.bf16 %v18
  %v23 = vunpack.c.h.s8.bf16 %v18
  %v24 = vunpack.c.l.s8.bf16 %v19
  %v25 = vunpack.c.h.s8.bf16 %v19
  %v26 = vunpack.c.l.s8.bf16 %v20
  %v27 = vunpack.c.h.s8.bf16 %v20
  %v28 = vunpack.c.l.s8.bf16 %v21
  %v29 = vunpack.c.h.s8.bf16 %v21
  %v30 = vld [vmem:[%s0] sm:$0xf]
  %31 = vmatprep.subr.bf16.mxu0 0
  %32 = vmatpush1.bf16.msra.mxu0 %v22
  %33 = vmatprep.subr.bf16.mxu0 0
  %34 = vmatpush1.bf16.msra.mxu0 %v23
  %35 = vmatprep.subr.bf16.mxu0 0
  %36 = vmatpush1.bf16.msra.mxu0 %v24
  %37 = vmatprep.subr.bf16.mxu0 0
  %38 = vmatpush1.bf16.msra.mxu0 %v25
  %39 = vmatprep.subr.bf16.mxu0 0
  %40 = vmatpush1.bf16.msra.mxu0 %v26
  %41 = vmatprep.subr.bf16.mxu0 0
  %42 = vmatpush1.bf16.msra.mxu0 %v27
  %43 = vmatprep.subr.bf16.mxu0 0
  %44 = vmatpush1.bf16.msra.mxu0 %v28
  %45 = vmatprep.subr.bf16.mxu0 0
  %46 = vmatpush1.bf16.msra.mxu0 %v29
  %47 = vmatprep.subr.bf16.mxu0 0
  %48 = vmatpush1.bf16.msra.mxu0 0
  %49 = vmatprep.subr.bf16.mxu0 0
  %50 = vmatpush1.bf16.msra.mxu0 0
  %51 = vmatprep.subr.bf16.mxu0 0
  %52 = vmatpush1.bf16.msra.mxu0 0
  %53 = vmatprep.subr.bf16.mxu0 0
  %54 = vmatpush1.bf16.msra.mxu0 0
  %55 = vmatprep.subr.bf16.mxu0 0
  %56 = vmatpush1.bf16.msra.mxu0 0
  %57 = vmatprep.subr.bf16.mxu0 0
  %58 = vmatpush1.bf16.msra.mxu0 0
  %59 = vmatprep.subr.bf16.mxu0 0
  %60 = vmatpush1.bf16.msra.mxu0 0
  %61 = vmatprep.subr.bf16.mxu0 0
  %62 = vmatpush1.bf16.msra.mxu0 0
  %63 = vmatprep.mubr.bf16.mxu0 0
  %64 = vmatmul.mubr.bf16.gmra.mrb[0].mxu0 %v30
  %v65 = vpop.f32.mrb[0].mxu0
  %v66 = vadd.f32 0.0, %v65
  %v67 = vpop.f32.mrb[0].mxu0
  %v68 = vpop.f32.mrb[0].mxu0
  %v69 = vpop.f32.mrb[0].mxu0
  %70 = vdwg.mxu0
  %v71 = vld [vmem:[%s2] sm:$0x1]
  %v73 = vlaneseq
  %v74 = vshrl.u32 %v73, 7
  %v75 = vsub.s32 0, %v74
  %v76 = vrot.slane %v71, %v75
  %v78 = vmul.f32 %v66, %v76
  %v79 = vld [vmem:[%s3] sm:$0x1]
  %v81 = vlaneseq
  %v82 = vshrl.u32 %v81, 7
  %v83 = vsub.s32 0, %v82
  %v84 = vrot.slane %v79, %v83
  %v86 = vadd.f32 %v78, %v84
  %v87 = vmul.f32 %v86, 0.5
  %v88 = vmul.f32 %v86, 0.70710677
  %v89 = verf.f32.pop %v88
  %v90 = vadd.f32 %v89, 1.0
  %v91 = vmul.f32 %v87, %v90
  %v92 = vpack.c.bf16 %v91, %v91
  %93 = vst [vmem:[%s4] sm:$0xf] %v92
  // Predicated region
  $region18: #{modu_network_forward.6} parent=0 // pred_check
    _
  $region19: #{modu_network_forward.6} parent=0 // pred_check_branch
    %95 = sbr.rel (0) target = $region21
  $region20: #{modu_network_forward.6} parent=0 // pred_region
    _
  $region21: #{modu_network_forward.6} parent=0 // pred_fallthru
    _
  // Predicated region
  $region22: #{modu_network_forward.6} parent=0 // pred_check
    _
  $region23: #{modu_network_forward.6} parent=0 // pred_check_branch
    %97 = sbr.rel (0) target = $region25
  $region24: #{modu_network_forward.6} parent=0 // pred_region
    _
  $region25: #{modu_network_forward.6} parent=0 // pred_fallthru
    _

// kernel: modu_network_forward.7
$region0: #{modu_network_forward.7}
  #allocation0 [shape = 'u32[]', space=smem, size = 0x4, offset = 0x4, fixed_abs, tag = 'smem constant byte address 0x4 - core index']
  #allocation1 [shape = 'u32[144,128]{1,0:T(1,128)}', space=vmem, size = 0x12000, scoped, tag = 'internal scratch']
  %s0 = inlined_call_operand.vmem [shape: bf16[8,128], index: 0, kind: input, shape index: {}]
  %s1 = inlined_call_operand.vmem [shape: s8[2,128,1024], index: 1, kind: input, shape index: {}]
  %s2 = inlined_call_operand.vmem [shape: f32[1,2048], index: 2, kind: input, shape index: {}]
  %s3 = inlined_call_operand.vmem [shape: f32[1,2048], index: 3, kind: input, shape index: {}]
  %s4 = inlined_call_operand.vmem [shape: f32[8,2048], index: 4, kind: output, shape index: {}]
  %s5 = sld [smem:[#allocation0]]
  $region49: #{modu_network_forward.7} parent=0
    _
  %s7 = ssub.s32 1, %s5
  %s8 = scalar_select 0, %s7, %s5
  loop: start=0, step=1, limit=4
  $region2: #{modu_network_forward.7} parent=0 // loop_pre_header
    _
  $region3: #{modu_network_forward.7} parent=0 // loop_header
    %s10 = sphi 0, %s14
    %p11 = scmp.ge.s32.totalorder %s10, 4
    %s18 = sphi 0, %s18
    %s20 = sphi 0, %s18
    %s21 = sphi 0, %s20
    %s35 = sphi 0, %s21
    %s41 = sphi 0, %s43
    %s44 = sphi 0, %s41
    %s45 = sphi 0, %s44
    %s61 = sphi 0, %s45
    %s67 = sphi 0, %s69
    %s70 = sphi 0, %s67
    %s71 = sphi 0, %s70
    %s87 = sphi 0, %s71
    %s93 = sphi 0, %s95
    %s96 = sphi 0, %s93
    %s97 = sphi 0, %s96
    %s113 = sphi 0, %s97
    %s119 = sphi 0, %s121
    %s122 = sphi 0, %s119
    %s123 = sphi 0, %s122
    %s139 = sphi 0, %s123
  $region4: #{modu_network_forward.7} parent=0 // loop_header_branch
    %13 = sbr.rel (%p11) target = $region8
  $region5: #{modu_network_forward.7} parent=0 // loop_body
    %s15 = ssub.s32 %s10, 1
    %s16 = ssub.s32 %s10, 2
    %s17 = sadd.s32 %s10, 1
    %s19 = sadd.s32 %s18, 1
    %p22 = scmp.eq.s32.totalorder %s10, 1
    %p23 = scmp.ne.s32.totalorder %s18, %s20
    %p24 = scmp.eq.s32.totalorder %s10, 0
    %p25 = por %p23, %p24
    %p26 = scmp.ne.s32.totalorder %s18, %s20
    %p27 = scmp.eq.s32.totalorder %s15, 1
    %p28 = por %p26, %p27
    %p29 = scmp.ne.s32.totalorder %s20, %s21
    %p30 = scmp.eq.s32.totalorder %s15, 0
    %p31 = por %p29, %p30
    %p32 = scmp.ne.s32.totalorder %s20, %s21
    %p33 = scmp.eq.s32.totalorder %s16, 1
    %p34 = por %p32, %p33
    %p36 = scmp.ne.s32.totalorder %s21, %s35
    %p37 = scmp.eq.s32.totalorder %s16, 0
    %p38 = por %p36, %p37
    %s39 = ssub.s32 %s10, %s17
    %p40 = scmp.eq.s32.totalorder %s39, 0
    %s42 = sadd.s32 %s41, 1
    %s43 = scalar_select %p40, %s41, %s42
    %p46 = pneg %p40
    %p47 = scmp.eq.s32.totalorder %s10, 1
    %p48 = por %p46, %p47
    %p49 = scmp.ne.s32.totalorder %s41, %s44
    %p50 = scmp.eq.s32.totalorder %s10, 0
    %p51 = por %p49, %p50
    %p52 = scmp.ne.s32.totalorder %s41, %s44
    %p53 = scmp.eq.s32.totalorder %s15, 1
    %p54 = por %p52, %p53
    %p55 = scmp.ne.s32.totalorder %s44, %s45
    %p56 = scmp.eq.s32.totalorder %s15, 0
    %p57 = por %p55, %p56
    %p58 = scmp.ne.s32.totalorder %s44, %s45
    %p59 = scmp.eq.s32.totalorder %s16, 1
    %p60 = por %p58, %p59
    %p62 = scmp.ne.s32.totalorder %s45, %s61
    %p63 = scmp.eq.s32.totalorder %s16, 0
    %p64 = por %p62, %p63
    %s65 = ssub.s32 %s10, %s17
    %p66 = scmp.eq.s32.totalorder %s65, 0
    %s68 = sadd.s32 %s67, 1
    %s69 = scalar_select %p66, %s67, %s68
    %p72 = pneg %p66
    %p73 = scmp.eq.s32.totalorder %s10, 1
    %p74 = por %p72, %p73
    %p75 = scmp.ne.s32.totalorder %s67, %s70
    %p76 = scmp.eq.s32.totalorder %s10, 0
    %p77 = por %p75, %p76
    %p78 = scmp.ne.s32.totalorder %s67, %s70
    %p79 = scmp.eq.s32.totalorder %s15, 1
    %p80 = por %p78, %p79
    %p81 = scmp.ne.s32.totalorder %s70, %s71
    %p82 = scmp.eq.s32.totalorder %s15, 0
    %p83 = por %p81, %p82
    %p84 = scmp.ne.s32.totalorder %s70, %s71
    %p85 = scmp.eq.s32.totalorder %s16, 1
    %p86 = por %p84, %p85
    %p88 = scmp.ne.s32.totalorder %s71, %s87
    %p89 = scmp.eq.s32.totalorder %s16, 0
    %p90 = por %p88, %p89
    %s91 = ssub.s32 %s10, %s17
    %p92 = scmp.eq.s32.totalorder %s91, 0
    %s94 = sadd.s32 %s93, 1
    %s95 = scalar_select %p92, %s93, %s94
    %p98 = pneg %p92
    %p99 = scmp.eq.s32.totalorder %s10, 1
    %p100 = por %p98, %p99
    %p101 = scmp.ne.s32.totalorder %s93, %s96
    %p102 = scmp.eq.s32.totalorder %s10, 0
    %p103 = por %p101, %p102
    %p104 = scmp.ne.s32.totalorder %s93, %s96
    %p105 = scmp.eq.s32.totalorder %s15, 1
    %p106 = por %p104, %p105
    %p107 = scmp.ne.s32.totalorder %s96, %s97
    %p108 = scmp.eq.s32.totalorder %s15, 0
    %p109 = por %p107, %p108
    %p110 = scmp.ne.s32.totalorder %s96, %s97
    %p111 = scmp.eq.s32.totalorder %s16, 1
    %p112 = por %p110, %p111
    %p114 = scmp.ne.s32.totalorder %s97, %s113
    %p115 = scmp.eq.s32.totalorder %s16, 0
    %p116 = por %p114, %p115
    %s117 = ssub.s32 %s10, %s17
    %p118 = scmp.eq.s32.totalorder %s117, 0
    %s120 = sadd.s32 %s119, 1
    %s121 = scalar_select %p118, %s119, %s120
    %p124 = pneg %p118
    %p125 = scmp.eq.s32.totalorder %s10, 1
    %p126 = por %p124, %p125
    %p127 = scmp.ne.s32.totalorder %s119, %s122
    %p128 = scmp.eq.s32.totalorder %s10, 0
    %p129 = por %p127, %p128
    %p130 = scmp.ne.s32.totalorder %s119, %s122
    %p131 = scmp.eq.s32.totalorder %s15, 1
    %p132 = por %p130, %p131
    %p133 = scmp.ne.s32.totalorder %s122, %s123
    %p134 = scmp.eq.s32.totalorder %s15, 0
    %p135 = por %p133, %p134
    %p136 = scmp.ne.s32.totalorder %s122, %s123
    %p137 = scmp.eq.s32.totalorder %s16, 1
    %p138 = por %p136, %p137
    %p140 = scmp.ne.s32.totalorder %s123, %s139
    %p141 = scmp.eq.s32.totalorder %s16, 0
    %p142 = por %p140, %p141
    %p143 = scmp.le.s32.totalorder 1, %s10
    %p144 = scmp.lt.s32.totalorder %s10, 3
    %p145 = pnand %p143, %p144
    %p146 = pneg %p145
    // Predicated region
    $region9: #{modu_network_forward.7} parent=5 // pred_check
      _
    $region10: #{modu_network_forward.7} parent=5 // pred_check_branch
      %148 = sbr.rel (%p145) target = $region12
    $region11: #{modu_network_forward.7} parent=5 // pred_region
      %s149 = ssub.s32 %s10, 1
      // Predicated region
      $region13: #{modu_network_forward.7} parent=11 // pred_check
        %p150 = pneg %p31
      $region14: #{modu_network_forward.7} parent=11 // pred_check_branch
        %152 = sbr.rel (%p150) target = $region16
      $region15: #{modu_network_forward.7} parent=11 // pred_region
        _
      $region16: #{modu_network_forward.7} parent=11 // pred_fallthru
        _
    $region12: #{modu_network_forward.7} parent=5 // pred_fallthru
      _
    %p153 = scmp.lt.s32.totalorder %s10, 2
    // Predicated region
    $region17: #{modu_network_forward.7} parent=5 // pred_check
      %p154 = pneg %p153
    $region18: #{modu_network_forward.7} parent=5 // pred_check_branch
      %156 = sbr.rel (%p154) target = $region20
    $region19: #{modu_network_forward.7} parent=5 // pred_region
      // Predicated region
      $region21: #{modu_network_forward.7} parent=19 // pred_check
        %p157 = pneg %p51
      $region22: #{modu_network_forward.7} parent=19 // pred_check_branch
        %159 = sbr.rel (%p157) target = $region24
      $region23: #{modu_network_forward.7} parent=19 // pred_region
        %p160 = scmp.lt.s32.totalorder %s10, 1
        %s161 = scalar_select %p160, %s10, 1
        %s162 = smul.addr %s161, 32
        %s163 = smul.addr %s162, 8
        %s164 = scalar_lea.vmem %s1, %s163
      $region24: #{modu_network_forward.7} parent=19 // pred_fallthru
        _
      // Predicated region
      $region25: #{modu_network_forward.7} parent=19 // pred_check
        %p165 = pneg %p77
      $region26: #{modu_network_forward.7} parent=19 // pred_check_branch
        %167 = sbr.rel (%p165) target = $region28
      $region27: #{modu_network_forward.7} parent=19 // pred_region
        %s168 = smul.u32 8, %s10
        %p169 = scmp.lt.s32.totalorder %s168, 15
        %s170 = scalar_select %p169, %s168, 15
        %s171 = scalar_lea.vmem %s2, %s170
        %s172 = smul.u32 8, %s10
      $region28: #{modu_network_forward.7} parent=19 // pred_fallthru
        _
      // Predicated region
      $region29: #{modu_network_forward.7} parent=19 // pred_check
        %p173 = pneg %p103
      $region30: #{modu_network_forward.7} parent=19 // pred_check_branch
        %175 = sbr.rel (%p173) target = $region32
      $region31: #{modu_network_forward.7} parent=19 // pred_region
        %s176 = smul.u32 8, %s10
        %p177 = scmp.lt.s32.totalorder %s176, 15
        %s178 = scalar_select %p177, %s176, 15
        %s179 = scalar_lea.vmem %s3, %s178
        %s180 = smul.u32 8, %s10
      $region32: #{modu_network_forward.7} parent=19 // pred_fallthru
        _
    $region20: #{modu_network_forward.7} parent=5 // pred_fallthru
      _
    %p181 = scmp.le.s32.totalorder 1, %s10
    %p182 = scmp.lt.s32.totalorder %s10, 3
    %p183 = pnand %p181, %p182
    %p184 = pneg %p183
    // Predicated region
    $region33: #{modu_network_forward.7} parent=5 // pred_check
      _
    $region34: #{modu_network_forward.7} parent=5 // pred_check_branch
      %186 = sbr.rel (%p183) target = $region36
    $region35: #{modu_network_forward.7} parent=5 // pred_region
      %s187 = ssub.s32 %s10, 1
      %p188 = pneg %p31
      %p189 = pneg %p28
      %p190 = scmp.lt.s32.totalorder %s15, 1
      %s191 = scalar_select %p190, %s15, 1
      %s192 = smul.addr %s191, 32
      %s193 = smul.addr %s192, 8
      %s194 = scalar_lea.vmem %s1, %s193
      %p195 = pneg %p57
      %p196 = pneg %p54
      %s197 = smul.u32 8, %s15
      %p198 = scmp.lt.s32.totalorder %s197, 15
      %s199 = scalar_select %p198, %s197, 15
      %s200 = scalar_lea.vmem %s2, %s199
      %p201 = pneg %p83
      %p202 = pneg %p80
      %s203 = smul.u32 8, %s15
      %p204 = scmp.lt.s32.totalorder %s203, 15
      %s205 = scalar_select %p204, %s203, 15
      %s206 = scalar_lea.vmem %s3, %s205
      %p207 = pneg %p109
      %p208 = pneg %p106
      %p209 = pneg %p135
      %p210 = pneg %p132
      %s211 = smul.u32 8, %s15
      %p212 = scmp.lt.s32.totalorder %s211, 15
      %s213 = scalar_select %p212, %s211, 15
      %s214 = smul.addr %s213, 8
      %s215 = scalar_lea.vmem %s4, %s214
      %p216 = scmp.lt.s32.totalorder %s15, 1
      %s217 = scalar_select %p216, %s15, 1
      %s218 = smul.addr %s217, 32
      %s219 = smul.addr %s218, 8
      %s220 = scalar_lea.vmem %s1, %s219
      %s221 = smul.u32 8, %s15
      %p222 = scmp.lt.s32.totalorder %s221, 15
      %s223 = scalar_select %p222, %s221, 15
      %s224 = scalar_lea.vmem %s2, %s223
      %s225 = smul.u32 8, %s15
      %s226 = smul.u32 8, %s15
      %p227 = scmp.lt.s32.totalorder %s226, 15
      %s228 = scalar_select %p227, %s226, 15
      %s229 = scalar_lea.vmem %s3, %s228
      %s230 = smul.u32 8, %s15
      %s231 = smul.u32 8, %s15
      %p232 = scmp.lt.s32.totalorder %s231, 15
      %s233 = scalar_select %p232, %s231, 15
      %s234 = smul.addr %s233, 8
      %s235 = scalar_lea.vmem %s4, %s234
      %s236 = smul.u32 8, %s15
      %v238 = vld [vmem:[%s220] sm:$0xff]
      %v239 = vld [vmem:[%s220 + $0x8] sm:$0xff]
      %v240 = vld [vmem:[%s220 + $0x10] sm:$0xff]
      %v241 = vld [vmem:[%s220 + $0x18] sm:$0xff]
      %v242 = vld [vmem:[%s220 + $0x20] sm:$0xff]
      %v243 = vld [vmem:[%s220 + $0x28] sm:$0xff]
      %v244 = vld [vmem:[%s220 + $0x30] sm:$0xff]
      %v245 = vld [vmem:[%s220 + $0x38] sm:$0xff]
      %v246 = vld [vmem:[%s220 + $0x40] sm:$0xff]
      %v247 = vld [vmem:[%s220 + $0x48] sm:$0xff]
      %v248 = vld [vmem:[%s220 + $0x50] sm:$0xff]
      %v249 = vld [vmem:[%s220 + $0x58] sm:$0xff]
      %v250 = vld [vmem:[%s220 + $0x60] sm:$0xff]
      %v251 = vld [vmem:[%s220 + $0x68] sm:$0xff]
      %v252 = vld [vmem:[%s220 + $0x70] sm:$0xff]
      %v253 = vld [vmem:[%s220 + $0x78] sm:$0xff]
      %v254 = vld [vmem:[%s220 + $0x80] sm:$0xff]
      %v255 = vld [vmem:[%s220 + $0x88] sm:$0xff]
      %v256 = vld [vmem:[%s220 + $0x90] sm:$0xff]
      %v257 = vld [vmem:[%s220 + $0x98] sm:$0xff]
      %v258 = vld [vmem:[%s220 + $0xa0] sm:$0xff]
      %v259 = vld [vmem:[%s220 + $0xa8] sm:$0xff]
      %v260 = vld [vmem:[%s220 + $0xb0] sm:$0xff]
      %v261 = vld [vmem:[%s220 + $0xb8] sm:$0xff]
      %v262 = vld [vmem:[%s220 + $0xc0] sm:$0xff]
      %v263 = vld [vmem:[%s220 + $0xc8] sm:$0xff]
      %v264 = vld [vmem:[%s220 + $0xd0] sm:$0xff]
      %v265 = vld [vmem:[%s220 + $0xd8] sm:$0xff]
      %v266 = vld [vmem:[%s220 + $0xe0] sm:$0xff]
      %v267 = vld [vmem:[%s220 + $0xe8] sm:$0xff]
      %v268 = vld [vmem:[%s220 + $0xf0] sm:$0xff]
      %v269 = vld [vmem:[%s220 + $0xf8] sm:$0xff]
      %v270 = vunpack.c.l.s8.bf16 %v238
      %v271 = vunpack.c.l.s8.bf16 %v239
      %v272 = vunpack.c.l.s8.bf16 %v240
      %v273 = vunpack.c.l.s8.bf16 %v241
      %v274 = vunpack.c.l.s8.bf16 %v242
      %v275 = vunpack.c.l.s8.bf16 %v243
      %v276 = vunpack.c.l.s8.bf16 %v244
      %v277 = vunpack.c.l.s8.bf16 %v245
      %v278 = vunpack.c.h.s8.bf16 %v238
      %v279 = vunpack.c.h.s8.bf16 %v239
      %v280 = vunpack.c.h.s8.bf16 %v240
      %v281 = vunpack.c.h.s8.bf16 %v241
      %v282 = vunpack.c.h.s8.bf16 %v242
      %v283 = vunpack.c.h.s8.bf16 %v243
      %v284 = vunpack.c.h.s8.bf16 %v244
      %v285 = vunpack.c.h.s8.bf16 %v245
      %v286 = vunpack.c.l.s8.bf16 %v246
      %v287 = vunpack.c.l.s8.bf16 %v247
      %v288 = vunpack.c.l.s8.bf16 %v248
      %v289 = vunpack.c.l.s8.bf16 %v249
      %v290 = vunpack.c.l.s8.bf16 %v250
      %v291 = vunpack.c.l.s8.bf16 %v251
      %v292 = vunpack.c.l.s8.bf16 %v252
      %v293 = vunpack.c.l.s8.bf16 %v253
      %v294 = vunpack.c.h.s8.bf16 %v246
      %v295 = vunpack.c.h.s8.bf16 %v247
      %v296 = vunpack.c.h.s8.bf16 %v248
      %v297 = vunpack.c.h.s8.bf16 %v249
      %v298 = vunpack.c.h.s8.bf16 %v250
      %v299 = vunpack.c.h.s8.bf16 %v251
      %v300 = vunpack.c.h.s8.bf16 %v252
      %v301 = vunpack.c.h.s8.bf16 %v253
      %v302 = vunpack.c.l.s8.bf16 %v254
      %v303 = vunpack.c.l.s8.bf16 %v255
      %v304 = vunpack.c.l.s8.bf16 %v256
      %v305 = vunpack.c.l.s8.bf16 %v257
      %v306 = vunpack.c.l.s8.bf16 %v258
      %v307 = vunpack.c.l.s8.bf16 %v259
      %v308 = vunpack.c.l.s8.bf16 %v260
      %v309 = vunpack.c.l.s8.bf16 %v261
      %v310 = vunpack.c.h.s8.bf16 %v254
      %v311 = vunpack.c.h.s8.bf16 %v255
      %v312 = vunpack.c.h.s8.bf16 %v256
      %v313 = vunpack.c.h.s8.bf16 %v257
      %v314 = vunpack.c.h.s8.bf16 %v258
      %v315 = vunpack.c.h.s8.bf16 %v259
      %v316 = vunpack.c.h.s8.bf16 %v260
      %v317 = vunpack.c.h.s8.bf16 %v261
      %v318 = vunpack.c.l.s8.bf16 %v262
      %v319 = vunpack.c.l.s8.bf16 %v263
      %v320 = vunpack.c.l.s8.bf16 %v264
      %v321 = vunpack.c.l.s8.bf16 %v265
      %v322 = vunpack.c.l.s8.bf16 %v266
      %v323 = vunpack.c.l.s8.bf16 %v267
      %v324 = vunpack.c.l.s8.bf16 %v268
      %v325 = vunpack.c.l.s8.bf16 %v269
      %v326 = vunpack.c.h.s8.bf16 %v262
      %v327 = vunpack.c.h.s8.bf16 %v263
      %v328 = vunpack.c.h.s8.bf16 %v264
      %v329 = vunpack.c.h.s8.bf16 %v265
      %v330 = vunpack.c.h.s8.bf16 %v266
      %v331 = vunpack.c.h.s8.bf16 %v267
      %v332 = vunpack.c.h.s8.bf16 %v268
      %v333 = vunpack.c.h.s8.bf16 %v269
      %v334 = vld [vmem:[%s0] sm:$0xf]
      %335 = vmatprep.subr.bf16.mxu0 %v271
      %336 = vmatpush1.bf16.msra.mxu0 %v270
      %337 = vmatprep.subr.bf16.mxu0 %v279
      %338 = vmatpush1.bf16.msra.mxu0 %v278
      %339 = vmatprep.subr.bf16.mxu0 %v287
      %340 = vmatpush1.bf16.msra.mxu0 %v286
      %341 = vmatprep.subr.bf16.mxu0 %v295
      %342 = vmatpush1.bf16.msra.mxu0 %v294
      %343 = vmatprep.subr.bf16.mxu0 %v303
      %344 = vmatpush1.bf16.msra.mxu0 %v302
      %345 = vmatprep.subr.bf16.mxu0 %v311
      %346 = vmatpush1.bf16.msra.mxu0 %v310
      %347 = vmatprep.subr.bf16.mxu0 %v319
      %348 = vmatpush1.bf16.msra.mxu0 %v318
      %349 = vmatprep.subr.bf16.mxu0 %v327
      %350 = vmatpush1.bf16.msra.mxu0 %v326
      %351 = vmatprep.subr.bf16.mxu0 0
      %352 = vmatpush1.bf16.msra.mxu0 0
      %353 = vmatprep.subr.bf16.mxu0 0
      %354 = vmatpush1.bf16.msra.mxu0 0
      %355 = vmatprep.subr.bf16.mxu0 0
      %356 = vmatpush1.bf16.msra.mxu0 0
      %357 = vmatprep.subr.bf16.mxu0 0
      %358 = vmatpush1.bf16.msra.mxu0 0
      %359 = vmatprep.subr.bf16.mxu0 0
      %360 = vmatpush1.bf16.msra.mxu0 0
      %361 = vmatprep.subr.bf16.mxu0 0
      %362 = vmatpush1.bf16.msra.mxu0 0
      %363 = vmatprep.subr.bf16.mxu0 0
      %364 = vmatpush1.bf16.msra.mxu0 0
      %365 = vmatprep.subr.bf16.mxu0 0
      %366 = vmatpush1.bf16.msra.mxu0 0
      %367 = vmatprep.mubr.bf16.mxu0 0
      %368 = vmatmul.mubr.bf16.gmra.mrb[0].mxu0 %v334
      %v369 = vpop.f32.mrb[0].mxu0
      %v370 = vadd.f32 0.0, %v369
      %v371 = vpop.f32.mrb[0].mxu0
      %v372 = vadd.f32 0.0, %v371
      %v373 = vpop.f32.mrb[0].mxu0
      %v374 = vpop.f32.mrb[0].mxu0
      %375 = vdwg.mxu0
      %376 = vmatprep.subr.bf16.mxu0 %v273
      %377 = vmatpush1.bf16.msra.mxu0 %v272
      %378 = vmatprep.subr.bf16.mxu0 %v281
      %379 = vmatpush1.bf16.msra.mxu0 %v280
      %380 = vmatprep.subr.bf16.mxu0 %v289
      %381 = vmatpush1.bf16.msra.mxu0 %v288
      %382 = vmatprep.subr.bf16.mxu0 %v297
      %383 = vmatpush1.bf16.msra.mxu0 %v296
      %384 = vmatprep.subr.bf16.mxu0 %v305
      %385 = vmatpush1.bf16.msra.mxu0 %v304
      %386 = vmatprep.subr.bf16.mxu0 %v313
      %387 = vmatpush1.bf16.msra.mxu0 %v312
      %388 = vmatprep.subr.bf16.mxu0 %v321
      %389 = vmatpush1.bf16.msra.mxu0 %v320
      %390 = vmatprep.subr.bf16.mxu0 %v329
      %391 = vmatpush1.bf16.msra.mxu0 %v328
      %392 = vmatprep.subr.bf16.mxu0 0
      %393 = vmatpush1.bf16.msra.mxu0 0
      %394 = vmatprep.subr.bf16.mxu0 0
      %395 = vmatpush1.bf16.msra.mxu0 0
      %396 = vmatprep.subr.bf16.mxu0 0
      %397 = vmatpush1.bf16.msra.mxu0 0
      %398 = vmatprep.subr.bf16.mxu0 0
      %399 = vmatpush1.bf16.msra.mxu0 0
      %400 = vmatprep.subr.bf16.mxu0 0
      %401 = vmatpush1.bf16.msra.mxu0 0
      %402 = vmatprep.subr.bf16.mxu0 0
      %403 = vmatpush1.bf16.msra.mxu0 0
      %404 = vmatprep.subr.bf16.mxu0 0
      %405 = vmatpush1.bf16.msra.mxu0 0
      %406 = vmatprep.subr.bf16.mxu0 0
      %407 = vmatpush1.bf16.msra.mxu0 0
      %408 = vmatprep.mubr.bf16.mxu0 0
      %409 = vmatmul.mubr.bf16.gmra.mrb[0].mxu0 %v334
      %v410 = vpop.f32.mrb[0].mxu0
      %v411 = vadd.f32 0.0, %v410
      %v412 = vpop.f32.mrb[0].mxu0
      %v413 = vadd.f32 0.0, %v412
      %v414 = vpop.f32.mrb[0].mxu0
      %v415 = vpop.f32.mrb[0].mxu0
      %416 = vdwg.mxu0
      %417 = vmatprep.subr.bf16.mxu0 %v275
      %418 = vmatpush1.bf16.msra.mxu0 %v274
      %419 = vmatprep.subr.bf16.mxu0 %v283
      %420 = vmatpush1.bf16.msra.mxu0 %v282
      %421 = vmatprep.subr.bf16.mxu0 %v291
      %422 = vmatpush1.bf16.msra.mxu0 %v290
      %423 = vmatprep.subr.bf16.mxu0 %v299
      %424 = vmatpush1.bf16.msra.mxu0 %v298
      %425 = vmatprep.subr.bf16.mxu0 %v307
      %426 = vmatpush1.bf16.msra.mxu0 %v306
      %427 = vmatprep.subr.bf16.mxu0 %v315
      %428 = vmatpush1.bf16.msra.mxu0 %v314
      %429 = vmatprep.subr.bf16.mxu0 %v323
      %430 = vmatpush1.bf16.msra.mxu0 %v322
      %431 = vmatprep.subr.bf16.mxu0 %v331
      %432 = vmatpush1.bf16.msra.mxu0 %v330
      %433 = vmatprep.subr.bf16.mxu0 0
      %434 = vmatpush1.bf16.msra.mxu0 0
      %435 = vmatprep.subr.bf16.mxu0 0
      %436 = vmatpush1.bf16.msra.mxu0 0
      %437 = vmatprep.subr.bf16.mxu0 0
      %438 = vmatpush1.bf16.msra.mxu0 0
      %439 = vmatprep.subr.bf16.mxu0 0
      %440 = vmatpush1.bf16.msra.mxu0 0
      %441 = vmatprep.subr.bf16.mxu0 0
      %442 = vmatpush1.bf16.msra.mxu0 0
      %443 = vmatprep.subr.bf16.mxu0 0
      %444 = vmatpush1.bf16.msra.mxu0 0
      %445 = vmatprep.subr.bf16.mxu0 0
      %446 = vmatpush1.bf16.msra.mxu0 0
      %447 = vmatprep.subr.bf16.mxu0 0
      %448 = vmatpush1.bf16.msra.mxu0 0
      %449 = vmatprep.mubr.bf16.mxu0 0
      %450 = vmatmul.mubr.bf16.gmra.mrb[0].mxu0 %v334
      %v451 = vpop.f32.mrb[0].mxu0
      %v452 = vadd.f32 0.0, %v451
      %v453 = vpop.f32.mrb[0].mxu0
      %v454 = vadd.f32 0.0, %v453
      %v455 = vpop.f32.mrb[0].mxu0
      %v456 = vpop.f32.mrb[0].mxu0
      %457 = vdwg.mxu0
      %458 = vmatprep.subr.bf16.mxu0 %v277
      %459 = vmatpush1.bf16.msra.mxu0 %v276
      %460 = vmatprep.subr.bf16.mxu0 %v285
      %461 = vmatpush1.bf16.msra.mxu0 %v284
      %462 = vmatprep.subr.bf16.mxu0 %v293
      %463 = vmatpush1.bf16.msra.mxu0 %v292
      %464 = vmatprep.subr.bf16.mxu0 %v301
      %465 = vmatpush1.bf16.msra.mxu0 %v300
      %466 = vmatprep.subr.bf16.mxu0 %v309
      %467 = vmatpush1.bf16.msra.mxu0 %v308
      %468 = vmatprep.subr.bf16.mxu0 %v317
      %469 = vmatpush1.bf16.msra.mxu0 %v316
      %470 = vmatprep.subr.bf16.mxu0 %v325
      %471 = vmatpush1.bf16.msra.mxu0 %v324
      %472 = vmatprep.subr.bf16.mxu0 %v333
      %473 = vmatpush1.bf16.msra.mxu0 %v332
      %474 = vmatprep.subr.bf16.mxu0 0
      %475 = vmatpush1.bf16.msra.mxu0 0
      %476 = vmatprep.subr.bf16.mxu0 0
      %477 = vmatpush1.bf16.msra.mxu0 0
      %478 = vmatprep.subr.bf16.mxu0 0
      %479 = vmatpush1.bf16.msra.mxu0 0
      %480 = vmatprep.subr.bf16.mxu0 0
      %481 = vmatpush1.bf16.msra.mxu0 0
      %482 = vmatprep.subr.bf16.mxu0 0
      %483 = vmatpush1.bf16.msra.mxu0 0
      %484 = vmatprep.subr.bf16.mxu0 0
      %485 = vmatpush1.bf16.msra.mxu0 0
      %486 = vmatprep.subr.bf16.mxu0 0
      %487 = vmatpush1.bf16.msra.mxu0 0
      %488 = vmatprep.subr.bf16.mxu0 0
      %489 = vmatpush1.bf16.msra.mxu0 0
      %490 = vmatprep.mubr.bf16.mxu0 0
      %491 = vmatmul.mubr.bf16.gmra.mrb[0].mxu0 %v334
      %v492 = vpop.f32.mrb[0].mxu0
      %v493 = vadd.f32 0.0, %v492
      %v494 = vpop.f32.mrb[0].mxu0
      %v495 = vadd.f32 0.0, %v494
      %v496 = vpop.f32.mrb[0].mxu0
      %v497 = vpop.f32.mrb[0].mxu0
      %498 = vdwg.mxu0
      %v499 = vld [vmem:[%s224] sm:$0xff]
      %v501 = vlaneseq
      %v502 = vshrl.u32 %v501, 7
      %v503 = vsub.s32 0, %v502
      %v504 = vrot.slane %v499, %v503
      %v505 = vlaneseq
      %v506 = vshrl.u32 %v505, 7
      %v507 = vsub.s32 1, %v506
      %v508 = vrot.slane %v499, %v507
      %v509 = vlaneseq
      %v510 = vshrl.u32 %v509, 7
      %v511 = vsub.s32 2, %v510
      %v512 = vrot.slane %v499, %v511
      %v513 = vlaneseq
      %v514 = vshrl.u32 %v513, 7
      %v515 = vsub.s32 3, %v514
      %v516 = vrot.slane %v499, %v515
      %v517 = vlaneseq
      %v518 = vshrl.u32 %v517, 7
      %v519 = vsub.s32 4, %v518
      %v520 = vrot.slane %v499, %v519
      %v521 = vlaneseq
      %v522 = vshrl.u32 %v521, 7
      %v523 = vsub.s32 5, %v522
      %v524 = vrot.slane %v499, %v523
      %v525 = vlaneseq
      %v526 = vshrl.u32 %v525, 7
      %v527 = vsub.s32 6, %v526
      %v528 = vrot.slane %v499, %v527
      %v529 = vlaneseq
      %v530 = vshrl.u32 %v529, 7
      %v531 = vsub.s32 7, %v530
      %v532 = vrot.slane %v499, %v531
      %v541 = vmul.f32 %v370, %v504
      %v542 = vmul.f32 %v372, %v508
      %v543 = vmul.f32 %v411, %v512
      %v544 = vmul.f32 %v413, %v516
      %v545 = vmul.f32 %v452, %v520
      %v546 = vmul.f32 %v454, %v524
      %v547 = vmul.f32 %v493, %v528
      %v548 = vmul.f32 %v495, %v532
      %v549 = vld [vmem:[%s229] sm:$0xff]
      %v551 = vlaneseq
      %v552 = vshrl.u32 %v551, 7
      %v553 = vsub.s32 0, %v552
      %v554 = vrot.slane %v549, %v553
      %v555 = vlaneseq
      %v556 = vshrl.u32 %v555, 7
      %v557 = vsub.s32 1, %v556
      %v558 = vrot.slane %v549, %v557
      %v559 = vlaneseq
      %v560 = vshrl.u32 %v559, 7
      %v561 = vsub.s32 2, %v560
      %v562 = vrot.slane %v549, %v561
      %v563 = vlaneseq
      %v564 = vshrl.u32 %v563, 7
      %v565 = vsub.s32 3, %v564
      %v566 = vrot.slane %v549, %v565
      %v567 = vlaneseq
      %v568 = vshrl.u32 %v567, 7
      %v569 = vsub.s32 4, %v568
      %v570 = vrot.slane %v549, %v569
      %v571 = vlaneseq
      %v572 = vshrl.u32 %v571, 7
      %v573 = vsub.s32 5, %v572
      %v574 = vrot.slane %v549, %v573
      %v575 = vlaneseq
      %v576 = vshrl.u32 %v575, 7
      %v577 = vsub.s32 6, %v576
      %v578 = vrot.slane %v549, %v577
      %v579 = vlaneseq
      %v580 = vshrl.u32 %v579, 7
      %v581 = vsub.s32 7, %v580
      %v582 = vrot.slane %v549, %v581
      %v591 = vadd.f32 %v541, %v554
      %v592 = vadd.f32 %v542, %v558
      %v593 = vadd.f32 %v543, %v562
      %v594 = vadd.f32 %v544, %v566
      %v595 = vadd.f32 %v545, %v570
      %v596 = vadd.f32 %v546, %v574
      %v597 = vadd.f32 %v547, %v578
      %v598 = vadd.f32 %v548, %v582
      %599 = vst [vmem:[%s235] sm:$0xff] %v591
      %600 = vst [vmem:[%s235 + $0x8] sm:$0xff] %v592
      %601 = vst [vmem:[%s235 + $0x10] sm:$0xff] %v593
      %602 = vst [vmem:[%s235 + $0x18] sm:$0xff] %v594
      %603 = vst [vmem:[%s235 + $0x20] sm:$0xff] %v595
      %604 = vst [vmem:[%s235 + $0x28] sm:$0xff] %v596
      %605 = vst [vmem:[%s235 + $0x30] sm:$0xff] %v597
      %606 = vst [vmem:[%s235 + $0x38] sm:$0xff] %v598
      %s607 = smul.u32 8, %s15
      %p608 = scmp.lt.s32.totalorder %s607, 15
      %s609 = scalar_select %p608, %s607, 15
      %s610 = smul.addr %s609, 8
      %s611 = scalar_lea.vmem %s4, %s610
      // Predicated region
      $region37: #{modu_network_forward.7} parent=35 // pred_check
        %p612 = pneg %p132
      $region38: #{modu_network_forward.7} parent=35 // pred_check_branch
        %614 = sbr.rel (%p612) target = $region40
      $region39: #{modu_network_forward.7} parent=35 // pred_region
        %s615 = smul.u32 8, %s15
      $region40: #{modu_network_forward.7} parent=35 // pred_fallthru
        _
    $region36: #{modu_network_forward.7} parent=5 // pred_fallthru
      _
    %p616 = scmp.le.s32.totalorder 2, %s10
    // Predicated region
    $region41: #{modu_network_forward.7} parent=5 // pred_check
      %p617 = pneg %p616
    $region42: #{modu_network_forward.7} parent=5 // pred_check_branch
      %619 = sbr.rel (%p617) target = $region44
    $region43: #{modu_network_forward.7} parent=5 // pred_region
      %s620 = ssub.s32 %s10, 2
      // Predicated region
      $region45: #{modu_network_forward.7} parent=43 // pred_check
        %p621 = pneg %p138
      $region46: #{modu_network_forward.7} parent=43 // pred_check_branch
        %623 = sbr.rel (%p621) target = $region48
      $region47: #{modu_network_forward.7} parent=43 // pred_region
        %s624 = smul.u32 8, %s16
        %p625 = scmp.lt.s32.totalorder %s624, 15
        %s626 = scalar_select %p625, %s624, 15
        %s627 = smul.addr %s626, 8
        %s628 = scalar_lea.vmem %s4, %s627
      $region48: #{modu_network_forward.7} parent=43 // pred_fallthru
        _
    $region44: #{modu_network_forward.7} parent=5 // pred_fallthru
      _
  $region6: #{modu_network_forward.7} parent=0 // loop_footer
    %s14 = sadd.s32 1, %s10
  $region7: #{modu_network_forward.7} parent=0 // loop_footer_branch
    %9 = sbr.rel target = $region3
  $region8: #{modu_network_forward.7} parent=0 // loop_exit
    _

// kernel: modu_network_forward.4
$region0: #{modu_network_forward.4}
  #allocation0 [shape = 'u32[]', space=smem, size = 0x4, offset = 0x4, fixed_abs, tag = 'smem constant byte address 0x4 - core index']
  #allocation1 [shape = 'u32[144,128]{1,0:T(1,128)}', space=vmem, size = 0x12000, scoped, tag = 'internal scratch']
  %s0 = inlined_call_operand.vmem [shape: bf16[8,1280], index: 0, kind: input, shape index: {}]
  %s1 = inlined_call_operand.hbm [shape: s8[2,1280,128], index: 1, kind: input, shape index: {}]
  %s2 = inlined_call_operand.vmem [shape: f32[1,256], index: 2, kind: input, shape index: {}]
  %s3 = inlined_call_operand.vmem [shape: f32[1,256], index: 3, kind: input, shape index: {}]
  %s4 = inlined_call_operand.vmem [shape: bf16[8,256], index: 4, kind: output, shape index: {}]
  %s5 = sld [smem:[#allocation0]]
  $region53: #{modu_network_forward.4} parent=0
    _
  %s7 = ssub.s32 1, %s5
  %s8 = scalar_select 0, %s7, %s5
  $region1: #{modu_network_forward.4} parent=0
    #allocation2 [shape = 'u8[327680]{0}', space=vmem, size = 0x50000, scoped, tag = 'input window, operand 1']
    #allocation3 [shape = 's32[2]{0}', space=sflag, size = 0x8, scoped, tag = 'scoped memory for modu_network_forward.4']
    %9 = vsyncpa [#allocation3], 0
    %s10 = scalar_lea.sflag [#allocation3], 1
    %11 = vsyncpa %s10, 0
    loop: start=0, step=1, limit=4
    $region2: #{modu_network_forward.4} parent=1 // loop_pre_header
      _
    $region3: #{modu_network_forward.4} parent=1 // loop_header
      %s13 = sphi 0, %s17
      %p14 = scmp.ge.s32.totalorder %s13, 4
      %s21 = sphi 0, %s21
      %s23 = sphi 0, %s21
      %s24 = sphi 0, %s23
      %s38 = sphi 0, %s24
      %s44 = sphi 0, %s46
      %s47 = sphi 0, %s44
      %s48 = sphi 0, %s47
      %s64 = sphi 0, %s48
      %s70 = sphi 0, %s72
      %s73 = sphi 0, %s70
      %s74 = sphi 0, %s73
      %s90 = sphi 0, %s74
      %s96 = sphi 0, %s98
      %s99 = sphi 0, %s96
      %s100 = sphi 0, %s99
      %s116 = sphi 0, %s100
      %s122 = sphi 0, %s124
      %s125 = sphi 0, %s122
      %s126 = sphi 0, %s125
      %s142 = sphi 0, %s126
    $region4: #{modu_network_forward.4} parent=1 // loop_header_branch
      %16 = sbr.rel (%p14) target = $region8
    $region5: #{modu_network_forward.4} parent=1 // loop_body
      %s18 = ssub.s32 %s13, 1
      %s19 = ssub.s32 %s13, 2
      %s20 = sadd.s32 %s13, 1
      %s22 = sadd.s32 %s21, 1
      %p25 = scmp.eq.s32.totalorder %s13, 1
      %p26 = scmp.ne.s32.totalorder %s21, %s23
      %p27 = scmp.eq.s32.totalorder %s13, 0
      %p28 = por %p26, %p27
      %p29 = scmp.ne.s32.totalorder %s21, %s23
      %p30 = scmp.eq.s32.totalorder %s18, 1
      %p31 = por %p29, %p30
      %p32 = scmp.ne.s32.totalorder %s23, %s24
      %p33 = scmp.eq.s32.totalorder %s18, 0
      %p34 = por %p32, %p33
      %p35 = scmp.ne.s32.totalorder %s23, %s24
      %p36 = scmp.eq.s32.totalorder %s19, 1
      %p37 = por %p35, %p36
      %p39 = scmp.ne.s32.totalorder %s24, %s38
      %p40 = scmp.eq.s32.totalorder %s19, 0
      %p41 = por %p39, %p40
      %s42 = ssub.s32 %s13, %s20
      %p43 = scmp.eq.s32.totalorder %s42, 0
      %s45 = sadd.s32 %s44, 1
      %s46 = scalar_select %p43, %s44, %s45
      %p49 = pneg %p43
      %p50 = scmp.eq.s32.totalorder %s13, 1
      %p51 = por %p49, %p50
      %p52 = scmp.ne.s32.totalorder %s44, %s47
      %p53 = scmp.eq.s32.totalorder %s13, 0
      %p54 = por %p52, %p53
      %p55 = scmp.ne.s32.totalorder %s44, %s47
      %p56 = scmp.eq.s32.totalorder %s18, 1
      %p57 = por %p55, %p56
      %p58 = scmp.ne.s32.totalorder %s47, %s48
      %p59 = scmp.eq.s32.totalorder %s18, 0
      %p60 = por %p58, %p59
      %p61 = scmp.ne.s32.totalorder %s47, %s48
      %p62 = scmp.eq.s32.totalorder %s19, 1
      %p63 = por %p61, %p62
      %p65 = scmp.ne.s32.totalorder %s48, %s64
      %p66 = scmp.eq.s32.totalorder %s19, 0
      %p67 = por %p65, %p66
      %s68 = ssub.s32 %s13, %s20
      %p69 = scmp.eq.s32.totalorder %s68, 0
      %s71 = sadd.s32 %s70, 1
      %s72 = scalar_select %p69, %s70, %s71
      %p75 = pneg %p69
      %p76 = scmp.eq.s32.totalorder %s13, 1
      %p77 = por %p75, %p76
      %p78 = scmp.ne.s32.totalorder %s70, %s73
      %p79 = scmp.eq.s32.totalorder %s13, 0
      %p80 = por %p78, %p79
      %p81 = scmp.ne.s32.totalorder %s70, %s73
      %p82 = scmp.eq.s32.totalorder %s18, 1
      %p83 = por %p81, %p82
      %p84 = scmp.ne.s32.totalorder %s73, %s74
      %p85 = scmp.eq.s32.totalorder %s18, 0
      %p86 = por %p84, %p85
      %p87 = scmp.ne.s32.totalorder %s73, %s74
      %p88 = scmp.eq.s32.totalorder %s19, 1
      %p89 = por %p87, %p88
      %p91 = scmp.ne.s32.totalorder %s74, %s90
      %p92 = scmp.eq.s32.totalorder %s19, 0
      %p93 = por %p91, %p92
      %s94 = ssub.s32 %s13, %s20
      %p95 = scmp.eq.s32.totalorder %s94, 0
      %s97 = sadd.s32 %s96, 1
      %s98 = scalar_select %p95, %s96, %s97
      %p101 = pneg %p95
      %p102 = scmp.eq.s32.totalorder %s13, 1
      %p103 = por %p101, %p102
      %p104 = scmp.ne.s32.totalorder %s96, %s99
      %p105 = scmp.eq.s32.totalorder %s13, 0
      %p106 = por %p104, %p105
      %p107 = scmp.ne.s32.totalorder %s96, %s99
      %p108 = scmp.eq.s32.totalorder %s18, 1
      %p109 = por %p107, %p108
      %p110 = scmp.ne.s32.totalorder %s99, %s100
      %p111 = scmp.eq.s32.totalorder %s18, 0
      %p112 = por %p110, %p111
      %p113 = scmp.ne.s32.totalorder %s99, %s100
      %p114 = scmp.eq.s32.totalorder %s19, 1
      %p115 = por %p113, %p114
      %p117 = scmp.ne.s32.totalorder %s100, %s116
      %p118 = scmp.eq.s32.totalorder %s19, 0
      %p119 = por %p117, %p118
      %s120 = ssub.s32 %s13, %s20
      %p121 = scmp.eq.s32.totalorder %s120, 0
      %s123 = sadd.s32 %s122, 1
      %s124 = scalar_select %p121, %s122, %s123
      %p127 = pneg %p121
      %p128 = scmp.eq.s32.totalorder %s13, 1
      %p129 = por %p127, %p128
      %p130 = scmp.ne.s32.totalorder %s122, %s125
      %p131 = scmp.eq.s32.totalorder %s13, 0
      %p132 = por %p130, %p131
      %p133 = scmp.ne.s32.totalorder %s122, %s125
      %p134 = scmp.eq.s32.totalorder %s18, 1
      %p135 = por %p133, %p134
      %p136 = scmp.ne.s32.totalorder %s125, %s126
      %p137 = scmp.eq.s32.totalorder %s18, 0
      %p138 = por %p136, %p137
      %p139 = scmp.ne.s32.totalorder %s125, %s126
      %p140 = scmp.eq.s32.totalorder %s19, 1
      %p141 = por %p139, %p140
      %p143 = scmp.ne.s32.totalorder %s126, %s142
      %p144 = scmp.eq.s32.totalorder %s19, 0
      %p145 = por %p143, %p144
      %p146 = scmp.le.s32.totalorder 1, %s13
      %p147 = scmp.lt.s32.totalorder %s13, 3
      %p148 = pnand %p146, %p147
      %p149 = pneg %p148
      // Predicated region
      $region9: #{modu_network_forward.4} parent=5 // pred_check
        _
      $region10: #{modu_network_forward.4} parent=5 // pred_check_branch
        %151 = sbr.rel (%p148) target = $region12
      $region11: #{modu_network_forward.4} parent=5 // pred_region
        %s152 = ssub.s32 %s13, 1
        // Predicated region
        $region13: #{modu_network_forward.4} parent=11 // pred_check
          %p153 = pneg %p34
        $region14: #{modu_network_forward.4} parent=11 // pred_check_branch
          %155 = sbr.rel (%p153) target = $region16
        $region15: #{modu_network_forward.4} parent=11 // pred_region
          _
        $region16: #{modu_network_forward.4} parent=11 // pred_fallthru
          _
      $region12: #{modu_network_forward.4} parent=5 // pred_fallthru
        _
      %p156 = scmp.lt.s32.totalorder %s13, 2
      // Predicated region
      $region17: #{modu_network_forward.4} parent=5 // pred_check
        %p157 = pneg %p156
      $region18: #{modu_network_forward.4} parent=5 // pred_check_branch
        %159 = sbr.rel (%p157) target = $region20
      $region19: #{modu_network_forward.4} parent=5 // pred_region
        // Predicated region
        $region21: #{modu_network_forward.4} parent=19 // pred_check
          %p160 = pneg %p54
        $region22: #{modu_network_forward.4} parent=19 // pred_check_branch
          %162 = sbr.rel (%p160) target = $region24
        $region23: #{modu_network_forward.4} parent=19 // pred_region
          %s163 = sand.u32 %s44, 1
          %s164 = scalar_lea.sflag [#allocation3], %s163
          %s165 = sand.u32 %s44, 1
          %s166 = smul.addr %s165, 320
          %s167 = scalar_lea.vmem [#allocation2], %s166
          %s169 = ssub.s32 5120, 5120
          %170 = vsyncadd %s164, %s169
          %s171 = smul.addr %s13, 40
          %s172 = smul.addr %s171, 128
          %s173 = scalar_lea.hbm %s1, %s172
          %s174 = sshll.u32 %s167, 4
          %s175 = int_to_ptr.vmem [resolvable:$true] %s174
          %180 = dma.hbm_to_vmem [thread:$0]  %s173, 5120, %s175, %s164, 128, 128, 8
        $region24: #{modu_network_forward.4} parent=19 // pred_fallthru
          _
        // Predicated region
        $region25: #{modu_network_forward.4} parent=19 // pred_check
          %p181 = pneg %p80
        $region26: #{modu_network_forward.4} parent=19 // pred_check_branch
          %183 = sbr.rel (%p181) target = $region28
        $region27: #{modu_network_forward.4} parent=19 // pred_region
          %p184 = scmp.lt.s32.totalorder %s13, 1
          %s185 = scalar_select %p184, %s13, 1
          %s186 = scalar_lea.vmem %s2, %s185
        $region28: #{modu_network_forward.4} parent=19 // pred_fallthru
          _
        // Predicated region
        $region29: #{modu_network_forward.4} parent=19 // pred_check
          %p187 = pneg %p106
        $region30: #{modu_network_forward.4} parent=19 // pred_check_branch
          %189 = sbr.rel (%p187) target = $region32
        $region31: #{modu_network_forward.4} parent=19 // pred_region
          %p190 = scmp.lt.s32.totalorder %s13, 1
          %s191 = scalar_select %p190, %s13, 1
          %s192 = scalar_lea.vmem %s3, %s191
        $region32: #{modu_network_forward.4} parent=19 // pred_fallthru
          _
      $region20: #{modu_network_forward.4} parent=5 // pred_fallthru
        _
      %p193 = scmp.le.s32.totalorder 1, %s13
      %p194 = scmp.lt.s32.totalorder %s13, 3
      %p195 = pnand %p193, %p194
      %p196 = pneg %p195
      // Predicated region
      $region33: #{modu_network_forward.4} parent=5 // pred_check
        _
      $region34: #{modu_network_forward.4} parent=5 // pred_check_branch
        %198 = sbr.rel (%p195) target = $region36
      $region35: #{modu_network_forward.4} parent=5 // pred_region
        %s199 = ssub.s32 %s13, 1
        %s200 = sand.u32 %s47, 1
        %s201 = scalar_lea.sflag [#allocation3], %s200
        %s202 = sand.u32 %s47, 1
        %s203 = smul.addr %s202, 320
        %s204 = scalar_lea.vmem [#allocation2], %s203
        // Predicated region
        $region37: #{modu_network_forward.4} parent=35 // pred_check
          %p205 = pneg %p60
        $region38: #{modu_network_forward.4} parent=35 // pred_check_branch
          %207 = sbr.rel (%p205) target = $region40
        $region39: #{modu_network_forward.4} parent=35 // pred_region
          %208 = dma.done %s201, 5120
        $region40: #{modu_network_forward.4} parent=35 // pred_fallthru
          _
        %p209 = pneg %p34
        %p210 = pneg %p31
        %s211 = sand.u32 %s47, 1
        %s212 = scalar_lea.sflag [#allocation3], %s211
        %s213 = sand.u32 %s47, 1
        %s214 = smul.addr %s213, 320
        %s215 = scalar_lea.vmem [#allocation2], %s214
        %p216 = pneg %p60
        %p217 = pneg %p57
        %p218 = scmp.lt.s32.totalorder %s18, 1
        %s219 = scalar_select %p218, %s18, 1
        %s220 = scalar_lea.vmem %s2, %s219
        %p221 = pneg %p86
        %p222 = pneg %p83
        %p223 = scmp.lt.s32.totalorder %s18, 1
        %s224 = scalar_select %p223, %s18, 1
        %s225 = scalar_lea.vmem %s3, %s224
        %p226 = pneg %p112
        %p227 = pneg %p109
        %p228 = pneg %p138
        %p229 = pneg %p135
        %p230 = scmp.lt.s32.totalorder %s18, 1
        %s231 = scalar_select %p230, %s18, 1
        %s232 = smul.addr %s231, 4
        %s233 = scalar_lea.vmem %s4, %s232
        %p234 = scmp.lt.s32.totalorder %s18, 1
        %s235 = scalar_select %p234, %s18, 1
        %s236 = scalar_lea.vmem %s2, %s235
        %p237 = scmp.lt.s32.totalorder %s18, 1
        %s238 = scalar_select %p237, %s18, 1
        %s239 = scalar_lea.vmem %s3, %s238
        %p240 = scmp.lt.s32.totalorder %s18, 1
        %s241 = scalar_select %p240, %s18, 1
        %s242 = smul.addr %s241, 4
        %s243 = scalar_lea.vmem %s4, %s242
        %v245 = vld [vmem:[%s204] sm:$0xff]
        %v246 = vld [vmem:[%s204 + $0x8] sm:$0xff]
        %v247 = vld [vmem:[%s204 + $0x10] sm:$0xff]
        %v248 = vld [vmem:[%s204 + $0x18] sm:$0xff]
        %v249 = vld [vmem:[%s204 + $0x20] sm:$0xff]
        %v250 = vld [vmem:[%s204 + $0x28] sm:$0xff]
        %v251 = vld [vmem:[%s204 + $0x30] sm:$0xff]
        %v252 = vld [vmem:[%s204 + $0x38] sm:$0xff]
        %v253 = vld [vmem:[%s204 + $0x40] sm:$0xff]
        %v254 = vld [vmem:[%s204 + $0x48] sm:$0xff]
        %v255 = vld [vmem:[%s204 + $0x50] sm:$0xff]
        %v256 = vld [vmem:[%s204 + $0x58] sm:$0xff]
        %v257 = vld [vmem:[%s204 + $0x60] sm:$0xff]
        %v258 = vld [vmem:[%s204 + $0x68] sm:$0xff]
        %v259 = vld [vmem:[%s204 + $0x70] sm:$0xff]
        %v260 = vld [vmem:[%s204 + $0x78] sm:$0xff]
        %v261 = vld [vmem:[%s204 + $0x80] sm:$0xff]
        %v262 = vld [vmem:[%s204 + $0x88] sm:$0xff]
        %v263 = vld [vmem:[%s204 + $0x90] sm:$0xff]
        %v264 = vld [vmem:[%s204 + $0x98] sm:$0xff]
        %v265 = vld [vmem:[%s204 + $0xa0] sm:$0xff]
        %v266 = vld [vmem:[%s204 + $0xa8] sm:$0xff]
        %v267 = vld [vmem:[%s204 + $0xb0] sm:$0xff]
        %v268 = vld [vmem:[%s204 + $0xb8] sm:$0xff]
        %v269 = vld [vmem:[%s204 + $0xc0] sm:$0xff]
        %v270 = vld [vmem:[%s204 + $0xc8] sm:$0xff]
        %v271 = vld [vmem:[%s204 + $0xd0] sm:$0xff]
        %v272 = vld [vmem:[%s204 + $0xd8] sm:$0xff]
        %v273 = vld [vmem:[%s204 + $0xe0] sm:$0xff]
        %v274 = vld [vmem:[%s204 + $0xe8] sm:$0xff]
        %v275 = vld [vmem:[%s204 + $0xf0] sm:$0xff]
        %v276 = vld [vmem:[%s204 + $0xf8] sm:$0xff]
        %v277 = vld [vmem:[%s204 + $0x100] sm:$0xff]
        %v278 = vld [vmem:[%s204 + $0x108] sm:$0xff]
        %v279 = vld [vmem:[%s204 + $0x110] sm:$0xff]
        %v280 = vld [vmem:[%s204 + $0x118] sm:$0xff]
        %v281 = vld [vmem:[%s204 + $0x120] sm:$0xff]
        %v282 = vld [vmem:[%s204 + $0x128] sm:$0xff]
        %v283 = vld [vmem:[%s204 + $0x130] sm:$0xff]
        %v284 = vld [vmem:[%s204 + $0x138] sm:$0xff]
        %v285 = vunpack.c.l.s8.bf16 %v245
        %v286 = vunpack.c.h.s8.bf16 %v245
        %v287 = vunpack.c.l.s8.bf16 %v246
        %v288 = vunpack.c.h.s8.bf16 %v246
        %v289 = vunpack.c.l.s8.bf16 %v247
        %v290 = vunpack.c.h.s8.bf16 %v247
        %v291 = vunpack.c.l.s8.bf16 %v248
        %v292 = vunpack.c.h.s8.bf16 %v248
        %v293 = vunpack.c.l.s8.bf16 %v249
        %v294 = vunpack.c.h.s8.bf16 %v249
        %v295 = vunpack.c.l.s8.bf16 %v250
        %v296 = vunpack.c.h.s8.bf16 %v250
        %v297 = vunpack.c.l.s8.bf16 %v251
        %v298 = vunpack.c.h.s8.bf16 %v251
        %v299 = vunpack.c.l.s8.bf16 %v252
        %v300 = vunpack.c.h.s8.bf16 %v252
        %v301 = vunpack.c.l.s8.bf16 %v253
        %v302 = vunpack.c.h.s8.bf16 %v253
        %v303 = vunpack.c.l.s8.bf16 %v254
        %v304 = vunpack.c.h.s8.bf16 %v254
        %v305 = vunpack.c.l.s8.bf16 %v255
        %v306 = vunpack.c.h.s8.bf16 %v255
        %v307 = vunpack.c.l.s8.bf16 %v256
        %v308 = vunpack.c.h.s8.bf16 %v256
        %v309 = vunpack.c.l.s8.bf16 %v257
        %v310 = vunpack.c.h.s8.bf16 %v257
        %v311 = vunpack.c.l.s8.bf16 %v258
        %v312 = vunpack.c.h.s8.bf16 %v258
        %v313 = vunpack.c.l.s8.bf16 %v259
        %v314 = vunpack.c.h.s8.bf16 %v259
        %v315 = vunpack.c.l.s8.bf16 %v260
        %v316 = vunpack.c.h.s8.bf16 %v260
        %v317 = vunpack.c.l.s8.bf16 %v261
        %v318 = vunpack.c.h.s8.bf16 %v261
        %v319 = vunpack.c.l.s8.bf16 %v262
        %v320 = vunpack.c.h.s8.bf16 %v262
        %v321 = vunpack.c.l.s8.bf16 %v263
        %v322 = vunpack.c.h.s8.bf16 %v263
        %v323 = vunpack.c.l.s8.bf16 %v264
        %v324 = vunpack.c.h.s8.bf16 %v264
        %v325 = vunpack.c.l.s8.bf16 %v265
        %v326 = vunpack.c.h.s8.bf16 %v265
        %v327 = vunpack.c.l.s8.bf16 %v266
        %v328 = vunpack.c.h.s8.bf16 %v266
        %v329 = vunpack.c.l.s8.bf16 %v267
        %v330 = vunpack.c.h.s8.bf16 %v267
        %v331 = vunpack.c.l.s8.bf16 %v268
        %v332 = vunpack.c.h.s8.bf16 %v268
        %v333 = vunpack.c.l.s8.bf16 %v269
        %v334 = vunpack.c.h.s8.bf16 %v269
        %v335 = vunpack.c.l.s8.bf16 %v270
        %v336 = vunpack.c.h.s8.bf16 %v270
        %v337 = vunpack.c.l.s8.bf16 %v271
        %v338 = vunpack.c.h.s8.bf16 %v271
        %v339 = vunpack.c.l.s8.bf16 %v272
        %v340 = vunpack.c.h.s8.bf16 %v272
        %v341 = vunpack.c.l.s8.bf16 %v273
        %v342 = vunpack.c.h.s8.bf16 %v273
        %v343 = vunpack.c.l.s8.bf16 %v274
        %v344 = vunpack.c.h.s8.bf16 %v274
        %v345 = vunpack.c.l.s8.bf16 %v275
        %v346 = vunpack.c.h.s8.bf16 %v275
        %v347 = vunpack.c.l.s8.bf16 %v276
        %v348 = vunpack.c.h.s8.bf16 %v276
        %v349 = vunpack.c.l.s8.bf16 %v277
        %v350 = vunpack.c.h.s8.bf16 %v277
        %v351 = vunpack.c.l.s8.bf16 %v278
        %v352 = vunpack.c.h.s8.bf16 %v278
        %v353 = vunpack.c.l.s8.bf16 %v279
        %v354 = vunpack.c.h.s8.bf16 %v279
        %v355 = vunpack.c.l.s8.bf16 %v280
        %v356 = vunpack.c.h.s8.bf16 %v280
        %v357 = vunpack.c.l.s8.bf16 %v281
        %v358 = vunpack.c.h.s8.bf16 %v281
        %v359 = vunpack.c.l.s8.bf16 %v282
        %v360 = vunpack.c.h.s8.bf16 %v282
        %v361 = vunpack.c.l.s8.bf16 %v283
        %v362 = vunpack.c.h.s8.bf16 %v283
        %v363 = vunpack.c.l.s8.bf16 %v284
        %v364 = vunpack.c.h.s8.bf16 %v284
        %v365 = vld [vmem:[%s0] sm:$0xff]
        %v366 = vld [vmem:[%s0 + $0x8] sm:$0xff]
        %v367 = vld [vmem:[%s0 + $0x10] sm:$0xff]
        %v368 = vld [vmem:[%s0 + $0x18] sm:$0xff]
        %v369 = vld [vmem:[%s0 + $0x20] sm:$0xff]
        %v375 = vunpack.c.l.b16 %v365
        %v376 = vunpack.c.h.b16 %v365
        %v377 = vunpack.c.l.b16 %v366
        %v378 = vunpack.c.h.b16 %v366
        %v379 = vunpack.c.l.b16 %v367
        %v380 = vunpack.c.h.b16 %v367
        %v381 = vunpack.c.l.b16 %v368
        %v382 = vunpack.c.h.b16 %v368
        %v383 = vunpack.c.l.b16 %v369
        %v384 = vunpack.c.h.b16 %v369
        %v385 = vpack.c.b16 %v375, %v375
        %v386 = vpack.c.b16 %v376, %v376
        %v387 = vpack.c.b16 %v377, %v377
        %v388 = vpack.c.b16 %v378, %v378
        %v389 = vpack.c.b16 %v379, %v379
        %v390 = vpack.c.b16 %v380, %v380
        %v391 = vpack.c.b16 %v381, %v381
        %v392 = vpack.c.b16 %v382, %v382
        %v393 = vpack.c.b16 %v383, %v383
        %v394 = vpack.c.b16 %v384, %v384
        %405 = vmatprep.subr.bf16.mxu0 0
        %406 = vmatpush1.bf16.msra.mxu0 %v285
        %407 = vmatprep.subr.bf16.mxu0 0
        %408 = vmatpush1.bf16.msra.mxu0 %v286
        %409 = vmatprep.subr.bf16.mxu0 0
        %410 = vmatpush1.bf16.msra.mxu0 %v287
        %411 = vmatprep.subr.bf16.mxu0 0
        %412 = vmatpush1.bf16.msra.mxu0 %v288
        %413 = vmatprep.subr.bf16.mxu0 0
        %414 = vmatpush1.bf16.msra.mxu0 %v289
        %415 = vmatprep.subr.bf16.mxu0 0
        %416 = vmatpush1.bf16.msra.mxu0 %v290
        %417 = vmatprep.subr.bf16.mxu0 0
        %418 = vmatpush1.bf16.msra.mxu0 %v291
        %419 = vmatprep.subr.bf16.mxu0 0
        %420 = vmatpush1.bf16.msra.mxu0 %v292
        %421 = vmatprep.subr.bf16.mxu0 0
        %422 = vmatpush1.bf16.msra.mxu0 %v293
        %423 = vmatprep.subr.bf16.mxu0 0
        %424 = vmatpush1.bf16.msra.mxu0 %v294
        %425 = vmatprep.subr.bf16.mxu0 0
        %426 = vmatpush1.bf16.msra.mxu0 %v295
        %427 = vmatprep.subr.bf16.mxu0 0
        %428 = vmatpush1.bf16.msra.mxu0 %v296
        %429 = vmatprep.subr.bf16.mxu0 0
        %430 = vmatpush1.bf16.msra.mxu0 %v297
        %431 = vmatprep.subr.bf16.mxu0 0
        %432 = vmatpush1.bf16.msra.mxu0 %v298
        %433 = vmatprep.subr.bf16.mxu0 0
        %434 = vmatpush1.bf16.msra.mxu0 %v299
        %435 = vmatprep.subr.bf16.mxu0 0
        %436 = vmatpush1.bf16.msra.mxu0 %v300
        %437 = vmatprep.mubr.bf16.mxu0 %v386
        %438 = vmatmul.mubr.bf16.gmra.mrb[0].mxu0 %v385
        %v439 = vpop.f32.mrb[0].mxu0
        %v440 = vadd.f32 0.0, %v439
        %v441 = vpop.f32.mrb[0].mxu0
        %v442 = vpop.f32.mrb[0].mxu0
        %v443 = vpop.f32.mrb[0].mxu0
        %444 = vdwg.mxu0
        %445 = vmatprep.subr.bf16.mxu0 0
        %446 = vmatpush1.bf16.msra.mxu0 %v301
        %447 = vmatprep.subr.bf16.mxu0 0
        %448 = vmatpush1.bf16.msra.mxu0 %v302
        %449 = vmatprep.subr.bf16.mxu0 0
        %450 = vmatpush1.bf16.msra.mxu0 %v303
        %451 = vmatprep.subr.bf16.mxu0 0
        %452 = vmatpush1.bf16.msra.mxu0 %v304
        %453 = vmatprep.subr.bf16.mxu0 0
        %454 = vmatpush1.bf16.msra.mxu0 %v305
        %455 = vmatprep.subr.bf16.mxu0 0
        %456 = vmatpush1.bf16.msra.mxu0 %v306
        %457 = vmatprep.subr.bf16.mxu0 0
        %458 = vmatpush1.bf16.msra.mxu0 %v307
        %459 = vmatprep.subr.bf16.mxu0 0
        %460 = vmatpush1.bf16.msra.mxu0 %v308
        %461 = vmatprep.subr.bf16.mxu0 0
        %462 = vmatpush1.bf16.msra.mxu0 %v309
        %463 = vmatprep.subr.bf16.mxu0 0
        %464 = vmatpush1.bf16.msra.mxu0 %v310
        %465 = vmatprep.subr.bf16.mxu0 0
        %466 = vmatpush1.bf16.msra.mxu0 %v311
        %467 = vmatprep.subr.bf16.mxu0 0
        %468 = vmatpush1.bf16.msra.mxu0 %v312
        %469 = vmatprep.subr.bf16.mxu0 0
        %470 = vmatpush1.bf16.msra.mxu0 %v313
        %471 = vmatprep.subr.bf16.mxu0 0
        %472 = vmatpush1.bf16.msra.mxu0 %v314
        %473 = vmatprep.subr.bf16.mxu0 0
        %474 = vmatpush1.bf16.msra.mxu0 %v315
        %475 = vmatprep.subr.bf16.mxu0 0
        %476 = vmatpush1.bf16.msra.mxu0 %v316
        %477 = vmatprep.mubr.bf16.mxu0 %v388
        %478 = vmatmul.mubr.bf16.gmra.mrb[0].mxu0 %v387
        %v479 = vpop.f32.mrb[0].mxu0
        %v480 = vadd.f32 %v440, %v479
        %v481 = vpop.f32.mrb[0].mxu0
        %v482 = vpop.f32.mrb[0].mxu0
        %v483 = vpop.f32.mrb[0].mxu0
        %484 = vdwg.mxu0
        %485 = vmatprep.subr.bf16.mxu0 0
        %486 = vmatpush1.bf16.msra.mxu0 %v317
        %487 = vmatprep.subr.bf16.mxu0 0
        %488 = vmatpush1.bf16.msra.mxu0 %v318
        %489 = vmatprep.subr.bf16.mxu0 0
        %490 = vmatpush1.bf16.msra.mxu0 %v319
        %491 = vmatprep.subr.bf16.mxu0 0
        %492 = vmatpush1.bf16.msra.mxu0 %v320
        %493 = vmatprep.subr.bf16.mxu0 0
        %494 = vmatpush1.bf16.msra.mxu0 %v321
        %495 = vmatprep.subr.bf16.mxu0 0
        %496 = vmatpush1.bf16.msra.mxu0 %v322
        %497 = vmatprep.subr.bf16.mxu0 0
        %498 = vmatpush1.bf16.msra.mxu0 %v323
        %499 = vmatprep.subr.bf16.mxu0 0
        %500 = vmatpush1.bf16.msra.mxu0 %v324
        %501 = vmatprep.subr.bf16.mxu0 0
        %502 = vmatpush1.bf16.msra.mxu0 %v325
        %503 = vmatprep.subr.bf16.mxu0 0
        %504 = vmatpush1.bf16.msra.mxu0 %v326
        %505 = vmatprep.subr.bf16.mxu0 0
        %506 = vmatpush1.bf16.msra.mxu0 %v327
        %507 = vmatprep.subr.bf16.mxu0 0
        %508 = vmatpush1.bf16.msra.mxu0 %v328
        %509 = vmatprep.subr.bf16.mxu0 0
        %510 = vmatpush1.bf16.msra.mxu0 %v329
        %511 = vmatprep.subr.bf16.mxu0 0
        %512 = vmatpush1.bf16.msra.mxu0 %v330
        %513 = vmatprep.subr.bf16.mxu0 0
        %514 = vmatpush1.bf16.msra.mxu0 %v331
        %515 = vmatprep.subr.bf16.mxu0 0
        %516 = vmatpush1.bf16.msra.mxu0 %v332
        %517 = vmatprep.mubr.bf16.mxu0 %v390
        %518 = vmatmul.mubr.bf16.gmra.mrb[0].mxu0 %v389
        %v519 = vpop.f32.mrb[0].mxu0
        %v520 = vadd.f32 %v480, %v519
        %v521 = vpop.f32.mrb[0].mxu0
        %v522 = vpop.f32.mrb[0].mxu0
        %v523 = vpop.f32.mrb[0].mxu0
        %524 = vdwg.mxu0
        %525 = vmatprep.subr.bf16.mxu0 0
        %526 = vmatpush1.bf16.msra.mxu0 %v333
        %527 = vmatprep.subr.bf16.mxu0 0
        %528 = vmatpush1.bf16.msra.mxu0 %v334
        %529 = vmatprep.subr.bf16.mxu0 0
        %530 = vmatpush1.bf16.msra.mxu0 %v335
        %531 = vmatprep.subr.bf16.mxu0 0
        %532 = vmatpush1.bf16.msra.mxu0 %v336
        %533 = vmatprep.subr.bf16.mxu0 0
        %534 = vmatpush1.bf16.msra.mxu0 %v337
        %535 = vmatprep.subr.bf16.mxu0 0
        %536 = vmatpush1.bf16.msra.mxu0 %v338
        %537 = vmatprep.subr.bf16.mxu0 0
        %538 = vmatpush1.bf16.msra.mxu0 %v339
        %539 = vmatprep.subr.bf16.mxu0 0
        %540 = vmatpush1.bf16.msra.mxu0 %v340
        %541 = vmatprep.subr.bf16.mxu0 0
        %542 = vmatpush1.bf16.msra.mxu0 %v341
        %543 = vmatprep.subr.bf16.mxu0 0
        %544 = vmatpush1.bf16.msra.mxu0 %v342
        %545 = vmatprep.subr.bf16.mxu0 0
        %546 = vmatpush1.bf16.msra.mxu0 %v343
        %547 = vmatprep.subr.bf16.mxu0 0
        %548 = vmatpush1.bf16.msra.mxu0 %v344
        %549 = vmatprep.subr.bf16.mxu0 0
        %550 = vmatpush1.bf16.msra.mxu0 %v345
        %551 = vmatprep.subr.bf16.mxu0 0
        %552 = vmatpush1.bf16.msra.mxu0 %v346
        %553 = vmatprep.subr.bf16.mxu0 0
        %554 = vmatpush1.bf16.msra.mxu0 %v347
        %555 = vmatprep.subr.bf16.mxu0 0
        %556 = vmatpush1.bf16.msra.mxu0 %v348
        %557 = vmatprep.mubr.bf16.mxu0 %v392
        %558 = vmatmul.mubr.bf16.gmra.mrb[0].mxu0 %v391
        %v559 = vpop.f32.mrb[0].mxu0
        %v560 = vadd.f32 %v520, %v559
        %v561 = vpop.f32.mrb[0].mxu0
        %v562 = vpop.f32.mrb[0].mxu0
        %v563 = vpop.f32.mrb[0].mxu0
        %564 = vdwg.mxu0
        %565 = vmatprep.subr.bf16.mxu0 0
        %566 = vmatpush1.bf16.msra.mxu0 %v349
        %567 = vmatprep.subr.bf16.mxu0 0
        %568 = vmatpush1.bf16.msra.mxu0 %v350
        %569 = vmatprep.subr.bf16.mxu0 0
        %570 = vmatpush1.bf16.msra.mxu0 %v351
        %571 = vmatprep.subr.bf16.mxu0 0
        %572 = vmatpush1.bf16.msra.mxu0 %v352
        %573 = vmatprep.subr.bf16.mxu0 0
        %574 = vmatpush1.bf16.msra.mxu0 %v353
        %575 = vmatprep.subr.bf16.mxu0 0
        %576 = vmatpush1.bf16.msra.mxu0 %v354
        %577 = vmatprep.subr.bf16.mxu0 0
        %578 = vmatpush1.bf16.msra.mxu0 %v355
        %579 = vmatprep.subr.bf16.mxu0 0
        %580 = vmatpush1.bf16.msra.mxu0 %v356
        %581 = vmatprep.subr.bf16.mxu0 0
        %582 = vmatpush1.bf16.msra.mxu0 %v357
        %583 = vmatprep.subr.bf16.mxu0 0
        %584 = vmatpush1.bf16.msra.mxu0 %v358
        %585 = vmatprep.subr.bf16.mxu0 0
        %586 = vmatpush1.bf16.msra.mxu0 %v359
        %587 = vmatprep.subr.bf16.mxu0 0
        %588 = vmatpush1.bf16.msra.mxu0 %v360
        %589 = vmatprep.subr.bf16.mxu0 0
        %590 = vmatpush1.bf16.msra.mxu0 %v361
        %591 = vmatprep.subr.bf16.mxu0 0
        %592 = vmatpush1.bf16.msra.mxu0 %v362
        %593 = vmatprep.subr.bf16.mxu0 0
        %594 = vmatpush1.bf16.msra.mxu0 %v363
        %595 = vmatprep.subr.bf16.mxu0 0
        %596 = vmatpush1.bf16.msra.mxu0 %v364
        %597 = vmatprep.mubr.bf16.mxu0 %v394
        %598 = vmatmul.mubr.bf16.gmra.mrb[0].mxu0 %v393
        %v599 = vpop.f32.mrb[0].mxu0
        %v600 = vadd.f32 %v560, %v599
        %v601 = vpop.f32.mrb[0].mxu0
        %v602 = vpop.f32.mrb[0].mxu0
        %v603 = vpop.f32.mrb[0].mxu0
        %604 = vdwg.mxu0
        %v605 = vld [vmem:[%s236] sm:$0x1]
        %v607 = vlaneseq
        %v608 = vshrl.u32 %v607, 7
        %v609 = vsub.s32 0, %v608
        %v610 = vrot.slane %v605, %v609
        %v612 = vmul.f32 %v600, %v610
        %v613 = vld [vmem:[%s239] sm:$0x1]
        %v615 = vlaneseq
        %v616 = vshrl.u32 %v615, 7
        %v617 = vsub.s32 0, %v616
        %v618 = vrot.slane %v613, %v617
        %v620 = vadd.f32 %v612, %v618
        %v621 = vmul.f32 %v620, 0.5
        %v622 = vmul.f32 %v620, 0.70710677
        %v623 = verf.f32.pop %v622
        %v624 = vadd.f32 %v623, 1.0
        %v625 = vmul.f32 %v621, %v624
        %v626 = vpack.c.bf16 %v625, %v625
        %627 = vst [vmem:[%s243] sm:$0xf] %v626
        %p628 = scmp.lt.s32.totalorder %s18, 1
        %s629 = scalar_select %p628, %s18, 1
        %s630 = smul.addr %s629, 4
        %s631 = scalar_lea.vmem %s4, %s630
        // Predicated region
        $region41: #{modu_network_forward.4} parent=35 // pred_check
          %p632 = pneg %p135
        $region42: #{modu_network_forward.4} parent=35 // pred_check_branch
          %634 = sbr.rel (%p632) target = $region44
        $region43: #{modu_network_forward.4} parent=35 // pred_region
          _
        $region44: #{modu_network_forward.4} parent=35 // pred_fallthru
          _
      $region36: #{modu_network_forward.4} parent=5 // pred_fallthru
        _
      %p635 = scmp.le.s32.totalorder 2, %s13
      // Predicated region
      $region45: #{modu_network_forward.4} parent=5 // pred_check
        %p636 = pneg %p635
      $region46: #{modu_network_forward.4} parent=5 // pred_check_branch
        %638 = sbr.rel (%p636) target = $region48
      $region47: #{modu_network_forward.4} parent=5 // pred_region
        %s639 = ssub.s32 %s13, 2
        // Predicated region
        $region49: #{modu_network_forward.4} parent=47 // pred_check
          %p640 = pneg %p141
        $region50: #{modu_network_forward.4} parent=47 // pred_check_branch
          %642 = sbr.rel (%p640) target = $region52
        $region51: #{modu_network_forward.4} parent=47 // pred_region
          %p643 = scmp.lt.s32.totalorder %s19, 1
          %s644 = scalar_select %p643, %s19, 1
          %s645 = smul.addr %s644, 4
          %s646 = scalar_lea.vmem %s4, %s645
        $region52: #{modu_network_forward.4} parent=47 // pred_fallthru
          _
      $region48: #{modu_network_forward.4} parent=5 // pred_fallthru
        _
    $region6: #{modu_network_forward.4} parent=1 // loop_footer
      %s17 = sadd.s32 1, %s13
    $region7: #{modu_network_forward.4} parent=1 // loop_footer_branch
      %12 = sbr.rel target = $region3
    $region8: #{modu_network_forward.4} parent=1 // loop_exit
      _
    %647 = vsyncpa [#allocation3], 1
    %s648 = scalar_lea.sflag [#allocation3], 1
    %649 = vsyncpa %s648, 1

// kernel: custom-call.6
$region0: #{custom-call.6}
  %s0 = inlined_call_operand.vmem [shape: f32[2,32,32], index: 0, kind: input, shape index: {}]
  %s1 = inlined_call_operand.vmem [shape: f32[2,32,32], index: 1, kind: input, shape index: {}]
  %s2 = inlined_call_operand.vmem [shape: f32[2,32,32], index: 2, kind: output, shape index: {0}]
  %s3 = inlined_call_operand.vmem [shape: f32[2,32,32], index: 3, kind: output, shape index: {1}]
  %s4 = inlined_call_operand.vmem [shape: f32[2,32], index: 4, kind: output, shape index: {2}]
  %s5 = inlined_call_operand.vmem [shape: f32[2,32], index: 5, kind: output, shape index: {3}]
  %6 = xla_tuple %s2, %s3, %s4, %s5
  $region1: #{custom-call.6} parent=0
    #allocation0 [shape = 'u8[32768]{0}', space=vmem, size = 0x8000, scoped, tag = 'operand span for operand 0']
    #allocation1 [shape = 'u8[32768]{0}', space=vmem, size = 0x8000, scoped, tag = 'operand span for operand 1']
    #allocation2 [shape = 'u8[32768]{0}', space=vmem, size = 0x8000, scoped, tag = 'operand span for operand 2']
    #allocation3 [shape = 'u8[32768]{0}', space=vmem, size = 0x8000, scoped, tag = 'operand span for operand 3']
    #allocation4 [shape = 'u8[4096]{0}', space=vmem, size = 0x1000, scoped, tag = 'operand span for operand 4']
    #allocation5 [shape = 'u8[2048]{0}', space=vmem, size = 0x800, scoped, tag = 'packed  for operand 4']
    #allocation6 [shape = 'u8[4096]{0}', space=vmem, size = 0x1000, scoped, tag = 'operand span for operand 5']
    #allocation7 [shape = 'u8[2048]{0}', space=vmem, size = 0x800, scoped, tag = 'packed  for operand 5']
    loop: start=0, step=1, limit=4
    $region2: #{custom-call.6} parent=1 // loop_pre_header
      _
    $region3: #{custom-call.6} parent=1 // loop_header
      %s8 = sphi 0, %s12
      %p9 = scmp.ge.s32.totalorder %s8, 4
      %s15 = sphi 0, %s34
      %s16 = sphi 0, %s30
      %s17 = sphi 0, %s26
      %s18 = sphi 0, %s15
      %s19 = sphi 0, %s16
      %s20 = sphi 0, %s17
      %s21 = sphi 0, %s18
      %s22 = sphi 0, %s19
      %s23 = sphi 0, %s20
      %s49 = sphi 0, %s51
      %s52 = sphi 0, %s49
      %s53 = sphi 0, %s52
      %s69 = sphi 0, %s53
      %s87 = sphi 0, %s89
      %s90 = sphi 0, %s87
      %s91 = sphi 0, %s90
      %s107 = sphi 0, %s91
    $region4: #{custom-call.6} parent=1 // loop_header_branch
      %11 = sbr.rel (%p9) target = $region8
    $region5: #{custom-call.6} parent=1 // loop_body
      %s13 = ssub.s32 %s8, 1
      %s14 = ssub.s32 %s8, 2
      %s24 = sadd.s32 1, %s17
      %p25 = scmp.ge.s32.totalorder %s24, 1
      %s26 = scalar_select %p25, 0, %s24
      %s27 = sadd.s32 1, %s16
      %s28 = scalar_select %p25, %s27, %s16
      %p29 = scmp.ge.s32.totalorder %s28, 1
      %s30 = scalar_select %p29, 0, %s28
      %s31 = sadd.s32 1, %s15
      %s32 = scalar_select %p29, %s31, %s15
      %p33 = scmp.ge.s32.totalorder %s32, 2
      %s34 = scalar_select %p33, 0, %s32
      %p35 = scmp.lt.s32.totalorder %s15, 0
      %s36 = ssub.s32 0, %s15
      %s37 = scalar_select %p35, %s36, %s15
      %s38 = sshrl.u32 %s37, 3
      %s39 = ssub.s32 0, %s38
      %s40 = scalar_select %p35, %s39, %s38
      %p41 = scmp.lt.s32.totalorder %s34, 0
      %s42 = ssub.s32 0, %s34
      %s43 = scalar_select %p41, %s42, %s34
      %s44 = sshrl.u32 %s43, 3
      %s45 = ssub.s32 0, %s44
      %s46 = scalar_select %p41, %s45, %s44
      %s47 = ssub.s32 %s40, %s46
      %p48 = scmp.eq.s32.totalorder %s47, 0
      %s50 = sadd.s32 %s49, 1
      %s51 = scalar_select %p48, %s49, %s50
      %p54 = pneg %p48
      %p55 = scmp.eq.s32.totalorder %s8, 1
      %p56 = por %p54, %p55
      %p57 = scmp.ne.s32.totalorder %s49, %s52
      %p58 = scmp.eq.s32.totalorder %s8, 0
      %p59 = por %p57, %p58
      %p60 = scmp.ne.s32.totalorder %s49, %s52
      %p61 = scmp.eq.s32.totalorder %s13, 1
      %p62 = por %p60, %p61
      %p63 = scmp.ne.s32.totalorder %s52, %s53
      %p64 = scmp.eq.s32.totalorder %s13, 0
      %p65 = por %p63, %p64
      %p66 = scmp.ne.s32.totalorder %s52, %s53
      %p67 = scmp.eq.s32.totalorder %s14, 1
      %p68 = por %p66, %p67
      %p70 = scmp.ne.s32.totalorder %s53, %s69
      %p71 = scmp.eq.s32.totalorder %s14, 0
      %p72 = por %p70, %p71
      %p73 = scmp.lt.s32.totalorder %s15, 0
      %s74 = ssub.s32 0, %s15
      %s75 = scalar_select %p73, %s74, %s15
      %s76 = sshrl.u32 %s75, 3
      %s77 = ssub.s32 0, %s76
      %s78 = scalar_select %p73, %s77, %s76
      %p79 = scmp.lt.s32.totalorder %s34, 0
      %s80 = ssub.s32 0, %s34
      %s81 = scalar_select %p79, %s80, %s34
      %s82 = sshrl.u32 %s81, 3
      %s83 = ssub.s32 0, %s82
      %s84 = scalar_select %p79, %s83, %s82
      %s85 = ssub.s32 %s78, %s84
      %p86 = scmp.eq.s32.totalorder %s85, 0
      %s88 = sadd.s32 %s87, 1
      %s89 = scalar_select %p86, %s87, %s88
      %p92 = pneg %p86
      %p93 = scmp.eq.s32.totalorder %s8, 1
      %p94 = por %p92, %p93
      %p95 = scmp.ne.s32.totalorder %s87, %s90
      %p96 = scmp.eq.s32.totalorder %s8, 0
      %p97 = por %p95, %p96
      %p98 = scmp.ne.s32.totalorder %s87, %s90
      %p99 = scmp.eq.s32.totalorder %s13, 1
      %p100 = por %p98, %p99
      %p101 = scmp.ne.s32.totalorder %s90, %s91
      %p102 = scmp.eq.s32.totalorder %s13, 0
      %p103 = por %p101, %p102
      %p104 = scmp.ne.s32.totalorder %s90, %s91
      %p105 = scmp.eq.s32.totalorder %s14, 1
      %p106 = por %p104, %p105
      %p108 = scmp.ne.s32.totalorder %s91, %s107
      %p109 = scmp.eq.s32.totalorder %s14, 0
      %p110 = por %p108, %p109
      %p111 = scmp.le.s32.totalorder 1, %s8
      %p112 = scmp.lt.s32.totalorder %s8, 3
      %p113 = pnand %p111, %p112
      %p114 = pneg %p113
      // Predicated region
      $region9: #{custom-call.6} parent=5 // pred_check
        _
      $region10: #{custom-call.6} parent=5 // pred_check_branch
        %116 = sbr.rel (%p113) target = $region12
      $region11: #{custom-call.6} parent=5 // pred_region
        %s117 = ssub.s32 %s8, 1
      $region12: #{custom-call.6} parent=5 // pred_fallthru
        _
      %p118 = scmp.lt.s32.totalorder %s8, 2
      // Predicated region
      $region13: #{custom-call.6} parent=5 // pred_check
        %p119 = pneg %p118
      $region14: #{custom-call.6} parent=5 // pred_check_branch
        %121 = sbr.rel (%p119) target = $region16
      $region15: #{custom-call.6} parent=5 // pred_region
        %s122 = sand.u32 %s8, 1
        %s123 = sand.u32 %s8, 1
        %s124 = smul.addr %s123, 32
        %s125 = scalar_lea.vmem [#allocation0], %s124
        %s126 = smul.u32 4, %s16
        %s127 = sadd.s32 %s17, %s126
        %s128 = smul.addr %s15, 4
        %s129 = sadd.s32 %s127, %s128
        %s130 = smul.addr %s129, 8
        %s131 = scalar_lea.vmem %s0, %s130
        // Predicated region
        $region17: #{custom-call.6} parent=15 // pred_check
          _
        $region18: #{custom-call.6} parent=15 // pred_check_branch
          %133 = sbr.rel (0) target = $region20
        $region19: #{custom-call.6} parent=15 // pred_region
          // Predicated region
          $region21: #{custom-call.6} parent=19 // pred_check
            _
          $region22: #{custom-call.6} parent=19 // pred_check_branch
            %135 = sbr.rel (0) target = $region24
          $region23: #{custom-call.6} parent=19 // pred_region
            // Predicated region
            $region36: #{custom-call.6} parent=23 // pred_check
              _
            $region37: #{custom-call.6} parent=23 // pred_check_branch
              %156 = sbr.rel (0) target = $region39
            $region38: #{custom-call.6} parent=23 // pred_region
              loop: start=0, step=1, limit=1
              $region40: #{custom-call.6} parent=38 // loop_pre_header
                _
              $region41: #{custom-call.6} parent=38 // loop_header
                %s158 = sphi 0, %s162
                %p159 = scmp.ge.s32.totalorder %s158, 1
                %s163 = sphi %s131, %s131
                %s164 = sphi %s125, %s125
              $region42: #{custom-call.6} parent=38 // loop_header_branch
                %161 = sbr.rel (%p159) target = $region46
              $region43: #{custom-call.6} parent=38 // loop_body
                %v165 = vld [vmem:[%s163] sm:$0xff]
                %166 = vst [vmem:[%s164] sm:$0xff] %v165
                %v167 = vld [vmem:[%s163 + $0x8] sm:$0xff]
                %168 = vst [vmem:[%s164 + $0x8] sm:$0xff] %v167
                %v169 = vld [vmem:[%s163 + $0x10] sm:$0xff]
                %170 = vst [vmem:[%s164 + $0x10] sm:$0xff] %v169
                %v171 = vld [vmem:[%s163 + $0x18] sm:$0xff]
                %172 = vst [vmem:[%s164 + $0x18] sm:$0xff] %v171
              $region44: #{custom-call.6} parent=38 // loop_footer
                %s162 = sadd.s32 1, %s158
              $region45: #{custom-call.6} parent=38 // loop_footer_branch
                %157 = sbr.rel target = $region41
              $region46: #{custom-call.6} parent=38 // loop_exit
                _
            $region39: #{custom-call.6} parent=23 // pred_fallthru
              _
            // Predicated region
            $region47: #{custom-call.6} parent=23 // pred_check
              _
            $region48: #{custom-call.6} parent=23 // pred_check_branch
              %174 = sbr.rel target = $region50
            $region49: #{custom-call.6} parent=23 // pred_region
              _
            $region50: #{custom-call.6} parent=23 // pred_fallthru
              _
          $region24: #{custom-call.6} parent=19 // pred_fallthru
            _
          // Predicated region
          $region25: #{custom-call.6} parent=19 // pred_check
            _
          $region26: #{custom-call.6} parent=19 // pred_check_branch
            %137 = sbr.rel target = $region28
          $region27: #{custom-call.6} parent=19 // pred_region
            loop: start=0, step=1, limit=1
            $region29: #{custom-call.6} parent=27 // loop_pre_header
              _
            $region30: #{custom-call.6} parent=27 // loop_header
              %s140 = sphi 0, %s144
              %p141 = scmp.ge.s32.totalorder %s140, 1
              %s145 = sphi %s131, %s131
              %s146 = sphi %s125, %s125
            $region31: #{custom-call.6} parent=27 // loop_header_branch
              %143 = sbr.rel (%p141) target = $region35
            $region32: #{custom-call.6} parent=27 // loop_body
              %v147 = vld [vmem:[%s145] sm:$0xff]
              %148 = vst [vmem:[%s146] sm:$0xff] %v147
              %v149 = vld [vmem:[%s145 + $0x8] sm:$0xff]
              %150 = vst [vmem:[%s146 + $0x8] sm:$0xff] %v149
              %v151 = vld [vmem:[%s145 + $0x10] sm:$0xff]
              %152 = vst [vmem:[%s146 + $0x10] sm:$0xff] %v151
              %v153 = vld [vmem:[%s145 + $0x18] sm:$0xff]
              %154 = vst [vmem:[%s146 + $0x18] sm:$0xff] %v153
            $region33: #{custom-call.6} parent=27 // loop_footer
              %s144 = sadd.s32 1, %s140
            $region34: #{custom-call.6} parent=27 // loop_footer_branch
              %139 = sbr.rel target = $region30
            $region35: #{custom-call.6} parent=27 // loop_exit
              _
          $region28: #{custom-call.6} parent=19 // pred_fallthru
            _
        $region20: #{custom-call.6} parent=15 // pred_fallthru
          _
        %175 = vnop
        %s176 = sand.u32 %s8, 1
        %s177 = sand.u32 %s8, 1
        %s178 = smul.addr %s177, 32
        %s179 = scalar_lea.vmem [#allocation1], %s178
        %s180 = smul.u32 4, %s16
        %s181 = sadd.s32 %s17, %s180
        %s182 = smul.addr %s15, 4
        %s183 = sadd.s32 %s181, %s182
        %s184 = smul.addr %s183, 8
        %s185 = scalar_lea.vmem %s1, %s184
        // Predicated region
        $region51: #{custom-call.6} parent=15 // pred_check
          _
        $region52: #{custom-call.6} parent=15 // pred_check_branch
          %187 = sbr.rel (0) target = $region54
        $region53: #{custom-call.6} parent=15 // pred_region
          // Predicated region
          $region55: #{custom-call.6} parent=53 // pred_check
            _
          $region56: #{custom-call.6} parent=53 // pred_check_branch
            %189 = sbr.rel (0) target = $region58
          $region57: #{custom-call.6} parent=53 // pred_region
            // Predicated region
            $region70: #{custom-call.6} parent=57 // pred_check
              _
            $region71: #{custom-call.6} parent=57 // pred_check_branch
              %210 = sbr.rel (0) target = $region73
            $region72: #{custom-call.6} parent=57 // pred_region
              loop: start=0, step=1, limit=1
              $region74: #{custom-call.6} parent=72 // loop_pre_header
                _
              $region75: #{custom-call.6} parent=72 // loop_header
                %s212 = sphi 0, %s216
                %p213 = scmp.ge.s32.totalorder %s212, 1
                %s217 = sphi %s185, %s185
                %s218 = sphi %s179, %s179
              $region76: #{custom-call.6} parent=72 // loop_header_branch
                %215 = sbr.rel (%p213) target = $region80
              $region77: #{custom-call.6} parent=72 // loop_body
                %v219 = vld [vmem:[%s217] sm:$0xff]
                %220 = vst [vmem:[%s218] sm:$0xff] %v219
                %v221 = vld [vmem:[%s217 + $0x8] sm:$0xff]
                %222 = vst [vmem:[%s218 + $0x8] sm:$0xff] %v221
                %v223 = vld [vmem:[%s217 + $0x10] sm:$0xff]
                %224 = vst [vmem:[%s218 + $0x10] sm:$0xff] %v223
                %v225 = vld [vmem:[%s217 + $0x18] sm:$0xff]
                %226 = vst [vmem:[%s218 + $0x18] sm:$0xff] %v225
              $region78: #{custom-call.6} parent=72 // loop_footer
                %s216 = sadd.s32 1, %s212
              $region79: #{custom-call.6} parent=72 // loop_footer_branch
                %211 = sbr.rel target = $region75
              $region80: #{custom-call.6} parent=72 // loop_exit
                _
            $region73: #{custom-call.6} parent=57 // pred_fallthru
              _
            // Predicated region
            $region81: #{custom-call.6} parent=57 // pred_check
              _
            $region82: #{custom-call.6} parent=57 // pred_check_branch
              %228 = sbr.rel target = $region84
            $region83: #{custom-call.6} parent=57 // pred_region
              _
            $region84: #{custom-call.6} parent=57 // pred_fallthru
              _
          $region58: #{custom-call.6} parent=53 // pred_fallthru
            _
          // Predicated region
          $region59: #{custom-call.6} parent=53 // pred_check
            _
          $region60: #{custom-call.6} parent=53 // pred_check_branch
            %191 = sbr.rel target = $region62
          $region61: #{custom-call.6} parent=53 // pred_region
            loop: start=0, step=1, limit=1
            $region63: #{custom-call.6} parent=61 // loop_pre_header
              _
            $region64: #{custom-call.6} parent=61 // loop_header
              %s194 = sphi 0, %s198
              %p195 = scmp.ge.s32.totalorder %s194, 1
              %s199 = sphi %s185, %s185
              %s200 = sphi %s179, %s179
            $region65: #{custom-call.6} parent=61 // loop_header_branch
              %197 = sbr.rel (%p195) target = $region69
            $region66: #{custom-call.6} parent=61 // loop_body
              %v201 = vld [vmem:[%s199] sm:$0xff]
              %202 = vst [vmem:[%s200] sm:$0xff] %v201
              %v203 = vld [vmem:[%s199 + $0x8] sm:$0xff]
              %204 = vst [vmem:[%s200 + $0x8] sm:$0xff] %v203
              %v205 = vld [vmem:[%s199 + $0x10] sm:$0xff]
              %206 = vst [vmem:[%s200 + $0x10] sm:$0xff] %v205
              %v207 = vld [vmem:[%s199 + $0x18] sm:$0xff]
              %208 = vst [vmem:[%s200 + $0x18] sm:$0xff] %v207
            $region67: #{custom-call.6} parent=61 // loop_footer
              %s198 = sadd.s32 1, %s194
            $region68: #{custom-call.6} parent=61 // loop_footer_branch
              %193 = sbr.rel target = $region64
            $region69: #{custom-call.6} parent=61 // loop_exit
              _
          $region62: #{custom-call.6} parent=53 // pred_fallthru
            _
        $region54: #{custom-call.6} parent=15 // pred_fallthru
          _
        %229 = vnop
      $region16: #{custom-call.6} parent=5 // pred_fallthru
        _
      %p230 = scmp.le.s32.totalorder 1, %s8
      %p231 = scmp.lt.s32.totalorder %s8, 3
      %p232 = pnand %p230, %p231
      %p233 = pneg %p232
      // Predicated region
      $region85: #{custom-call.6} parent=5 // pred_check
        _
      $region86: #{custom-call.6} parent=5 // pred_check_branch
        %235 = sbr.rel (%p232) target = $region88
      $region87: #{custom-call.6} parent=5 // pred_region
        #allocation8 [shape = 'f32[32,128]{1,0}', space=vmem, size = 0x4000, scoped, tag = 'scratch for real Householder reflectors']
        #allocation9 [shape = 'f32[32,128]{1,0}', space=vmem, size = 0x4000, scoped, tag = 'scratch for imaginary Householder reflectors']
        %s236 = ssub.s32 %s8, 1
        %s237 = sand.u32 %s13, 1
        %s238 = sand.u32 %s13, 1
        %s239 = smul.addr %s238, 32
        %s240 = scalar_lea.vmem [#allocation0], %s239
        %s241 = sand.u32 %s13, 1
        %s242 = sand.u32 %s13, 1
        %s243 = smul.addr %s242, 32
        %s244 = scalar_lea.vmem [#allocation1], %s243
        %s245 = sand.u32 %s13, 1
        %s246 = sand.u32 %s13, 1
        %s247 = smul.addr %s246, 32
        %s248 = scalar_lea.vmem [#allocation0], %s247
        %s249 = sand.u32 %s13, 1
        %s250 = sand.u32 %s13, 1
        %s251 = smul.addr %s250, 32
        %s252 = scalar_lea.vmem [#allocation1], %s251
        %s253 = sand.u32 %s13, 1
        %s254 = sand.u32 %s13, 1
        %s255 = smul.addr %s254, 32
        %s256 = scalar_lea.vmem [#allocation2], %s255
        %s257 = sand.u32 %s13, 1
        %s258 = sand.u32 %s13, 1
        %s259 = smul.addr %s258, 32
        %s260 = scalar_lea.vmem [#allocation3], %s259
        %p261 = pneg %p65
        %p262 = pneg %p62
        %s263 = sand.u32 %s52, 1
        %s264 = sand.u32 %s52, 1
        %s265 = smul.addr %s264, 2
        %s266 = scalar_lea.vmem [#allocation5], %s265
        %p267 = pneg %p103
        %p268 = pneg %p100
        %s269 = sand.u32 %s90, 1
        %s270 = sand.u32 %s90, 1
        %s271 = smul.addr %s270, 2
        %s272 = scalar_lea.vmem [#allocation7], %s271
        %s273 = smul.u32 4, %s19
        %s274 = smul.u32 4, %s19
        %s275 = smul.u32 4, %s19
        %s276 = smul.u32 4, %s19
        %p277 = scmp.lt.s32.totalorder %s18, 0
        %s278 = ssub.s32 0, %s18
        %s279 = scalar_select %p277, %s278, %s18
        %s280 = sshrl.u32 %s279, 3
        %s281 = ssub.s32 0, %s280
        %s282 = scalar_select %p277, %s281, %s280
        %p283 = scmp.lt.s32.totalorder %s18, 0
        %s284 = ssub.s32 0, %s18
        %s285 = scalar_select %p283, %s284, %s18
        %s286 = sshrl.u32 %s285, 3
        %s287 = ssub.s32 0, %s286
        %s288 = scalar_select %p283, %s287, %s286
        %s289 = sand.u32 %s18, 7
        %s290 = scalar_lea.vmem [#allocation4], %s289
        %s291 = scalar_lea.vmem [#allocation6], %s289
        %v292 = vld [vmem:[%s240] sm:$0xff]
        %293 = vst [vmem:[%s256] sm:$0xff] %v292
        %s294 = scalar_lea.vmem %s256, 8 [#allocation2]
        %s295 = scalar_lea.vmem %s240, 8 [#allocation0]
        %v296 = vld [vmem:[%s295] sm:$0xff]
        %297 = vst [vmem:[%s294] sm:$0xff] %v296
        %s298 = scalar_lea.vmem %s256, 16 [#allocation2]
        %s299 = scalar_lea.vmem %s240, 16 [#allocation0]
        %v300 = vld [vmem:[%s299] sm:$0xff]
        %301 = vst [vmem:[%s298] sm:$0xff] %v300
        %s302 = scalar_lea.vmem %s256, 24 [#allocation2]
        %s303 = scalar_lea.vmem %s240, 24 [#allocation0]
        %v304 = vld [vmem:[%s303] sm:$0xff]
        %305 = vst [vmem:[%s302] sm:$0xff] %v304
        %v306 = vld [vmem:[%s244] sm:$0xff]
        %307 = vst [vmem:[%s260] sm:$0xff] %v306
        %s308 = scalar_lea.vmem %s260, 8 [#allocation3]
        %s309 = scalar_lea.vmem %s244, 8 [#allocation1]
        %v310 = vld [vmem:[%s309] sm:$0xff]
        %311 = vst [vmem:[%s308] sm:$0xff] %v310
        %s312 = scalar_lea.vmem %s260, 16 [#allocation3]
        %s313 = scalar_lea.vmem %s244, 16 [#allocation1]
        %v314 = vld [vmem:[%s313] sm:$0xff]
        %315 = vst [vmem:[%s312] sm:$0xff] %v314
        %s316 = scalar_lea.vmem %s260, 24 [#allocation3]
        %s317 = scalar_lea.vmem %s244, 24 [#allocation1]
        %v318 = vld [vmem:[%s317] sm:$0xff]
        %319 = vst [vmem:[%s316] sm:$0xff] %v318
        %320 = vst [vmem:[%s290] sm:$0x1] 0.0
        %321 = vst [vmem:[%s291] sm:$0x1] 0.0
        loop: start=0, step=1, limit=32
        $region89: #{custom-call.6} parent=87 // loop_pre_header
          _
        $region90: #{custom-call.6} parent=87 // loop_header
          %s323 = sphi 0, %s327
          %p324 = scmp.ge.s32.totalorder %s323, 32
        $region91: #{custom-call.6} parent=87 // loop_header_branch
          %326 = sbr.rel (%p324) target = $region95
        $region92: #{custom-call.6} parent=87 // loop_body
          %v328 = vld [vmem:[%s256] sm:$0xff]
          %v329 = vld [vmem:[%s260] sm:$0xff]
          %v330 = vlaneseq
          %v331 = vshrl.u32 %v330, 7
          %v333 = vstv %s323
          %vm334 = vcmp.gt.s32.totalorder %v331, %v333
          %v335 = vsel %vm334, %v328, 0.0
          %v336 = vsel %vm334, %v329, 0.0
          %v337 = vxor.u32 %v336, 2147483648
          %338 = xla_tuple %v335, %v336
          %339 = xla_tuple %v335, %v337
          %v340 = vmul.f32 %v335, %v335
          %v341 = vmul.f32 %v336, %v337
          %v342 = vsub.f32 %v340, %v341
          %v343 = vmul.f32 %v335, %v337
          %v344 = vmul.f32 %v336, %v335
          %v345 = vadd.f32 %v343, %v344
          %346 = xla_tuple %v342, %v345
          %s347 = scalar_lea.vmem %s256, 8 [#allocation2]
          %s348 = scalar_lea.vmem %s260, 8 [#allocation3]
          %v349 = vld [vmem:[%s347] sm:$0xff]
          %v350 = vld [vmem:[%s348] sm:$0xff]
          %v351 = vlaneseq
          %v352 = vshrl.u32 %v351, 7
          %v353 = vadd.s32 %v352, 8
          %v354 = vstv %s323
          %vm355 = vcmp.gt.s32.totalorder %v353, %v354
          %v356 = vsel %vm355, %v349, 0.0
          %v357 = vsel %vm355, %v350, 0.0
          %v358 = vxor.u32 %v357, 2147483648
          %359 = xla_tuple %v356, %v357
          %360 = xla_tuple %v356, %v358
          %v361 = vmul.f32 %v356, %v356
          %v362 = vmul.f32 %v357, %v358
          %v363 = vsub.f32 %v361, %v362
          %v364 = vmul.f32 %v356, %v358
          %v365 = vmul.f32 %v357, %v356
          %v366 = vadd.f32 %v364, %v365
          %367 = xla_tuple %v363, %v366
          %v368 = vadd.f32 %v342, %v363
          %s369 = scalar_lea.vmem %s256, 16 [#allocation2]
          %s370 = scalar_lea.vmem %s260, 16 [#allocation3]
          %v371 = vld [vmem:[%s369] sm:$0xff]
          %v372 = vld [vmem:[%s370] sm:$0xff]
          %v373 = vlaneseq
          %v374 = vshrl.u32 %v373, 7
          %v375 = vadd.s32 %v374, 16
          %v376 = vstv %s323
          %vm377 = vcmp.gt.s32.totalorder %v375, %v376
          %v378 = vsel %vm377, %v371, 0.0
          %v379 = vsel %vm377, %v372, 0.0
          %v380 = vxor.u32 %v379, 2147483648
          %381 = xla_tuple %v378, %v379
          %382 = xla_tuple %v378, %v380
          %v383 = vmul.f32 %v378, %v378
          %v384 = vmul.f32 %v379, %v380
          %v385 = vsub.f32 %v383, %v384
          %v386 = vmul.f32 %v378, %v380
          %v387 = vmul.f32 %v379, %v378
          %v388 = vadd.f32 %v386, %v387
          %389 = xla_tuple %v385, %v388
          %v390 = vadd.f32 %v368, %v385
          %s391 = scalar_lea.vmem %s256, 24 [#allocation2]
          %s392 = scalar_lea.vmem %s260, 24 [#allocation3]
          %v393 = vld [vmem:[%s391] sm:$0xff]
          %v394 = vld [vmem:[%s392] sm:$0xff]
          %v395 = vlaneseq
          %v396 = vshrl.u32 %v395, 7
          %v397 = vadd.s32 %v396, 24
          %v398 = vstv %s323
          %vm399 = vcmp.gt.s32.totalorder %v397, %v398
          %vm400 = vcmp.lt.s32.totalorder %v397, 32
          %vm401 = vmand %vm399, %vm400
          %v402 = vsel %vm401, %v393, 0.0
          %v403 = vsel %vm401, %v394, 0.0
          %v404 = vxor.u32 %v403, 2147483648
          %405 = xla_tuple %v402, %v403
          %406 = xla_tuple %v402, %v404
          %v407 = vmul.f32 %v402, %v402
          %v408 = vmul.f32 %v403, %v404
          %v409 = vsub.f32 %v407, %v408
          %v410 = vmul.f32 %v402, %v404
          %v411 = vmul.f32 %v403, %v402
          %v412 = vadd.f32 %v410, %v411
          %413 = xla_tuple %v409, %v412
          %v414 = vadd.f32 %v390, %v409
          %v415 = vrot.slane %v414, 4
          %v416 = vadd.f32 %v414, %v415
          %v417 = vrot.slane %v416, 2
          %v418 = vadd.f32 %v416, %v417
          %v419 = vrot.slane %v418, 1
          %v420 = vadd.f32 %v418, %v419
          %v421 = vrsqrt.pop %v420
          %v422 = vmul.f32 %v420, %v421
          %vm423 = vcmp.eq.f32.partialorder %v420, inf
          %v424 = vsel %vm423, %v420, %v422
          %vm425 = vcmp.eq.f32.partialorder %v420, 0.0
          %v426 = vand.u32 %v420, 2147483648
          %v427 = vsel %vm425, %v426, %v424
          %vm428 = vcmp.eq.f32.partialorder %v420, 0.0
          %s429 = sshrl.u32 %s323, 3
          %s430 = sand.u32 %s323, 7
          %s431 = smul.addr %s429, 8
          %s432 = sadd.s32 %s430, %s431
          %s433 = scalar_lea.vmem %s256, %s432 [#allocation2]
          %s434 = scalar_lea.vmem %s260, %s432 [#allocation3]
          %v435 = vld [vmem:[%s433] ss:$0 sm:$0xff]
          %v436 = vld [vmem:[%s434] ss:$0 sm:$0xff]
          %v437 = vand.u32 2147483647, %v435
          %v438 = vand.u32 2147483647, %v436
          %v439 = vmax.f32 %v437, %v438
          %v440 = vand.u32 2147483647, %v427
          %v441 = vmax.f32 %v439, %v440
          %v442 = vrcp.pop %v441
          %v443 = vmul.f32 %v437, %v442
          %v444 = vmul.f32 %v443, %v443
          %v445 = vrcp.pop %v441
          %v446 = vmul.f32 %v438, %v445
          %v447 = vmul.f32 %v446, %v446
          %v448 = vadd.f32 %v444, %v447
          %v449 = vrcp.pop %v441
          %v450 = vmul.f32 %v440, %v449
          %v451 = vmul.f32 %v450, %v450
          %v452 = vadd.f32 %v448, %v451
          %vm453 = vcmp.eq.f32.partialorder %v441, 0.0
          %v454 = vrsqrt.pop %v452
          %v455 = vmul.f32 %v452, %v454
          %vm456 = vcmp.eq.f32.partialorder %v452, inf
          %v457 = vsel %vm456, %v452, %v455
          %vm458 = vcmp.eq.f32.partialorder %v452, 0.0
          %v459 = vand.u32 %v452, 2147483648
          %v460 = vsel %vm458, %v459, %v457
          %v461 = vmul.f32 %v441, %v460
          %v462 = vsel %vm453, 0.0, %v461
          %vm463 = vcmp.lt.f32.partialorder %v435, 0.0
          %v464 = vxor.u32 %v462, 2147483648
          %v465 = vsel %vm463, %v462, %v464
          %v466 = vsub.f32 %v465, %v435
          %v467 = vrcp.pop %v465
          %v468 = vmul.f32 %v466, %v467
          %v469 = vxor.u32 %v436, 2147483648
          %v470 = vrcp.pop %v465
          %v471 = vmul.f32 %v469, %v470
          %vm472 = vcmp.eq.f32.partialorder %v436, 0.0
          %vm473 = vmand %vm428, %vm472
          %v474 = vsel %vm473, %v435, %v465
          %v475 = vsel %vm473, 0.0, %v468
          %v476 = vsel %vm473, 0.0, %v471
          %v477 = vsub.f32 %v435, %v474
          %s478 = smov %s256
          %s479 = smov %s260
          %v480 = vlaneseq
          %v481 = vshrl.u32 %v480, 7
          %v482 = vmov %v481
          %v483 = vld [vmem:[%s478] sm:$0xff]
          %v484 = vld [vmem:[%s479] sm:$0xff]
          %v486 = vstv %s323
          %vm487 = vcmp.gt.s32.totalorder %v482, %v486
          %v488 = vsel %vm487, %v483, 0.0
          %v489 = vsel %vm487, %v484, 0.0
          %490 = xla_tuple %v488, %v489
          %491 = xla_tuple %v477, %v436
          %v492 = vand.u32 2147483647, %v477
          %v493 = vand.u32 2147483647, %v436
          %vm494 = vcmp.lt.f32.partialorder %v492, %v493
          %v495 = vsel %vm494, %v477, %v436
          %v496 = vsel %vm494, %v436, %v477
          %v497 = vrcp.pop %v496
          %v498 = vmul.f32 %v495, %v497
          %v499 = vmul.f32 %v498, %v477
          %v500 = vadd.f32 %v436, %v499
          %v501 = vmul.f32 %v498, %v436
          %v502 = vadd.f32 %v477, %v501
          %v503 = vmul.f32 %v498, %v488
          %v504 = vadd.f32 %v503, %v489
          %v505 = vmul.f32 %v498, %v489
          %v506 = vadd.f32 %v505, %v488
          %v507 = vsel %vm494, %v504, %v506
          %v508 = vsel %vm494, %v500, %v502
          %v509 = vrcp.pop %v508
          %v510 = vmul.f32 %v507, %v509
          %v511 = vmul.f32 %v498, %v489
          %v512 = vsub.f32 %v511, %v488
          %v513 = vmul.f32 %v498, %v488
          %v514 = vsub.f32 %v489, %v513
          %v515 = vsel %vm494, %v512, %v514
          %v516 = vmul.f32 %v515, %v509
          %vm517 = vcmp.eq.f32.partialorder %v477, 0.0
          %vm518 = vcmp.eq.f32.partialorder %v436, 0.0
          %vm519 = vmand %vm517, %vm518
          %v520 = vand.u32 %v488, 2147483648
          %v521 = vor.u32 inf, %v520
          %v522 = vand.u32 %v489, 2147483648
          %v523 = vor.u32 inf, %v522
          %vm524 = vcmp.eq.f32.partialorder %v488, 0.0
          %v525 = vsel %vm524, nan, %v521
          %vm526 = vcmp.eq.f32.partialorder %v489, 0.0
          %v527 = vsel %vm526, nan, %v523
          %v528 = vsel %vm519, %v525, %v510
          %v529 = vsel %vm519, %v527, %v516
          %530 = xla_tuple %v528, %v529
          %v531 = vsel %vm473, 0.0, %v528
          %v532 = vsel %vm473, 0.0, %v529
          %v533 = vstv %s323
          %v534 = vlaneseq
          %v535 = vand.u32 %v534, 127
          %vm536 = vcmp.eq.s32.totalorder %v535, %v533
          %v537 = vsel %vm536, %v531, 0.0
          %v538 = vsel %vm536, %v532, 0.0
          %539 = vadd.xlane.f32.xlu0 %v537
          %v540 = vpop.xlane.xlu0 %539
          %541 = vadd.xlane.f32.xlu0 %v538
          %v542 = vpop.xlane.xlu0 %541
          %543 = vst [vmem:[#allocation8] sm:$0xff] %v540
          %544 = vst [vmem:[#allocation9] sm:$0xff] %v542
          %s545 = scalar_lea.vmem %s478, 8
          %s546 = scalar_lea.vmem %s479, 8
          %v547 = vld [vmem:[%s545] sm:$0xff]
          %v548 = vld [vmem:[%s546] sm:$0xff]
          %v549 = vadd.s32 %v482, 8
          %v550 = vstv %s323
          %vm551 = vcmp.gt.s32.totalorder %v549, %v550
          %v552 = vsel %vm551, %v547, 0.0
          %v553 = vsel %vm551, %v548, 0.0
          %554 = xla_tuple %v552, %v553
          %555 = xla_tuple %v477, %v436
          %v556 = vand.u32 2147483647, %v477
          %v557 = vand.u32 2147483647, %v436
          %vm558 = vcmp.lt.f32.partialorder %v556, %v557
          %v559 = vsel %vm558, %v477, %v436
          %v560 = vsel %vm558, %v436, %v477
          %v561 = vrcp.pop %v560
          %v562 = vmul.f32 %v559, %v561
          %v563 = vmul.f32 %v562, %v477
          %v564 = vadd.f32 %v436, %v563
          %v565 = vmul.f32 %v562, %v436
          %v566 = vadd.f32 %v477, %v565
          %v567 = vmul.f32 %v562, %v552
          %v568 = vadd.f32 %v567, %v553
          %v569 = vmul.f32 %v562, %v553
          %v570 = vadd.f32 %v569, %v552
          %v571 = vsel %vm558, %v568, %v570
          %v572 = vsel %vm558, %v564, %v566
          %v573 = vrcp.pop %v572
          %v574 = vmul.f32 %v571, %v573
          %v575 = vmul.f32 %v562, %v553
          %v576 = vsub.f32 %v575, %v552
          %v577 = vmul.f32 %v562, %v552
          %v578 = vsub.f32 %v553, %v577
          %v579 = vsel %vm558, %v576, %v578
          %v580 = vmul.f32 %v579, %v573
          %vm581 = vcmp.eq.f32.partialorder %v477, 0.0
          %vm582 = vcmp.eq.f32.partialorder %v436, 0.0
          %vm583 = vmand %vm581, %vm582
          %v584 = vand.u32 %v552, 2147483648
          %v585 = vor.u32 inf, %v584
          %v586 = vand.u32 %v553, 2147483648
          %v587 = vor.u32 inf, %v586
          %vm588 = vcmp.eq.f32.partialorder %v552, 0.0
          %v589 = vsel %vm588, nan, %v585
          %vm590 = vcmp.eq.f32.partialorder %v553, 0.0
          %v591 = vsel %vm590, nan, %v587
          %v592 = vsel %vm583, %v589, %v574
          %v593 = vsel %vm583, %v591, %v580
          %594 = xla_tuple %v592, %v593
          %v595 = vsel %vm473, 0.0, %v592
          %v596 = vsel %vm473, 0.0, %v593
          %v597 = vstv %s323
          %v598 = vlaneseq
          %v599 = vand.u32 %v598, 127
          %vm600 = vcmp.eq.s32.totalorder %v599, %v597
          %v601 = vsel %vm600, %v595, 0.0
          %v602 = vsel %vm600, %v596, 0.0
          %603 = vadd.xlane.f32.xlu0 %v601
          %v604 = vpop.xlane.xlu0 %603
          %605 = vadd.xlane.f32.xlu0 %v602
          %v606 = vpop.xlane.xlu0 %605
          %s607 = scalar_lea.vmem [#allocation8], 8
          %s608 = scalar_lea.vmem [#allocation9], 8
          %609 = vst [vmem:[%s607] sm:$0xff] %v604
          %610 = vst [vmem:[%s608] sm:$0xff] %v606
          %s611 = scalar_lea.vmem %s478, 16
          %s612 = scalar_lea.vmem %s479, 16
          %v613 = vld [vmem:[%s611] sm:$0xff]
          %v614 = vld [vmem:[%s612] sm:$0xff]
          %v615 = vadd.s32 %v482, 16
          %v616 = vstv %s323
          %vm617 = vcmp.gt.s32.totalorder %v615, %v616
          %v618 = vsel %vm617, %v613, 0.0
          %v619 = vsel %vm617, %v614, 0.0
          %620 = xla_tuple %v618, %v619
          %621 = xla_tuple %v477, %v436
          %v622 = vand.u32 2147483647, %v477
          %v623 = vand.u32 2147483647, %v436
          %vm624 = vcmp.lt.f32.partialorder %v622, %v623
          %v625 = vsel %vm624, %v477, %v436
          %v626 = vsel %vm624, %v436, %v477
          %v627 = vrcp.pop %v626
          %v628 = vmul.f32 %v625, %v627
          %v629 = vmul.f32 %v628, %v477
          %v630 = vadd.f32 %v436, %v629
          %v631 = vmul.f32 %v628, %v436
          %v632 = vadd.f32 %v477, %v631
          %v633 = vmul.f32 %v628, %v618
          %v634 = vadd.f32 %v633, %v619
          %v635 = vmul.f32 %v628, %v619
          %v636 = vadd.f32 %v635, %v618
          %v637 = vsel %vm624, %v634, %v636
          %v638 = vsel %vm624, %v630, %v632
          %v639 = vrcp.pop %v638
          %v640 = vmul.f32 %v637, %v639
          %v641 = vmul.f32 %v628, %v619
          %v642 = vsub.f32 %v641, %v618
          %v643 = vmul.f32 %v628, %v618
          %v644 = vsub.f32 %v619, %v643
          %v645 = vsel %vm624, %v642, %v644
          %v646 = vmul.f32 %v645, %v639
          %vm647 = vcmp.eq.f32.partialorder %v477, 0.0
          %vm648 = vcmp.eq.f32.partialorder %v436, 0.0
          %vm649 = vmand %vm647, %vm648
          %v650 = vand.u32 %v618, 2147483648
          %v651 = vor.u32 inf, %v650
          %v652 = vand.u32 %v619, 2147483648
          %v653 = vor.u32 inf, %v652
          %vm654 = vcmp.eq.f32.partialorder %v618, 0.0
          %v655 = vsel %vm654, nan, %v651
          %vm656 = vcmp.eq.f32.partialorder %v619, 0.0
          %v657 = vsel %vm656, nan, %v653
          %v658 = vsel %vm649, %v655, %v640
          %v659 = vsel %vm649, %v657, %v646
          %660 = xla_tuple %v658, %v659
          %v661 = vsel %vm473, 0.0, %v658
          %v662 = vsel %vm473, 0.0, %v659
          %v663 = vstv %s323
          %v664 = vlaneseq
          %v665 = vand.u32 %v664, 127
          %vm666 = vcmp.eq.s32.totalorder %v665, %v663
          %v667 = vsel %vm666, %v661, 0.0
          %v668 = vsel %vm666, %v662, 0.0
          %669 = vadd.xlane.f32.xlu0 %v667
          %v670 = vpop.xlane.xlu0 %669
          %671 = vadd.xlane.f32.xlu0 %v668
          %v672 = vpop.xlane.xlu0 %671
          %s673 = scalar_lea.vmem [#allocation8], 16
          %s674 = scalar_lea.vmem [#allocation9], 16
          %675 = vst [vmem:[%s673] sm:$0xff] %v670
          %676 = vst [vmem:[%s674] sm:$0xff] %v672
          %s677 = scalar_lea.vmem %s478, 24
          %s678 = scalar_lea.vmem %s479, 24
          %v679 = vld [vmem:[%s677] sm:$0xff]
          %v680 = vld [vmem:[%s678] sm:$0xff]
          %v681 = vadd.s32 %v482, 24
          %v682 = vstv %s323
          %vm683 = vcmp.gt.s32.totalorder %v681, %v682
          %vm684 = vcmp.lt.s32.totalorder %v681, 32
          %vm685 = vmand %vm683, %vm684
          %v686 = vsel %vm685, %v679, 0.0
          %v687 = vsel %vm685, %v680, 0.0
          %688 = xla_tuple %v686, %v687
          %689 = xla_tuple %v477, %v436
          %v690 = vand.u32 2147483647, %v477
          %v691 = vand.u32 2147483647, %v436
          %vm692 = vcmp.lt.f32.partialorder %v690, %v691
          %v693 = vsel %vm692, %v477, %v436
          %v694 = vsel %vm692, %v436, %v477
          %v695 = vrcp.pop %v694
          %v696 = vmul.f32 %v693, %v695
          %v697 = vmul.f32 %v696, %v477
          %v698 = vadd.f32 %v436, %v697
          %v699 = vmul.f32 %v696, %v436
          %v700 = vadd.f32 %v477, %v699
          %v701 = vmul.f32 %v696, %v686
          %v702 = vadd.f32 %v701, %v687
          %v703 = vmul.f32 %v696, %v687
          %v704 = vadd.f32 %v703, %v686
          %v705 = vsel %vm692, %v702, %v704
          %v706 = vsel %vm692, %v698, %v700
          %v707 = vrcp.pop %v706
          %v708 = vmul.f32 %v705, %v707
          %v709 = vmul.f32 %v696, %v687
          %v710 = vsub.f32 %v709, %v686
          %v711 = vmul.f32 %v696, %v686
          %v712 = vsub.f32 %v687, %v711
          %v713 = vsel %vm692, %v710, %v712
          %v714 = vmul.f32 %v713, %v707
          %vm715 = vcmp.eq.f32.partialorder %v477, 0.0
          %vm716 = vcmp.eq.f32.partialorder %v436, 0.0
          %vm717 = vmand %vm715, %vm716
          %v718 = vand.u32 %v686, 2147483648
          %v719 = vor.u32 inf, %v718
          %v720 = vand.u32 %v687, 2147483648
          %v721 = vor.u32 inf, %v720
          %vm722 = vcmp.eq.f32.partialorder %v686, 0.0
          %v723 = vsel %vm722, nan, %v719
          %vm724 = vcmp.eq.f32.partialorder %v687, 0.0
          %v725 = vsel %vm724, nan, %v721
          %v726 = vsel %vm717, %v723, %v708
          %v727 = vsel %vm717, %v725, %v714
          %728 = xla_tuple %v726, %v727
          %v729 = vsel %vm473, 0.0, %v726
          %v730 = vsel %vm473, 0.0, %v727
          %v731 = vstv %s323
          %v732 = vlaneseq
          %v733 = vand.u32 %v732, 127
          %vm734 = vcmp.eq.s32.totalorder %v733, %v731
          %v735 = vsel %vm734, %v729, 0.0
          %v736 = vsel %vm734, %v730, 0.0
          %737 = vadd.xlane.f32.xlu0 %v735
          %v738 = vpop.xlane.xlu0 %737
          %739 = vadd.xlane.f32.xlu0 %v736
          %v740 = vpop.xlane.xlu0 %739
          %s741 = scalar_lea.vmem [#allocation8], 24
          %s742 = scalar_lea.vmem [#allocation9], 24
          %743 = vst [vmem:[%s741] sm:$0xff] %v738
          %744 = vst [vmem:[%s742] sm:$0xff] %v740
          %s745 = scalar_lea.vmem [#allocation8], %s323
          %s746 = scalar_lea.vmem [#allocation9], %s323
          %747 = vst [vmem:[%s745] sm:$0x1] 1.0
          %748 = vst [vmem:[%s746] sm:$0x1] 0.0
          %v749 = vstv %s323
          %v750 = vlaneseq
          %v751 = vand.u32 %v750, 127
          %vm752 = vcmp.eq.s32.totalorder %v751, %v749
          %v753 = vsel %vm752, %v475, 0.0
          %v754 = vsel %vm752, %v476, 0.0
          %755 = vadd.xlane.f32.xlu0 %v753
          %v756 = vpop.xlane.xlu0 %755
          %757 = vadd.xlane.f32.xlu0 %v754
          %v758 = vpop.xlane.xlu0 %757
          %v759 = vstv %s323
          %v760 = vlaneseq
          %v761 = vand.u32 %v760, 127
          %vm762 = vcmp.eq.s32.totalorder %v761, %v759
          %v763 = vld [vmem:[%s290] ss:$0 sm:$0xff]
          %v764 = vld [vmem:[%s291] ss:$0 sm:$0xff]
          %v765 = vsel %vm762, %v756, %v763
          %v766 = vsel %vm762, %v758, %v764
          %767 = vst [vmem:[%s290] sm:$0x1] %v765
          %768 = vst [vmem:[%s291] sm:$0x1] %v766
          %s769 = smov %s256
          %s770 = smov %s260
          %s771 = smov [#allocation8]
          %s772 = smov [#allocation9]
          %v773 = vlaneseq
          %v774 = vshrl.u32 %v773, 7
          %v775 = vmov %v774
          %v777 = vld [vmem:[%s771] sm:$0xff]
          %v778 = vld [vmem:[%s772] sm:$0xff]
          %v779 = vld [vmem:[%s769] sm:$0xff]
          %v780 = vld [vmem:[%s770] sm:$0xff]
          %v781 = vxor.u32 %v778, 2147483648
          %782 = xla_tuple %v777, %v781
          %783 = xla_tuple %v779, %v780
          %v784 = vmul.f32 %v777, %v779
          %v785 = vmul.f32 %v781, %v780
          %v786 = vsub.f32 %v784, %v785
          %v787 = vmul.f32 %v777, %v780
          %v788 = vmul.f32 %v781, %v779
          %v789 = vadd.f32 %v787, %v788
          %790 = xla_tuple %v786, %v789
          %v791 = vadd.s32 %v775, 8
          %s792 = scalar_lea.vmem %s771, 8
          %s793 = scalar_lea.vmem %s772, 8
          %v794 = vld [vmem:[%s792] sm:$0xff]
          %v795 = vld [vmem:[%s793] sm:$0xff]
          %s796 = scalar_lea.vmem %s769, 8
          %s797 = scalar_lea.vmem %s770, 8
          %v798 = vld [vmem:[%s796] sm:$0xff]
          %v799 = vld [vmem:[%s797] sm:$0xff]
          %v800 = vxor.u32 %v795, 2147483648
          %801 = xla_tuple %v794, %v800
          %802 = xla_tuple %v798, %v799
          %v803 = vmul.f32 %v794, %v798
          %v804 = vmul.f32 %v800, %v799
          %v805 = vsub.f32 %v803, %v804
          %v806 = vmul.f32 %v794, %v799
          %v807 = vmul.f32 %v800, %v798
          %v808 = vadd.f32 %v806, %v807
          %809 = xla_tuple %v805, %v808
          %v810 = vadd.f32 %v786, %v805
          %v811 = vadd.f32 %v789, %v808
          %v812 = vadd.s32 %v775, 16
          %s813 = scalar_lea.vmem %s771, 16
          %s814 = scalar_lea.vmem %s772, 16
          %v815 = vld [vmem:[%s813] sm:$0xff]
          %v816 = vld [vmem:[%s814] sm:$0xff]
          %s817 = scalar_lea.vmem %s769, 16
          %s818 = scalar_lea.vmem %s770, 16
          %v819 = vld [vmem:[%s817] sm:$0xff]
          %v820 = vld [vmem:[%s818] sm:$0xff]
          %v821 = vxor.u32 %v816, 2147483648
          %822 = xla_tuple %v815, %v821
          %823 = xla_tuple %v819, %v820
          %v824 = vmul.f32 %v815, %v819
          %v825 = vmul.f32 %v821, %v820
          %v826 = vsub.f32 %v824, %v825
          %v827 = vmul.f32 %v815, %v820
          %v828 = vmul.f32 %v821, %v819
          %v829 = vadd.f32 %v827, %v828
          %830 = xla_tuple %v826, %v829
          %v831 = vadd.f32 %v810, %v826
          %v832 = vadd.f32 %v811, %v829
          %v833 = vadd.s32 %v775, 24
          %s834 = scalar_lea.vmem %s771, 24
          %s835 = scalar_lea.vmem %s772, 24
          %v836 = vld [vmem:[%s834] sm:$0xff]
          %v837 = vld [vmem:[%s835] sm:$0xff]
          %s838 = scalar_lea.vmem %s769, 24
          %s839 = scalar_lea.vmem %s770, 24
          %v840 = vld [vmem:[%s838] sm:$0xff]
          %v841 = vld [vmem:[%s839] sm:$0xff]
          %v842 = vxor.u32 %v837, 2147483648
          %843 = xla_tuple %v836, %v842
          %844 = xla_tuple %v840, %v841
          %v845 = vmul.f32 %v836, %v840
          %v846 = vmul.f32 %v842, %v841
          %v847 = vsub.f32 %v845, %v846
          %v848 = vmul.f32 %v836, %v841
          %v849 = vmul.f32 %v842, %v840
          %v850 = vadd.f32 %v848, %v849
          %851 = xla_tuple %v847, %v850
          %vm852 = vcmp.lt.s32.totalorder %v833, 32
          %v853 = vsel %vm852, %v847, 0.0
          %v854 = vsel %vm852, %v850, 0.0
          %v855 = vadd.f32 %v831, %v853
          %v856 = vadd.f32 %v832, %v854
          %v857 = vrot.slane %v855, 4
          %v858 = vadd.f32 %v855, %v857
          %v859 = vrot.slane %v858, 2
          %v860 = vadd.f32 %v858, %v859
          %v861 = vrot.slane %v860, 1
          %v862 = vadd.f32 %v860, %v861
          %v863 = vrot.slane %v856, 4
          %v864 = vadd.f32 %v856, %v863
          %v865 = vrot.slane %v864, 2
          %v866 = vadd.f32 %v864, %v865
          %v867 = vrot.slane %v866, 1
          %v868 = vadd.f32 %v866, %v867
          %s869 = smov %s769
          %s870 = smov %s770
          %s871 = smov %s771
          %s872 = smov %s772
          %v873 = vlaneseq
          %v874 = vshrl.u32 %v873, 7
          %v875 = vmov %v874
          %v876 = vxor.u32 %v758, 2147483648
          %877 = xla_tuple %v862, %v868
          %878 = xla_tuple %v756, %v876
          %v879 = vmul.f32 %v862, %v756
          %v880 = vmul.f32 %v868, %v876
          %v881 = vsub.f32 %v879, %v880
          %v882 = vmul.f32 %v862, %v876
          %v883 = vmul.f32 %v868, %v756
          %v884 = vadd.f32 %v882, %v883
          %885 = xla_tuple %v881, %v884
          %v887 = vlaneseq
          %v888 = vand.u32 %v887, 127
          %v889 = vld [vmem:[%s871] sm:$0xff]
          %v890 = vld [vmem:[%s872] sm:$0xff]
          %891 = xla_tuple %v889, %v890
          %892 = xla_tuple %v881, %v884
          %v893 = vmul.f32 %v889, %v881
          %v894 = vmul.f32 %v890, %v884
          %v895 = vsub.f32 %v893, %v894
          %v896 = vmul.f32 %v889, %v884
          %v897 = vmul.f32 %v890, %v881
          %v898 = vadd.f32 %v896, %v897
          %899 = xla_tuple %v895, %v898
          %v900 = vld [vmem:[%s869] sm:$0xff]
          %v901 = vld [vmem:[%s870] sm:$0xff]
          %v902 = vstv %s323
          %vm903 = vcmp.gt.s32.totalorder %v888, %v902
          %v904 = vsub.f32 %v900, %v895
          %v905 = vsub.f32 %v901, %v898
          %v906 = vsel %vm903, %v904, %v900
          %v907 = vsel %vm903, %v905, %v901
          %v908 = vstv %s323
          %v909 = vlaneseq
          %v910 = vand.u32 %v909, 127
          %vm911 = vcmp.eq.s32.totalorder %v910, %v908
          %v912 = vstv %s323
          %vm913 = vcmp.ge.s32.totalorder %v875, %v912
          %vm914 = vmand %vm911, %vm913
          %v915 = vsel %vm914, %v889, %v906
          %v916 = vsel %vm914, %v890, %v907
          %917 = vst [vmem:[%s869] sm:$0xff] %v915
          %918 = vst [vmem:[%s870] sm:$0xff] %v916
          %v919 = vadd.s32 %v875, 8
          %v920 = vlaneseq
          %v921 = vand.u32 %v920, 127
          %s922 = scalar_lea.vmem %s871, 8
          %s923 = scalar_lea.vmem %s872, 8
          %v924 = vld [vmem:[%s922] sm:$0xff]
          %v925 = vld [vmem:[%s923] sm:$0xff]
          %926 = xla_tuple %v924, %v925
          %927 = xla_tuple %v881, %v884
          %v928 = vmul.f32 %v924, %v881
          %v929 = vmul.f32 %v925, %v884
          %v930 = vsub.f32 %v928, %v929
          %v931 = vmul.f32 %v924, %v884
          %v932 = vmul.f32 %v925, %v881
          %v933 = vadd.f32 %v931, %v932
          %934 = xla_tuple %v930, %v933
          %s935 = scalar_lea.vmem %s869, 8
          %s936 = scalar_lea.vmem %s870, 8
          %v937 = vld [vmem:[%s935] sm:$0xff]
          %v938 = vld [vmem:[%s936] sm:$0xff]
          %v939 = vstv %s323
          %vm940 = vcmp.gt.s32.totalorder %v921, %v939
          %v941 = vsub.f32 %v937, %v930
          %v942 = vsub.f32 %v938, %v933
          %v943 = vsel %vm940, %v941, %v937
          %v944 = vsel %vm940, %v942, %v938
          %v945 = vstv %s323
          %v946 = vlaneseq
          %v947 = vand.u32 %v946, 127
          %vm948 = vcmp.eq.s32.totalorder %v947, %v945
          %v949 = vstv %s323
          %vm950 = vcmp.ge.s32.totalorder %v919, %v949
          %vm951 = vmand %vm948, %vm950
          %v952 = vsel %vm951, %v924, %v943
          %v953 = vsel %vm951, %v925, %v944
          %954 = vst [vmem:[%s935] sm:$0xff] %v952
          %955 = vst [vmem:[%s936] sm:$0xff] %v953
          %v956 = vadd.s32 %v875, 16
          %v957 = vlaneseq
          %v958 = vand.u32 %v957, 127
          %s959 = scalar_lea.vmem %s871, 16
          %s960 = scalar_lea.vmem %s872, 16
          %v961 = vld [vmem:[%s959] sm:$0xff]
          %v962 = vld [vmem:[%s960] sm:$0xff]
          %963 = xla_tuple %v961, %v962
          %964 = xla_tuple %v881, %v884
          %v965 = vmul.f32 %v961, %v881
          %v966 = vmul.f32 %v962, %v884
          %v967 = vsub.f32 %v965, %v966
          %v968 = vmul.f32 %v961, %v884
          %v969 = vmul.f32 %v962, %v881
          %v970 = vadd.f32 %v968, %v969
          %971 = xla_tuple %v967, %v970
          %s972 = scalar_lea.vmem %s869, 16
          %s973 = scalar_lea.vmem %s870, 16
          %v974 = vld [vmem:[%s972] sm:$0xff]
          %v975 = vld [vmem:[%s973] sm:$0xff]
          %v976 = vstv %s323
          %vm977 = vcmp.gt.s32.totalorder %v958, %v976
          %v978 = vsub.f32 %v974, %v967
          %v979 = vsub.f32 %v975, %v970
          %v980 = vsel %vm977, %v978, %v974
          %v981 = vsel %vm977, %v979, %v975
          %v982 = vstv %s323
          %v983 = vlaneseq
          %v984 = vand.u32 %v983, 127
          %vm985 = vcmp.eq.s32.totalorder %v984, %v982
          %v986 = vstv %s323
          %vm987 = vcmp.ge.s32.totalorder %v956, %v986
          %vm988 = vmand %vm985, %vm987
          %v989 = vsel %vm988, %v961, %v980
          %v990 = vsel %vm988, %v962, %v981
          %991 = vst [vmem:[%s972] sm:$0xff] %v989
          %992 = vst [vmem:[%s973] sm:$0xff] %v990
          %v993 = vadd.s32 %v875, 24
          %v994 = vlaneseq
          %v995 = vand.u32 %v994, 127
          %s996 = scalar_lea.vmem %s871, 24
          %s997 = scalar_lea.vmem %s872, 24
          %v998 = vld [vmem:[%s996] sm:$0xff]
          %v999 = vld [vmem:[%s997] sm:$0xff]
          %1000 = xla_tuple %v998, %v999
          %1001 = xla_tuple %v881, %v884
          %v1002 = vmul.f32 %v998, %v881
          %v1003 = vmul.f32 %v999, %v884
          %v1004 = vsub.f32 %v1002, %v1003
          %v1005 = vmul.f32 %v998, %v884
          %v1006 = vmul.f32 %v999, %v881
          %v1007 = vadd.f32 %v1005, %v1006
          %1008 = xla_tuple %v1004, %v1007
          %s1009 = scalar_lea.vmem %s869, 24
          %s1010 = scalar_lea.vmem %s870, 24
          %v1011 = vld [vmem:[%s1009] sm:$0xff]
          %v1012 = vld [vmem:[%s1010] sm:$0xff]
          %v1013 = vstv %s323
          %vm1014 = vcmp.gt.s32.totalorder %v995, %v1013
          %v1015 = vsub.f32 %v1011, %v1004
          %v1016 = vsub.f32 %v1012, %v1007
          %v1017 = vsel %vm1014, %v1015, %v1011
          %v1018 = vsel %vm1014, %v1016, %v1012
          %v1019 = vstv %s323
          %v1020 = vlaneseq
          %v1021 = vand.u32 %v1020, 127
          %vm1022 = vcmp.eq.s32.totalorder %v1021, %v1019
          %v1023 = vstv %s323
          %vm1024 = vcmp.ge.s32.totalorder %v993, %v1023
          %vm1025 = vmand %vm1022, %vm1024
          %v1026 = vsel %vm1025, %v998, %v1017
          %v1027 = vsel %vm1025, %v999, %v1018
          %1028 = vst [vmem:[%s1009] sm:$0xff] %v1026
          %1029 = vst [vmem:[%s1010] sm:$0xff] %v1027
          %s1030 = scalar_lea.vmem %s869, %s323
          %s1031 = scalar_lea.vmem %s870, %s323
          %v1032 = vld [vmem:[%s1030] ss:$0 sm:$0xff]
          %v1033 = vld [vmem:[%s1031] ss:$0 sm:$0xff]
          %v1034 = vstv %s323
          %v1035 = vlaneseq
          %v1036 = vand.u32 %v1035, 127
          %vm1037 = vcmp.eq.s32.totalorder %v1036, %v1034
          %v1038 = vsel %vm1037, %v474, %v1032
          %v1039 = vsel %vm1037, 0.0, %v1033
          %1040 = vst [vmem:[%s1030] sm:$0x1] %v1038
          %1041 = vst [vmem:[%s1031] sm:$0x1] %v1039
        $region93: #{custom-call.6} parent=87 // loop_footer
          %s327 = sadd.s32 1, %s323
        $region94: #{custom-call.6} parent=87 // loop_footer_branch
          %322 = sbr.rel target = $region90
        $region95: #{custom-call.6} parent=87 // loop_exit
          _
        %s1043 = sshllo.u32 0, 2
        %v1045 = vld [vmem:[#allocation4] sm:%s1043]
        %s1046 = sshllo.u32 0, 2
        %1047 = vst [vmem:[%s266] sm:%s1046] %v1045
        %s1049 = sshllo.u32 0, 2
        %v1051 = vld [vmem:[#allocation6] sm:%s1049]
        %s1052 = sshllo.u32 0, 2
        %1053 = vst [vmem:[%s272] sm:%s1052] %v1051
        %s1054 = sand.u32 %s13, 1
        %s1055 = sand.u32 %s13, 1
        %s1056 = smul.addr %s1055, 32
        %s1057 = scalar_lea.vmem [#allocation2], %s1056
        %s1058 = sand.u32 %s13, 1
        %s1059 = sand.u32 %s13, 1
        %s1060 = smul.addr %s1059, 32
        %s1061 = scalar_lea.vmem [#allocation3], %s1060
        %s1062 = sand.u32 %s52, 1
        %s1063 = sand.u32 %s52, 1
        %s1064 = smul.addr %s1063, 2
        %s1065 = scalar_lea.vmem [#allocation5], %s1064
        %s1066 = sand.u32 %s90, 1
        %s1067 = sand.u32 %s90, 1
        %s1068 = smul.addr %s1067, 2
        %s1069 = scalar_lea.vmem [#allocation7], %s1068
        %s1070 = smul.u32 4, %s19
        %s1071 = sadd.s32 %s20, %s1070
        %s1072 = smul.addr %s18, 4
        %s1073 = sadd.s32 %s1071, %s1072
        %s1074 = smul.addr %s1073, 8
        %s1075 = scalar_lea.vmem %s2, %s1074
        // Predicated region
        $region96: #{custom-call.6} parent=87 // pred_check
          _
        $region97: #{custom-call.6} parent=87 // pred_check_branch
          %1077 = sbr.rel (0) target = $region99
        $region98: #{custom-call.6} parent=87 // pred_region
          // Predicated region
          $region100: #{custom-call.6} parent=98 // pred_check
            _
          $region101: #{custom-call.6} parent=98 // pred_check_branch
            %1079 = sbr.rel (0) target = $region103
          $region102: #{custom-call.6} parent=98 // pred_region
            // Predicated region
            $region115: #{custom-call.6} parent=102 // pred_check
              _
            $region116: #{custom-call.6} parent=102 // pred_check_branch
              %1100 = sbr.rel (0) target = $region118
            $region117: #{custom-call.6} parent=102 // pred_region
              loop: start=0, step=1, limit=1
              $region119: #{custom-call.6} parent=117 // loop_pre_header
                _
              $region120: #{custom-call.6} parent=117 // loop_header
                %s1102 = sphi 0, %s1106
                %p1103 = scmp.ge.s32.totalorder %s1102, 1
                %s1107 = sphi %s1057, %s1057
                %s1108 = sphi %s1075, %s1075
              $region121: #{custom-call.6} parent=117 // loop_header_branch
                %1105 = sbr.rel (%p1103) target = $region125
              $region122: #{custom-call.6} parent=117 // loop_body
                %v1109 = vld [vmem:[%s1107] sm:$0xff]
                %1110 = vst [vmem:[%s1108] sm:$0xff] %v1109
                %v1111 = vld [vmem:[%s1107 + $0x8] sm:$0xff]
                %1112 = vst [vmem:[%s1108 + $0x8] sm:$0xff] %v1111
                %v1113 = vld [vmem:[%s1107 + $0x10] sm:$0xff]
                %1114 = vst [vmem:[%s1108 + $0x10] sm:$0xff] %v1113
                %v1115 = vld [vmem:[%s1107 + $0x18] sm:$0xff]
                %1116 = vst [vmem:[%s1108 + $0x18] sm:$0xff] %v1115
              $region123: #{custom-call.6} parent=117 // loop_footer
                %s1106 = sadd.s32 1, %s1102
              $region124: #{custom-call.6} parent=117 // loop_footer_branch
                %1101 = sbr.rel target = $region120
              $region125: #{custom-call.6} parent=117 // loop_exit
                _
            $region118: #{custom-call.6} parent=102 // pred_fallthru
              _
            // Predicated region
            $region126: #{custom-call.6} parent=102 // pred_check
              _
            $region127: #{custom-call.6} parent=102 // pred_check_branch
              %1118 = sbr.rel target = $region129
            $region128: #{custom-call.6} parent=102 // pred_region
              _
            $region129: #{custom-call.6} parent=102 // pred_fallthru
              _
          $region103: #{custom-call.6} parent=98 // pred_fallthru
            _
          // Predicated region
          $region104: #{custom-call.6} parent=98 // pred_check
            _
          $region105: #{custom-call.6} parent=98 // pred_check_branch
            %1081 = sbr.rel target = $region107
          $region106: #{custom-call.6} parent=98 // pred_region
            loop: start=0, step=1, limit=1
            $region108: #{custom-call.6} parent=106 // loop_pre_header
              _
            $region109: #{custom-call.6} parent=106 // loop_header
              %s1084 = sphi 0, %s1088
              %p1085 = scmp.ge.s32.totalorder %s1084, 1
              %s1089 = sphi %s1057, %s1057
              %s1090 = sphi %s1075, %s1075
            $region110: #{custom-call.6} parent=106 // loop_header_branch
              %1087 = sbr.rel (%p1085) target = $region114
            $region111: #{custom-call.6} parent=106 // loop_body
              %v1091 = vld [vmem:[%s1089] sm:$0xff]
              %1092 = vst [vmem:[%s1090] sm:$0xff] %v1091
              %v1093 = vld [vmem:[%s1089 + $0x8] sm:$0xff]
              %1094 = vst [vmem:[%s1090 + $0x8] sm:$0xff] %v1093
              %v1095 = vld [vmem:[%s1089 + $0x10] sm:$0xff]
              %1096 = vst [vmem:[%s1090 + $0x10] sm:$0xff] %v1095
              %v1097 = vld [vmem:[%s1089 + $0x18] sm:$0xff]
              %1098 = vst [vmem:[%s1090 + $0x18] sm:$0xff] %v1097
            $region112: #{custom-call.6} parent=106 // loop_footer
              %s1088 = sadd.s32 1, %s1084
            $region113: #{custom-call.6} parent=106 // loop_footer_branch
              %1083 = sbr.rel target = $region109
            $region114: #{custom-call.6} parent=106 // loop_exit
              _
          $region107: #{custom-call.6} parent=98 // pred_fallthru
            _
        $region99: #{custom-call.6} parent=87 // pred_fallthru
          _
        %1119 = vnop
        %s1120 = smul.u32 4, %s19
        %s1121 = sadd.s32 %s20, %s1120
        %s1122 = smul.addr %s18, 4
        %s1123 = sadd.s32 %s1121, %s1122
        %s1124 = smul.addr %s1123, 8
        %s1125 = scalar_lea.vmem %s3, %s1124
        // Predicated region
        $region130: #{custom-call.6} parent=87 // pred_check
          _
        $region131: #{custom-call.6} parent=87 // pred_check_branch
          %1127 = sbr.rel (0) target = $region133
        $region132: #{custom-call.6} parent=87 // pred_region
          // Predicated region
          $region134: #{custom-call.6} parent=132 // pred_check
            _
          $region135: #{custom-call.6} parent=132 // pred_check_branch
            %1129 = sbr.rel (0) target = $region137
          $region136: #{custom-call.6} parent=132 // pred_region
            // Predicated region
            $region149: #{custom-call.6} parent=136 // pred_check
              _
            $region150: #{custom-call.6} parent=136 // pred_check_branch
              %1150 = sbr.rel (0) target = $region152
            $region151: #{custom-call.6} parent=136 // pred_region
              loop: start=0, step=1, limit=1
              $region153: #{custom-call.6} parent=151 // loop_pre_header
                _
              $region154: #{custom-call.6} parent=151 // loop_header
                %s1152 = sphi 0, %s1156
                %p1153 = scmp.ge.s32.totalorder %s1152, 1
                %s1157 = sphi %s1061, %s1061
                %s1158 = sphi %s1125, %s1125
              $region155: #{custom-call.6} parent=151 // loop_header_branch
                %1155 = sbr.rel (%p1153) target = $region159
              $region156: #{custom-call.6} parent=151 // loop_body
                %v1159 = vld [vmem:[%s1157] sm:$0xff]
                %1160 = vst [vmem:[%s1158] sm:$0xff] %v1159
                %v1161 = vld [vmem:[%s1157 + $0x8] sm:$0xff]
                %1162 = vst [vmem:[%s1158 + $0x8] sm:$0xff] %v1161
                %v1163 = vld [vmem:[%s1157 + $0x10] sm:$0xff]
                %1164 = vst [vmem:[%s1158 + $0x10] sm:$0xff] %v1163
                %v1165 = vld [vmem:[%s1157 + $0x18] sm:$0xff]
                %1166 = vst [vmem:[%s1158 + $0x18] sm:$0xff] %v1165
              $region157: #{custom-call.6} parent=151 // loop_footer
                %s1156 = sadd.s32 1, %s1152
              $region158: #{custom-call.6} parent=151 // loop_footer_branch
                %1151 = sbr.rel target = $region154
              $region159: #{custom-call.6} parent=151 // loop_exit
                _
            $region152: #{custom-call.6} parent=136 // pred_fallthru
              _
            // Predicated region
            $region160: #{custom-call.6} parent=136 // pred_check
              _
            $region161: #{custom-call.6} parent=136 // pred_check_branch
              %1168 = sbr.rel target = $region163
            $region162: #{custom-call.6} parent=136 // pred_region
              _
            $region163: #{custom-call.6} parent=136 // pred_fallthru
              _
          $region137: #{custom-call.6} parent=132 // pred_fallthru
            _
          // Predicated region
          $region138: #{custom-call.6} parent=132 // pred_check
            _
          $region139: #{custom-call.6} parent=132 // pred_check_branch
            %1131 = sbr.rel target = $region141
          $region140: #{custom-call.6} parent=132 // pred_region
            loop: start=0, step=1, limit=1
            $region142: #{custom-call.6} parent=140 // loop_pre_header
              _
            $region143: #{custom-call.6} parent=140 // loop_header
              %s1134 = sphi 0, %s1138
              %p1135 = scmp.ge.s32.totalorder %s1134, 1
              %s1139 = sphi %s1061, %s1061
              %s1140 = sphi %s1125, %s1125
            $region144: #{custom-call.6} parent=140 // loop_header_branch
              %1137 = sbr.rel (%p1135) target = $region148
            $region145: #{custom-call.6} parent=140 // loop_body
              %v1141 = vld [vmem:[%s1139] sm:$0xff]
              %1142 = vst [vmem:[%s1140] sm:$0xff] %v1141
              %v1143 = vld [vmem:[%s1139 + $0x8] sm:$0xff]
              %1144 = vst [vmem:[%s1140 + $0x8] sm:$0xff] %v1143
              %v1145 = vld [vmem:[%s1139 + $0x10] sm:$0xff]
              %1146 = vst [vmem:[%s1140 + $0x10] sm:$0xff] %v1145
              %v1147 = vld [vmem:[%s1139 + $0x18] sm:$0xff]
              %1148 = vst [vmem:[%s1140 + $0x18] sm:$0xff] %v1147
            $region146: #{custom-call.6} parent=140 // loop_footer
              %s1138 = sadd.s32 1, %s1134
            $region147: #{custom-call.6} parent=140 // loop_footer_branch
              %1133 = sbr.rel target = $region143
            $region148: #{custom-call.6} parent=140 // loop_exit
              _
          $region141: #{custom-call.6} parent=132 // pred_fallthru
            _
        $region133: #{custom-call.6} parent=87 // pred_fallthru
          _
        %1169 = vnop
        // Predicated region
        $region164: #{custom-call.6} parent=87 // pred_check
          %p1170 = pneg %p62
        $region165: #{custom-call.6} parent=87 // pred_check_branch
          %1172 = sbr.rel (%p1170) target = $region167
        $region166: #{custom-call.6} parent=87 // pred_region
          %p1173 = scmp.lt.s32.totalorder %s18, 0
          %s1174 = ssub.s32 0, %s18
          %s1175 = scalar_select %p1173, %s1174, %s18
          %s1176 = sshrl.u32 %s1175, 3
          %s1177 = ssub.s32 0, %s1176
          %s1178 = scalar_select %p1173, %s1177, %s1176
          %s1179 = smul.addr %s1178, 2
          %s1180 = scalar_lea.vmem %s4, %s1179
          // Predicated region
          $region168: #{custom-call.6} parent=166 // pred_check
            _
          $region169: #{custom-call.6} parent=166 // pred_check_branch
            %1182 = sbr.rel (0) target = $region171
          $region170: #{custom-call.6} parent=166 // pred_region
            // Predicated region
            $region172: #{custom-call.6} parent=170 // pred_check
              _
            $region173: #{custom-call.6} parent=170 // pred_check_branch
              %1184 = sbr.rel target = $region175
            $region174: #{custom-call.6} parent=170 // pred_region
              // Predicated region
              $region187: #{custom-call.6} parent=174 // pred_check
                _
              $region188: #{custom-call.6} parent=174 // pred_check_branch
                %1199 = sbr.rel (0) target = $region190
              $region189: #{custom-call.6} parent=174 // pred_region
                loop: start=0, step=1, limit=1
                $region191: #{custom-call.6} parent=189 // loop_pre_header
                  _
                $region192: #{custom-call.6} parent=189 // loop_header
                  %s1202 = sphi 0, %s1206
                  %p1203 = scmp.ge.s32.totalorder %s1202, 1
                  %s1207 = sphi %s1065, %s1065
                  %s1208 = sphi %s1180, %s1180
                $region193: #{custom-call.6} parent=189 // loop_header_branch
                  %1205 = sbr.rel (%p1203) target = $region197
                $region194: #{custom-call.6} parent=189 // loop_body
                  %v1209 = vld [vmem:[%s1207] sm:$0x3]
                  %1210 = vst [vmem:[%s1208] sm:$0x3] %v1209
                $region195: #{custom-call.6} parent=189 // loop_footer
                  %s1206 = sadd.s32 1, %s1202
                $region196: #{custom-call.6} parent=189 // loop_footer_branch
                  %1201 = sbr.rel target = $region192
                $region197: #{custom-call.6} parent=189 // loop_exit
                  _
              $region190: #{custom-call.6} parent=174 // pred_fallthru
                _
            $region175: #{custom-call.6} parent=170 // pred_fallthru
              _
            // Predicated region
            $region176: #{custom-call.6} parent=170 // pred_check
              _
            $region177: #{custom-call.6} parent=170 // pred_check_branch
              %1186 = sbr.rel (0) target = $region179
            $region178: #{custom-call.6} parent=170 // pred_region
              loop: start=0, step=1, limit=1
              $region180: #{custom-call.6} parent=178 // loop_pre_header
                _
              $region181: #{custom-call.6} parent=178 // loop_header
                %s1189 = sphi 0, %s1193
                %p1190 = scmp.ge.s32.totalorder %s1189, 1
                %s1194 = sphi %s1065, %s1065
                %s1195 = sphi %s1180, %s1180
              $region182: #{custom-call.6} parent=178 // loop_header_branch
                %1192 = sbr.rel (%p1190) target = $region186
              $region183: #{custom-call.6} parent=178 // loop_body
                %v1196 = vld [vmem:[%s1194] sm:$0x3]
                %1197 = vst [vmem:[%s1195] sm:$0x3] %v1196
              $region184: #{custom-call.6} parent=178 // loop_footer
                %s1193 = sadd.s32 1, %s1189
              $region185: #{custom-call.6} parent=178 // loop_footer_branch
                %1188 = sbr.rel target = $region181
              $region186: #{custom-call.6} parent=178 // loop_exit
                _
            $region179: #{custom-call.6} parent=170 // pred_fallthru
              _
          $region171: #{custom-call.6} parent=166 // pred_fallthru
            _
          %1211 = vnop
        $region167: #{custom-call.6} parent=87 // pred_fallthru
          _
        // Predicated region
        $region198: #{custom-call.6} parent=87 // pred_check
          %p1212 = pneg %p100
        $region199: #{custom-call.6} parent=87 // pred_check_branch
          %1214 = sbr.rel (%p1212) target = $region201
        $region200: #{custom-call.6} parent=87 // pred_region
          %p1215 = scmp.lt.s32.totalorder %s18, 0
          %s1216 = ssub.s32 0, %s18
          %s1217 = scalar_select %p1215, %s1216, %s18
          %s1218 = sshrl.u32 %s1217, 3
          %s1219 = ssub.s32 0, %s1218
          %s1220 = scalar_select %p1215, %s1219, %s1218
          %s1221 = smul.addr %s1220, 2
          %s1222 = scalar_lea.vmem %s5, %s1221
          // Predicated region
          $region202: #{custom-call.6} parent=200 // pred_check
            _
          $region203: #{custom-call.6} parent=200 // pred_check_branch
            %1224 = sbr.rel (0) target = $region205
          $region204: #{custom-call.6} parent=200 // pred_region
            // Predicated region
            $region206: #{custom-call.6} parent=204 // pred_check
              _
            $region207: #{custom-call.6} parent=204 // pred_check_branch
              %1226 = sbr.rel target = $region209
            $region208: #{custom-call.6} parent=204 // pred_region
              // Predicated region
              $region221: #{custom-call.6} parent=208 // pred_check
                _
              $region222: #{custom-call.6} parent=208 // pred_check_branch
                %1241 = sbr.rel (0) target = $region224
              $region223: #{custom-call.6} parent=208 // pred_region
                loop: start=0, step=1, limit=1
                $region225: #{custom-call.6} parent=223 // loop_pre_header
                  _
                $region226: #{custom-call.6} parent=223 // loop_header
                  %s1244 = sphi 0, %s1248
                  %p1245 = scmp.ge.s32.totalorder %s1244, 1
                  %s1249 = sphi %s1069, %s1069
                  %s1250 = sphi %s1222, %s1222
                $region227: #{custom-call.6} parent=223 // loop_header_branch
                  %1247 = sbr.rel (%p1245) target = $region231
                $region228: #{custom-call.6} parent=223 // loop_body
                  %v1251 = vld [vmem:[%s1249] sm:$0x3]
                  %1252 = vst [vmem:[%s1250] sm:$0x3] %v1251
                $region229: #{custom-call.6} parent=223 // loop_footer
                  %s1248 = sadd.s32 1, %s1244
                $region230: #{custom-call.6} parent=223 // loop_footer_branch
                  %1243 = sbr.rel target = $region226
                $region231: #{custom-call.6} parent=223 // loop_exit
                  _
              $region224: #{custom-call.6} parent=208 // pred_fallthru
                _
            $region209: #{custom-call.6} parent=204 // pred_fallthru
              _
            // Predicated region
            $region210: #{custom-call.6} parent=204 // pred_check
              _
            $region211: #{custom-call.6} parent=204 // pred_check_branch
              %1228 = sbr.rel (0) target = $region213
            $region212: #{custom-call.6} parent=204 // pred_region
              loop: start=0, step=1, limit=1
              $region214: #{custom-call.6} parent=212 // loop_pre_header
                _
              $region215: #{custom-call.6} parent=212 // loop_header
                %s1231 = sphi 0, %s1235
                %p1232 = scmp.ge.s32.totalorder %s1231, 1
                %s1236 = sphi %s1069, %s1069
                %s1237 = sphi %s1222, %s1222
              $region216: #{custom-call.6} parent=212 // loop_header_branch
                %1234 = sbr.rel (%p1232) target = $region220
              $region217: #{custom-call.6} parent=212 // loop_body
                %v1238 = vld [vmem:[%s1236] sm:$0x3]
                %1239 = vst [vmem:[%s1237] sm:$0x3] %v1238
              $region218: #{custom-call.6} parent=212 // loop_footer
                %s1235 = sadd.s32 1, %s1231
              $region219: #{custom-call.6} parent=212 // loop_footer_branch
                %1230 = sbr.rel target = $region215
              $region220: #{custom-call.6} parent=212 // loop_exit
                _
            $region213: #{custom-call.6} parent=204 // pred_fallthru
              _
          $region205: #{custom-call.6} parent=200 // pred_fallthru
            _
          %1253 = vnop
        $region201: #{custom-call.6} parent=87 // pred_fallthru
          _
      $region88: #{custom-call.6} parent=5 // pred_fallthru
        _
      %p1254 = scmp.le.s32.totalorder 2, %s8
      // Predicated region
      $region232: #{custom-call.6} parent=5 // pred_check
        %p1255 = pneg %p1254
      $region233: #{custom-call.6} parent=5 // pred_check_branch
        %1257 = sbr.rel (%p1255) target = $region235
      $region234: #{custom-call.6} parent=5 // pred_region
        %s1258 = ssub.s32 %s8, 2
        %s1259 = sand.u32 %s14, 1
        %s1260 = sand.u32 %s14, 1
        %s1261 = smul.addr %s1260, 32
        %s1262 = scalar_lea.vmem [#allocation2], %s1261
        %s1263 = sand.u32 %s14, 1
        %s1264 = sand.u32 %s14, 1
        %s1265 = smul.addr %s1264, 32
        %s1266 = scalar_lea.vmem [#allocation3], %s1265
        // Predicated region
        $region236: #{custom-call.6} parent=234 // pred_check
          %p1267 = pneg %p68
        $region237: #{custom-call.6} parent=234 // pred_check_branch
          %1269 = sbr.rel (%p1267) target = $region239
        $region238: #{custom-call.6} parent=234 // pred_region
          %s1270 = sand.u32 %s53, 1
          %s1271 = sand.u32 %s53, 1
          %s1272 = smul.addr %s1271, 2
          %s1273 = scalar_lea.vmem [#allocation5], %s1272
        $region239: #{custom-call.6} parent=234 // pred_fallthru
          _
        // Predicated region
        $region240: #{custom-call.6} parent=234 // pred_check
          %p1274 = pneg %p106
        $region241: #{custom-call.6} parent=234 // pred_check_branch
          %1276 = sbr.rel (%p1274) target = $region243
        $region242: #{custom-call.6} parent=234 // pred_region
          %s1277 = sand.u32 %s91, 1
          %s1278 = sand.u32 %s91, 1
          %s1279 = smul.addr %s1278, 2
          %s1280 = scalar_lea.vmem [#allocation7], %s1279
        $region243: #{custom-call.6} parent=234 // pred_fallthru
          _
      $region235: #{custom-call.6} parent=5 // pred_fallthru
        _
    $region6: #{custom-call.6} parent=1 // loop_footer
      %s12 = sadd.s32 1, %s8
    $region7: #{custom-call.6} parent=1 // loop_footer_branch
      %7 = sbr.rel target = $region3
    $region8: #{custom-call.6} parent=1 // loop_exit
      _

// kernel: custom-call.8
$region0: #{custom-call.8}
  %s0 = inlined_call_operand.vmem [shape: f32[2,32,32], index: 0, kind: input, shape index: {}]
  %s1 = inlined_call_operand.vmem [shape: f32[2,32,32], index: 1, kind: input, shape index: {}]
  %s2 = inlined_call_operand.vmem [shape: f32[2,32,32], index: 2, kind: output, shape index: {0}]
  %s3 = inlined_call_operand.vmem [shape: f32[2,32,32], index: 3, kind: output, shape index: {1}]
  %4 = xla_tuple %s2, %s3
  $region1: #{custom-call.8} parent=0
    #allocation0 [shape = 'u8[32768]{0}', space=vmem, size = 0x8000, scoped, tag = 'operand span for operand 0']
    #allocation1 [shape = 'u8[32768]{0}', space=vmem, size = 0x8000, scoped, tag = 'operand span for operand 1']
    #allocation2 [shape = 'u8[32768]{0}', space=vmem, size = 0x8000, scoped, tag = 'operand span for operand 2']
    #allocation3 [shape = 'u8[32768]{0}', space=vmem, size = 0x8000, scoped, tag = 'operand span for operand 3']
    loop: start=0, step=1, limit=4
    $region2: #{custom-call.8} parent=1 // loop_pre_header
      _
    $region3: #{custom-call.8} parent=1 // loop_header
      %s6 = sphi 0, %s10
      %p7 = scmp.ge.s32.totalorder %s6, 4
    $region4: #{custom-call.8} parent=1 // loop_header_branch
      %9 = sbr.rel (%p7) target = $region8
    $region5: #{custom-call.8} parent=1 // loop_body
      %s11 = ssub.s32 %s6, 1
      %s12 = ssub.s32 %s6, 2
      %s13 = sadd.s32 %s6, 1
      %p14 = scmp.le.s32.totalorder 1, %s6
      %p15 = scmp.lt.s32.totalorder %s6, 3
      %p16 = pnand %p14, %p15
      %p17 = pneg %p16
      // Predicated region
      $region9: #{custom-call.8} parent=5 // pred_check
        _
      $region10: #{custom-call.8} parent=5 // pred_check_branch
        %19 = sbr.rel (%p16) target = $region12
      $region11: #{custom-call.8} parent=5 // pred_region
        %s20 = ssub.s32 %s6, 1
      $region12: #{custom-call.8} parent=5 // pred_fallthru
        _
      %p21 = scmp.lt.s32.totalorder %s6, 2
      // Predicated region
      $region13: #{custom-call.8} parent=5 // pred_check
        %p22 = pneg %p21
      $region14: #{custom-call.8} parent=5 // pred_check_branch
        %24 = sbr.rel (%p22) target = $region16
      $region15: #{custom-call.8} parent=5 // pred_region
        %s25 = sand.u32 %s6, 1
        %s26 = sand.u32 %s6, 1
        %s27 = smul.addr %s26, 32
        %s28 = scalar_lea.vmem [#allocation0], %s27
        %s29 = smul.addr %s6, 32
        %s30 = scalar_lea.vmem %s0, %s29
        // Predicated region
        $region17: #{custom-call.8} parent=15 // pred_check
          _
        $region18: #{custom-call.8} parent=15 // pred_check_branch
          %32 = sbr.rel (0) target = $region20
        $region19: #{custom-call.8} parent=15 // pred_region
          // Predicated region
          $region21: #{custom-call.8} parent=19 // pred_check
            _
          $region22: #{custom-call.8} parent=19 // pred_check_branch
            %34 = sbr.rel (0) target = $region24
          $region23: #{custom-call.8} parent=19 // pred_region
            loop: start=0, step=1, limit=1
            $region25: #{custom-call.8} parent=23 // loop_pre_header
              _
            $region26: #{custom-call.8} parent=23 // loop_header
              %s36 = sphi 0, %s40
              %p37 = scmp.ge.s32.totalorder %s36, 1
              %s41 = sphi %s30, %s30
              %s42 = sphi %s28, %s28
            $region27: #{custom-call.8} parent=23 // loop_header_branch
              %39 = sbr.rel (%p37) target = $region31
            $region28: #{custom-call.8} parent=23 // loop_body
              %v43 = vld [vmem:[%s41] sm:$0xff]
              %44 = vst [vmem:[%s42] sm:$0xff] %v43
              %v45 = vld [vmem:[%s41 + $0x8] sm:$0xff]
              %46 = vst [vmem:[%s42 + $0x8] sm:$0xff] %v45
              %v47 = vld [vmem:[%s41 + $0x10] sm:$0xff]
              %48 = vst [vmem:[%s42 + $0x10] sm:$0xff] %v47
              %v49 = vld [vmem:[%s41 + $0x18] sm:$0xff]
              %50 = vst [vmem:[%s42 + $0x18] sm:$0xff] %v49
            $region29: #{custom-call.8} parent=23 // loop_footer
              %s40 = sadd.s32 1, %s36
            $region30: #{custom-call.8} parent=23 // loop_footer_branch
              %35 = sbr.rel target = $region26
            $region31: #{custom-call.8} parent=23 // loop_exit
              _
          $region24: #{custom-call.8} parent=19 // pred_fallthru
            _
          // Predicated region
          $region32: #{custom-call.8} parent=19 // pred_check
            _
          $region33: #{custom-call.8} parent=19 // pred_check_branch
            %52 = sbr.rel target = $region35
          $region34: #{custom-call.8} parent=19 // pred_region
            _
          $region35: #{custom-call.8} parent=19 // pred_fallthru
            _
        $region20: #{custom-call.8} parent=15 // pred_fallthru
          _
        %53 = vnop
        %s54 = sand.u32 %s6, 1
        %s55 = sand.u32 %s6, 1
        %s56 = smul.addr %s55, 32
        %s57 = scalar_lea.vmem [#allocation1], %s56
        %s58 = smul.addr %s6, 32
        %s59 = scalar_lea.vmem %s1, %s58
        // Predicated region
        $region36: #{custom-call.8} parent=15 // pred_check
          _
        $region37: #{custom-call.8} parent=15 // pred_check_branch
          %61 = sbr.rel (0) target = $region39
        $region38: #{custom-call.8} parent=15 // pred_region
          // Predicated region
          $region40: #{custom-call.8} parent=38 // pred_check
            _
          $region41: #{custom-call.8} parent=38 // pred_check_branch
            %63 = sbr.rel (0) target = $region43
          $region42: #{custom-call.8} parent=38 // pred_region
            loop: start=0, step=1, limit=1
            $region44: #{custom-call.8} parent=42 // loop_pre_header
              _
            $region45: #{custom-call.8} parent=42 // loop_header
              %s65 = sphi 0, %s69
              %p66 = scmp.ge.s32.totalorder %s65, 1
              %s70 = sphi %s59, %s59
              %s71 = sphi %s57, %s57
            $region46: #{custom-call.8} parent=42 // loop_header_branch
              %68 = sbr.rel (%p66) target = $region50
            $region47: #{custom-call.8} parent=42 // loop_body
              %v72 = vld [vmem:[%s70] sm:$0xff]
              %73 = vst [vmem:[%s71] sm:$0xff] %v72
              %v74 = vld [vmem:[%s70 + $0x8] sm:$0xff]
              %75 = vst [vmem:[%s71 + $0x8] sm:$0xff] %v74
              %v76 = vld [vmem:[%s70 + $0x10] sm:$0xff]
              %77 = vst [vmem:[%s71 + $0x10] sm:$0xff] %v76
              %v78 = vld [vmem:[%s70 + $0x18] sm:$0xff]
              %79 = vst [vmem:[%s71 + $0x18] sm:$0xff] %v78
            $region48: #{custom-call.8} parent=42 // loop_footer
              %s69 = sadd.s32 1, %s65
            $region49: #{custom-call.8} parent=42 // loop_footer_branch
              %64 = sbr.rel target = $region45
            $region50: #{custom-call.8} parent=42 // loop_exit
              _
          $region43: #{custom-call.8} parent=38 // pred_fallthru
            _
          // Predicated region
          $region51: #{custom-call.8} parent=38 // pred_check
            _
          $region52: #{custom-call.8} parent=38 // pred_check_branch
            %81 = sbr.rel target = $region54
          $region53: #{custom-call.8} parent=38 // pred_region
            _
          $region54: #{custom-call.8} parent=38 // pred_fallthru
            _
        $region39: #{custom-call.8} parent=15 // pred_fallthru
          _
        %82 = vnop
      $region16: #{custom-call.8} parent=5 // pred_fallthru
        _
      %p83 = scmp.le.s32.totalorder 1, %s6
      %p84 = scmp.lt.s32.totalorder %s6, 3
      %p85 = pnand %p83, %p84
      %p86 = pneg %p85
      // Predicated region
      $region55: #{custom-call.8} parent=5 // pred_check
        _
      $region56: #{custom-call.8} parent=5 // pred_check_branch
        %88 = sbr.rel (%p85) target = $region58
      $region57: #{custom-call.8} parent=5 // pred_region
        %s89 = ssub.s32 %s6, 1
        %s90 = sand.u32 %s11, 1
        %s91 = sand.u32 %s11, 1
        %s92 = smul.addr %s91, 32
        %s93 = scalar_lea.vmem [#allocation0], %s92
        %s94 = sand.u32 %s11, 1
        %s95 = sand.u32 %s11, 1
        %s96 = smul.addr %s95, 32
        %s97 = scalar_lea.vmem [#allocation1], %s96
        %s98 = sand.u32 %s11, 1
        %s99 = sand.u32 %s11, 1
        %s100 = smul.addr %s99, 32
        %s101 = scalar_lea.vmem [#allocation0], %s100
        %s102 = sand.u32 %s11, 1
        %s103 = sand.u32 %s11, 1
        %s104 = smul.addr %s103, 32
        %s105 = scalar_lea.vmem [#allocation1], %s104
        %s106 = sand.u32 %s11, 1
        %s107 = sand.u32 %s11, 1
        %s108 = smul.addr %s107, 32
        %s109 = scalar_lea.vmem [#allocation2], %s108
        %s110 = sand.u32 %s11, 1
        %s111 = sand.u32 %s11, 1
        %s112 = smul.addr %s111, 32
        %s113 = scalar_lea.vmem [#allocation3], %s112
        %v114 = vlaneseq
        %v115 = vand.u32 %v114, 127
        %v116 = vlaneseq
        %v117 = vshrl.u32 %v116, 7
        %vm119 = vcmp.eq.s32.totalorder %v115, %v117
        %v120 = vld [vmem:[%s93] sm:$0xff]
        %v121 = vld [vmem:[%s97] sm:$0xff]
        %v122 = vlaneseq
        %v123 = vand.u32 %v122, 127
        %vm124 = vcmp.eq.s32.totalorder %v123, 0
        %v125 = vsel %vm124, %v120, 1.0
        %v126 = vsel %vm124, %v121, 0.0
        %v127 = vsel %vm119, %v125, 0.0
        %v128 = vsel %vm119, %v126, 0.0
        %v129 = vlaneseq
        %v130 = vand.u32 %v129, 127
        %v131 = vlaneseq
        %v132 = vshrl.u32 %v131, 7
        %v133 = vadd.s32 %v132, 8
        %vm134 = vcmp.eq.s32.totalorder %v130, %v133
        %v135 = vsel %vm134, 1.0, 0.0
        %v136 = vlaneseq
        %v137 = vand.u32 %v136, 127
        %v138 = vlaneseq
        %v139 = vshrl.u32 %v138, 7
        %v140 = vadd.s32 %v139, 16
        %vm141 = vcmp.eq.s32.totalorder %v137, %v140
        %v142 = vsel %vm141, 1.0, 0.0
        %v143 = vlaneseq
        %v144 = vand.u32 %v143, 127
        %v145 = vlaneseq
        %v146 = vshrl.u32 %v145, 7
        %v147 = vadd.s32 %v146, 24
        %vm148 = vcmp.eq.s32.totalorder %v144, %v147
        %v149 = vsel %vm148, 1.0, 0.0
        %s150 = scalar_lea.vmem %s93, 1 [#allocation0]
        %s151 = scalar_lea.vmem %s97, 1 [#allocation1]
        %v152 = vld [vmem:[%s150] ss:$0 sm:$0xff]
        %v153 = vld [vmem:[%s151] ss:$0 sm:$0xff]
        %vm154 = vcmask 261120
        %v155 = vsel %vm154, %v152, 0.0
        %v156 = vsel %vm154, %v153, 0.0
        %v157 = vlaneseq
        %v158 = vand.u32 %v157, 127
        %vm159 = vcmp.eq.s32.totalorder %v158, 1
        %160 = xla_tuple %v155, %v156
        %161 = xla_tuple %v127, %v128
        %v162 = vmul.f32 %v155, %v127
        %v163 = vmul.f32 %v156, %v128
        %v164 = vsub.f32 %v162, %v163
        %v165 = vmul.f32 %v155, %v128
        %v166 = vmul.f32 %v156, %v127
        %v167 = vadd.f32 %v165, %v166
        %168 = xla_tuple %v164, %v167
        %169 = vadd.xlane.f32.xlu0 %v164
        %v170 = vpop.xlane.xlu0 %169
        %171 = vadd.xlane.f32.xlu0 %v167
        %v172 = vpop.xlane.xlu0 %171
        %v173 = vsel %vm159, %v170, %v127
        %v174 = vsel %vm159, %v172, %v128
        %s175 = scalar_lea.vmem %s93, 2 [#allocation0]
        %s176 = scalar_lea.vmem %s97, 2 [#allocation1]
        %v177 = vld [vmem:[%s175] ss:$0 sm:$0xff]
        %v178 = vld [vmem:[%s176] ss:$0 sm:$0xff]
        %vm179 = vcmask 261120
        %v180 = vsel %vm179, %v177, 0.0
        %v181 = vsel %vm179, %v178, 0.0
        %v182 = vlaneseq
        %v183 = vand.u32 %v182, 127
        %vm184 = vcmp.eq.s32.totalorder %v183, 2
        %185 = xla_tuple %v180, %v181
        %186 = xla_tuple %v173, %v174
        %v187 = vmul.f32 %v180, %v173
        %v188 = vmul.f32 %v181, %v174
        %v189 = vsub.f32 %v187, %v188
        %v190 = vmul.f32 %v180, %v174
        %v191 = vmul.f32 %v181, %v173
        %v192 = vadd.f32 %v190, %v191
        %193 = xla_tuple %v189, %v192
        %194 = vadd.xlane.f32.xlu0 %v189
        %v195 = vpop.xlane.xlu0 %194
        %196 = vadd.xlane.f32.xlu0 %v192
        %v197 = vpop.xlane.xlu0 %196
        %v198 = vsel %vm184, %v195, %v173
        %v199 = vsel %vm184, %v197, %v174
        %s200 = scalar_lea.vmem %s93, 3 [#allocation0]
        %s201 = scalar_lea.vmem %s97, 3 [#allocation1]
        %v202 = vld [vmem:[%s200] ss:$0 sm:$0xff]
        %v203 = vld [vmem:[%s201] ss:$0 sm:$0xff]
        %vm204 = vcmask 261120
        %v205 = vsel %vm204, %v202, 0.0
        %v206 = vsel %vm204, %v203, 0.0
        %v207 = vlaneseq
        %v208 = vand.u32 %v207, 127
        %vm209 = vcmp.eq.s32.totalorder %v208, 3
        %210 = xla_tuple %v205, %v206
        %211 = xla_tuple %v198, %v199
        %v212 = vmul.f32 %v205, %v198
        %v213 = vmul.f32 %v206, %v199
        %v214 = vsub.f32 %v212, %v213
        %v215 = vmul.f32 %v205, %v199
        %v216 = vmul.f32 %v206, %v198
        %v217 = vadd.f32 %v215, %v216
        %218 = xla_tuple %v214, %v217
        %219 = vadd.xlane.f32.xlu0 %v214
        %v220 = vpop.xlane.xlu0 %219
        %221 = vadd.xlane.f32.xlu0 %v217
        %v222 = vpop.xlane.xlu0 %221
        %v223 = vsel %vm209, %v220, %v198
        %v224 = vsel %vm209, %v222, %v199
        %s225 = scalar_lea.vmem %s93, 4 [#allocation0]
        %s226 = scalar_lea.vmem %s97, 4 [#allocation1]
        %v227 = vld [vmem:[%s225] ss:$0 sm:$0xff]
        %v228 = vld [vmem:[%s226] ss:$0 sm:$0xff]
        %vm229 = vcmask 261120
        %v230 = vsel %vm229, %v227, 0.0
        %v231 = vsel %vm229, %v228, 0.0
        %v232 = vlaneseq
        %v233 = vand.u32 %v232, 127
        %vm234 = vcmp.eq.s32.totalorder %v233, 4
        %235 = xla_tuple %v230, %v231
        %236 = xla_tuple %v223, %v224
        %v237 = vmul.f32 %v230, %v223
        %v238 = vmul.f32 %v231, %v224
        %v239 = vsub.f32 %v237, %v238
        %v240 = vmul.f32 %v230, %v224
        %v241 = vmul.f32 %v231, %v223
        %v242 = vadd.f32 %v240, %v241
        %243 = xla_tuple %v239, %v242
        %244 = vadd.xlane.f32.xlu0 %v239
        %v245 = vpop.xlane.xlu0 %244
        %246 = vadd.xlane.f32.xlu0 %v242
        %v247 = vpop.xlane.xlu0 %246
        %v248 = vsel %vm234, %v245, %v223
        %v249 = vsel %vm234, %v247, %v224
        %s250 = scalar_lea.vmem %s93, 5 [#allocation0]
        %s251 = scalar_lea.vmem %s97, 5 [#allocation1]
        %v252 = vld [vmem:[%s250] ss:$0 sm:$0xff]
        %v253 = vld [vmem:[%s251] ss:$0 sm:$0xff]
        %vm254 = vcmask 261120
        %v255 = vsel %vm254, %v252, 0.0
        %v256 = vsel %vm254, %v253, 0.0
        %v257 = vlaneseq
        %v258 = vand.u32 %v257, 127
        %vm259 = vcmp.eq.s32.totalorder %v258, 5
        %260 = xla_tuple %v255, %v256
        %261 = xla_tuple %v248, %v249
        %v262 = vmul.f32 %v255, %v248
        %v263 = vmul.f32 %v256, %v249
        %v264 = vsub.f32 %v262, %v263
        %v265 = vmul.f32 %v255, %v249
        %v266 = vmul.f32 %v256, %v248
        %v267 = vadd.f32 %v265, %v266
        %268 = xla_tuple %v264, %v267
        %269 = vadd.xlane.f32.xlu0 %v264
        %v270 = vpop.xlane.xlu0 %269
        %271 = vadd.xlane.f32.xlu0 %v267
        %v272 = vpop.xlane.xlu0 %271
        %v273 = vsel %vm259, %v270, %v248
        %v274 = vsel %vm259, %v272, %v249
        %s275 = scalar_lea.vmem %s93, 6 [#allocation0]
        %s276 = scalar_lea.vmem %s97, 6 [#allocation1]
        %v277 = vld [vmem:[%s275] ss:$0 sm:$0xff]
        %v278 = vld [vmem:[%s276] ss:$0 sm:$0xff]
        %vm279 = vcmask 261120
        %v280 = vsel %vm279, %v277, 0.0
        %v281 = vsel %vm279, %v278, 0.0
        %v282 = vlaneseq
        %v283 = vand.u32 %v282, 127
        %vm284 = vcmp.eq.s32.totalorder %v283, 6
        %285 = xla_tuple %v280, %v281
        %286 = xla_tuple %v273, %v274
        %v287 = vmul.f32 %v280, %v273
        %v288 = vmul.f32 %v281, %v274
        %v289 = vsub.f32 %v287, %v288
        %v290 = vmul.f32 %v280, %v274
        %v291 = vmul.f32 %v281, %v273
        %v292 = vadd.f32 %v290, %v291
        %293 = xla_tuple %v289, %v292
        %294 = vadd.xlane.f32.xlu0 %v289
        %v295 = vpop.xlane.xlu0 %294
        %296 = vadd.xlane.f32.xlu0 %v292
        %v297 = vpop.xlane.xlu0 %296
        %v298 = vsel %vm284, %v295, %v273
        %v299 = vsel %vm284, %v297, %v274
        %s300 = scalar_lea.vmem %s93, 7 [#allocation0]
        %s301 = scalar_lea.vmem %s97, 7 [#allocation1]
        %v302 = vld [vmem:[%s300] ss:$0 sm:$0xff]
        %v303 = vld [vmem:[%s301] ss:$0 sm:$0xff]
        %vm304 = vcmask 261120
        %v305 = vsel %vm304, %v302, 0.0
        %v306 = vsel %vm304, %v303, 0.0
        %v307 = vlaneseq
        %v308 = vand.u32 %v307, 127
        %vm309 = vcmp.eq.s32.totalorder %v308, 7
        %310 = xla_tuple %v305, %v306
        %311 = xla_tuple %v298, %v299
        %v312 = vmul.f32 %v305, %v298
        %v313 = vmul.f32 %v306, %v299
        %v314 = vsub.f32 %v312, %v313
        %v315 = vmul.f32 %v305, %v299
        %v316 = vmul.f32 %v306, %v298
        %v317 = vadd.f32 %v315, %v316
        %318 = xla_tuple %v314, %v317
        %319 = vadd.xlane.f32.xlu0 %v314
        %v320 = vpop.xlane.xlu0 %319
        %321 = vadd.xlane.f32.xlu0 %v317
        %v322 = vpop.xlane.xlu0 %321
        %v323 = vsel %vm309, %v320, %v298
        %v324 = vsel %vm309, %v322, %v299
        %s325 = scalar_lea.vmem %s93, 8 [#allocation0]
        %s326 = scalar_lea.vmem %s97, 8 [#allocation1]
        %v327 = vld [vmem:[%s325] ss:$0 sm:$0xff]
        %v328 = vld [vmem:[%s326] ss:$0 sm:$0xff]
        %vm329 = vcmask 261120
        %v330 = vsel %vm329, %v327, 0.0
        %v331 = vsel %vm329, %v328, 0.0
        %v332 = vlaneseq
        %v333 = vand.u32 %v332, 127
        %vm334 = vcmp.eq.s32.totalorder %v333, 8
        %335 = xla_tuple %v330, %v331
        %336 = xla_tuple %v323, %v324
        %v337 = vmul.f32 %v330, %v323
        %v338 = vmul.f32 %v331, %v324
        %v339 = vsub.f32 %v337, %v338
        %v340 = vmul.f32 %v330, %v324
        %v341 = vmul.f32 %v331, %v323
        %v342 = vadd.f32 %v340, %v341
        %343 = xla_tuple %v339, %v342
        %344 = vadd.xlane.f32.xlu0 %v339
        %v345 = vpop.xlane.xlu0 %344
        %346 = vadd.xlane.f32.xlu0 %v342
        %v347 = vpop.xlane.xlu0 %346
        %v348 = vsel %vm334, %v345, %v323
        %v349 = vsel %vm334, %v347, %v324
        %350 = xla_tuple %v330, %v331
        %351 = xla_tuple %v135, 0.0
        %v352 = vmul.f32 %v330, %v135
        %v353 = vmul.f32 %v331, 0.0
        %v354 = vsub.f32 %v352, %v353
        %v355 = vmul.f32 %v330, 0.0
        %v356 = vmul.f32 %v331, %v135
        %v357 = vadd.f32 %v355, %v356
        %358 = xla_tuple %v354, %v357
        %359 = vadd.xlane.f32.xlu0 %v354
        %v360 = vpop.xlane.xlu0 %359
        %361 = vadd.xlane.f32.xlu0 %v357
        %v362 = vpop.xlane.xlu0 %361
        %v363 = vsel %vm334, %v360, %v135
        %v364 = vsel %vm334, %v362, 0.0
        %s365 = scalar_lea.vmem %s93, 9 [#allocation0]
        %s366 = scalar_lea.vmem %s97, 9 [#allocation1]
        %v367 = vld [vmem:[%s365] ss:$0 sm:$0xff]
        %v368 = vld [vmem:[%s366] ss:$0 sm:$0xff]
        %vm369 = vcmask 261120
        %v370 = vsel %vm369, %v367, 0.0
        %v371 = vsel %vm369, %v368, 0.0
        %v372 = vlaneseq
        %v373 = vand.u32 %v372, 127
        %vm374 = vcmp.eq.s32.totalorder %v373, 9
        %375 = xla_tuple %v370, %v371
        %376 = xla_tuple %v348, %v349
        %v377 = vmul.f32 %v370, %v348
        %v378 = vmul.f32 %v371, %v349
        %v379 = vsub.f32 %v377, %v378
        %v380 = vmul.f32 %v370, %v349
        %v381 = vmul.f32 %v371, %v348
        %v382 = vadd.f32 %v380, %v381
        %383 = xla_tuple %v379, %v382
        %384 = vadd.xlane.f32.xlu0 %v379
        %v385 = vpop.xlane.xlu0 %384
        %386 = vadd.xlane.f32.xlu0 %v382
        %v387 = vpop.xlane.xlu0 %386
        %v388 = vsel %vm374, %v385, %v348
        %v389 = vsel %vm374, %v387, %v349
        %390 = xla_tuple %v370, %v371
        %391 = xla_tuple %v363, %v364
        %v392 = vmul.f32 %v370, %v363
        %v393 = vmul.f32 %v371, %v364
        %v394 = vsub.f32 %v392, %v393
        %v395 = vmul.f32 %v370, %v364
        %v396 = vmul.f32 %v371, %v363
        %v397 = vadd.f32 %v395, %v396
        %398 = xla_tuple %v394, %v397
        %399 = vadd.xlane.f32.xlu0 %v394
        %v400 = vpop.xlane.xlu0 %399
        %401 = vadd.xlane.f32.xlu0 %v397
        %v402 = vpop.xlane.xlu0 %401
        %v403 = vsel %vm374, %v400, %v363
        %v404 = vsel %vm374, %v402, %v364
        %s405 = scalar_lea.vmem %s93, 10 [#allocation0]
        %s406 = scalar_lea.vmem %s97, 10 [#allocation1]
        %v407 = vld [vmem:[%s405] ss:$0 sm:$0xff]
        %v408 = vld [vmem:[%s406] ss:$0 sm:$0xff]
        %vm409 = vcmask 261120
        %v410 = vsel %vm409, %v407, 0.0
        %v411 = vsel %vm409, %v408, 0.0
        %v412 = vlaneseq
        %v413 = vand.u32 %v412, 127
        %vm414 = vcmp.eq.s32.totalorder %v413, 10
        %415 = xla_tuple %v410, %v411
        %416 = xla_tuple %v388, %v389
        %v417 = vmul.f32 %v410, %v388
        %v418 = vmul.f32 %v411, %v389
        %v419 = vsub.f32 %v417, %v418
        %v420 = vmul.f32 %v410, %v389
        %v421 = vmul.f32 %v411, %v388
        %v422 = vadd.f32 %v420, %v421
        %423 = xla_tuple %v419, %v422
        %424 = vadd.xlane.f32.xlu0 %v419
        %v425 = vpop.xlane.xlu0 %424
        %426 = vadd.xlane.f32.xlu0 %v422
        %v427 = vpop.xlane.xlu0 %426
        %v428 = vsel %vm414, %v425, %v388
        %v429 = vsel %vm414, %v427, %v389
        %430 = xla_tuple %v410, %v411
        %431 = xla_tuple %v403, %v404
        %v432 = vmul.f32 %v410, %v403
        %v433 = vmul.f32 %v411, %v404
        %v434 = vsub.f32 %v432, %v433
        %v435 = vmul.f32 %v410, %v404
        %v436 = vmul.f32 %v411, %v403
        %v437 = vadd.f32 %v435, %v436
        %438 = xla_tuple %v434, %v437
        %439 = vadd.xlane.f32.xlu0 %v434
        %v440 = vpop.xlane.xlu0 %439
        %441 = vadd.xlane.f32.xlu0 %v437
        %v442 = vpop.xlane.xlu0 %441
        %v443 = vsel %vm414, %v440, %v403
        %v444 = vsel %vm414, %v442, %v404
        %s445 = scalar_lea.vmem %s93, 11 [#allocation0]
        %s446 = scalar_lea.vmem %s97, 11 [#allocation1]
        %v447 = vld [vmem:[%s445] ss:$0 sm:$0xff]
        %v448 = vld [vmem:[%s446] ss:$0 sm:$0xff]
        %vm449 = vcmask 261120
        %v450 = vsel %vm449, %v447, 0.0
        %v451 = vsel %vm449, %v448, 0.0
        %v452 = vlaneseq
        %v453 = vand.u32 %v452, 127
        %vm454 = vcmp.eq.s32.totalorder %v453, 11
        %455 = xla_tuple %v450, %v451
        %456 = xla_tuple %v428, %v429
        %v457 = vmul.f32 %v450, %v428
        %v458 = vmul.f32 %v451, %v429
        %v459 = vsub.f32 %v457, %v458
        %v460 = vmul.f32 %v450, %v429
        %v461 = vmul.f32 %v451, %v428
        %v462 = vadd.f32 %v460, %v461
        %463 = xla_tuple %v459, %v462
        %464 = vadd.xlane.f32.xlu0 %v459
        %v465 = vpop.xlane.xlu0 %464
        %466 = vadd.xlane.f32.xlu0 %v462
        %v467 = vpop.xlane.xlu0 %466
        %v468 = vsel %vm454, %v465, %v428
        %v469 = vsel %vm454, %v467, %v429
        %470 = xla_tuple %v450, %v451
        %471 = xla_tuple %v443, %v444
        %v472 = vmul.f32 %v450, %v443
        %v473 = vmul.f32 %v451, %v444
        %v474 = vsub.f32 %v472, %v473
        %v475 = vmul.f32 %v450, %v444
        %v476 = vmul.f32 %v451, %v443
        %v477 = vadd.f32 %v475, %v476
        %478 = xla_tuple %v474, %v477
        %479 = vadd.xlane.f32.xlu0 %v474
        %v480 = vpop.xlane.xlu0 %479
        %481 = vadd.xlane.f32.xlu0 %v477
        %v482 = vpop.xlane.xlu0 %481
        %v483 = vsel %vm454, %v480, %v443
        %v484 = vsel %vm454, %v482, %v444
        %s485 = scalar_lea.vmem %s93, 12 [#allocation0]
        %s486 = scalar_lea.vmem %s97, 12 [#allocation1]
        %v487 = vld [vmem:[%s485] ss:$0 sm:$0xff]
        %v488 = vld [vmem:[%s486] ss:$0 sm:$0xff]
        %vm489 = vcmask 261120
        %v490 = vsel %vm489, %v487, 0.0
        %v491 = vsel %vm489, %v488, 0.0
        %v492 = vlaneseq
        %v493 = vand.u32 %v492, 127
        %vm494 = vcmp.eq.s32.totalorder %v493, 12
        %495 = xla_tuple %v490, %v491
        %496 = xla_tuple %v468, %v469
        %v497 = vmul.f32 %v490, %v468
        %v498 = vmul.f32 %v491, %v469
        %v499 = vsub.f32 %v497, %v498
        %v500 = vmul.f32 %v490, %v469
        %v501 = vmul.f32 %v491, %v468
        %v502 = vadd.f32 %v500, %v501
        %503 = xla_tuple %v499, %v502
        %504 = vadd.xlane.f32.xlu0 %v499
        %v505 = vpop.xlane.xlu0 %504
        %506 = vadd.xlane.f32.xlu0 %v502
        %v507 = vpop.xlane.xlu0 %506
        %v508 = vsel %vm494, %v505, %v468
        %v509 = vsel %vm494, %v507, %v469
        %510 = xla_tuple %v490, %v491
        %511 = xla_tuple %v483, %v484
        %v512 = vmul.f32 %v490, %v483
        %v513 = vmul.f32 %v491, %v484
        %v514 = vsub.f32 %v512, %v513
        %v515 = vmul.f32 %v490, %v484
        %v516 = vmul.f32 %v491, %v483
        %v517 = vadd.f32 %v515, %v516
        %518 = xla_tuple %v514, %v517
        %519 = vadd.xlane.f32.xlu0 %v514
        %v520 = vpop.xlane.xlu0 %519
        %521 = vadd.xlane.f32.xlu0 %v517
        %v522 = vpop.xlane.xlu0 %521
        %v523 = vsel %vm494, %v520, %v483
        %v524 = vsel %vm494, %v522, %v484
        %s525 = scalar_lea.vmem %s93, 13 [#allocation0]
        %s526 = scalar_lea.vmem %s97, 13 [#allocation1]
        %v527 = vld [vmem:[%s525] ss:$0 sm:$0xff]
        %v528 = vld [vmem:[%s526] ss:$0 sm:$0xff]
        %vm529 = vcmask 261120
        %v530 = vsel %vm529, %v527, 0.0
        %v531 = vsel %vm529, %v528, 0.0
        %v532 = vlaneseq
        %v533 = vand.u32 %v532, 127
        %vm534 = vcmp.eq.s32.totalorder %v533, 13
        %535 = xla_tuple %v530, %v531
        %536 = xla_tuple %v508, %v509
        %v537 = vmul.f32 %v530, %v508
        %v538 = vmul.f32 %v531, %v509
        %v539 = vsub.f32 %v537, %v538
        %v540 = vmul.f32 %v530, %v509
        %v541 = vmul.f32 %v531, %v508
        %v542 = vadd.f32 %v540, %v541
        %543 = xla_tuple %v539, %v542
        %544 = vadd.xlane.f32.xlu0 %v539
        %v545 = vpop.xlane.xlu0 %544
        %546 = vadd.xlane.f32.xlu0 %v542
        %v547 = vpop.xlane.xlu0 %546
        %v548 = vsel %vm534, %v545, %v508
        %v549 = vsel %vm534, %v547, %v509
        %550 = xla_tuple %v530, %v531
        %551 = xla_tuple %v523, %v524
        %v552 = vmul.f32 %v530, %v523
        %v553 = vmul.f32 %v531, %v524
        %v554 = vsub.f32 %v552, %v553
        %v555 = vmul.f32 %v530, %v524
        %v556 = vmul.f32 %v531, %v523
        %v557 = vadd.f32 %v555, %v556
        %558 = xla_tuple %v554, %v557
        %559 = vadd.xlane.f32.xlu0 %v554
        %v560 = vpop.xlane.xlu0 %559
        %561 = vadd.xlane.f32.xlu0 %v557
        %v562 = vpop.xlane.xlu0 %561
        %v563 = vsel %vm534, %v560, %v523
        %v564 = vsel %vm534, %v562, %v524
        %s565 = scalar_lea.vmem %s93, 14 [#allocation0]
        %s566 = scalar_lea.vmem %s97, 14 [#allocation1]
        %v567 = vld [vmem:[%s565] ss:$0 sm:$0xff]
        %v568 = vld [vmem:[%s566] ss:$0 sm:$0xff]
        %vm569 = vcmask 261120
        %v570 = vsel %vm569, %v567, 0.0
        %v571 = vsel %vm569, %v568, 0.0
        %v572 = vlaneseq
        %v573 = vand.u32 %v572, 127
        %vm574 = vcmp.eq.s32.totalorder %v573, 14
        %575 = xla_tuple %v570, %v571
        %576 = xla_tuple %v548, %v549
        %v577 = vmul.f32 %v570, %v548
        %v578 = vmul.f32 %v571, %v549
        %v579 = vsub.f32 %v577, %v578
        %v580 = vmul.f32 %v570, %v549
        %v581 = vmul.f32 %v571, %v548
        %v582 = vadd.f32 %v580, %v581
        %583 = xla_tuple %v579, %v582
        %584 = vadd.xlane.f32.xlu0 %v579
        %v585 = vpop.xlane.xlu0 %584
        %586 = vadd.xlane.f32.xlu0 %v582
        %v587 = vpop.xlane.xlu0 %586
        %v588 = vsel %vm574, %v585, %v548
        %v589 = vsel %vm574, %v587, %v549
        %590 = xla_tuple %v570, %v571
        %591 = xla_tuple %v563, %v564
        %v592 = vmul.f32 %v570, %v563
        %v593 = vmul.f32 %v571, %v564
        %v594 = vsub.f32 %v592, %v593
        %v595 = vmul.f32 %v570, %v564
        %v596 = vmul.f32 %v571, %v563
        %v597 = vadd.f32 %v595, %v596
        %598 = xla_tuple %v594, %v597
        %599 = vadd.xlane.f32.xlu0 %v594
        %v600 = vpop.xlane.xlu0 %599
        %601 = vadd.xlane.f32.xlu0 %v597
        %v602 = vpop.xlane.xlu0 %601
        %v603 = vsel %vm574, %v600, %v563
        %v604 = vsel %vm574, %v602, %v564
        %s605 = scalar_lea.vmem %s93, 15 [#allocation0]
        %s606 = scalar_lea.vmem %s97, 15 [#allocation1]
        %v607 = vld [vmem:[%s605] ss:$0 sm:$0xff]
        %v608 = vld [vmem:[%s606] ss:$0 sm:$0xff]
        %vm609 = vcmask 261120
        %v610 = vsel %vm609, %v607, 0.0
        %v611 = vsel %vm609, %v608, 0.0
        %v612 = vlaneseq
        %v613 = vand.u32 %v612, 127
        %vm614 = vcmp.eq.s32.totalorder %v613, 15
        %615 = xla_tuple %v610, %v611
        %616 = xla_tuple %v588, %v589
        %v617 = vmul.f32 %v610, %v588
        %v618 = vmul.f32 %v611, %v589
        %v619 = vsub.f32 %v617, %v618
        %v620 = vmul.f32 %v610, %v589
        %v621 = vmul.f32 %v611, %v588
        %v622 = vadd.f32 %v620, %v621
        %623 = xla_tuple %v619, %v622
        %624 = vadd.xlane.f32.xlu0 %v619
        %v625 = vpop.xlane.xlu0 %624
        %626 = vadd.xlane.f32.xlu0 %v622
        %v627 = vpop.xlane.xlu0 %626
        %v628 = vsel %vm614, %v625, %v588
        %v629 = vsel %vm614, %v627, %v589
        %630 = xla_tuple %v610, %v611
        %631 = xla_tuple %v603, %v604
        %v632 = vmul.f32 %v610, %v603
        %v633 = vmul.f32 %v611, %v604
        %v634 = vsub.f32 %v632, %v633
        %v635 = vmul.f32 %v610, %v604
        %v636 = vmul.f32 %v611, %v603
        %v637 = vadd.f32 %v635, %v636
        %638 = xla_tuple %v634, %v637
        %639 = vadd.xlane.f32.xlu0 %v634
        %v640 = vpop.xlane.xlu0 %639
        %641 = vadd.xlane.f32.xlu0 %v637
        %v642 = vpop.xlane.xlu0 %641
        %v643 = vsel %vm614, %v640, %v603
        %v644 = vsel %vm614, %v642, %v604
        %s645 = scalar_lea.vmem %s93, 16 [#allocation0]
        %s646 = scalar_lea.vmem %s97, 16 [#allocation1]
        %v647 = vld [vmem:[%s645] ss:$0 sm:$0xff]
        %v648 = vld [vmem:[%s646] ss:$0 sm:$0xff]
        %vm649 = vcmask 261120
        %v650 = vsel %vm649, %v647, 0.0
        %v651 = vsel %vm649, %v648, 0.0
        %v652 = vlaneseq
        %v653 = vand.u32 %v652, 127
        %vm654 = vcmp.eq.s32.totalorder %v653, 16
        %655 = xla_tuple %v650, %v651
        %656 = xla_tuple %v628, %v629
        %v657 = vmul.f32 %v650, %v628
        %v658 = vmul.f32 %v651, %v629
        %v659 = vsub.f32 %v657, %v658
        %v660 = vmul.f32 %v650, %v629
        %v661 = vmul.f32 %v651, %v628
        %v662 = vadd.f32 %v660, %v661
        %663 = xla_tuple %v659, %v662
        %664 = vadd.xlane.f32.xlu0 %v659
        %v665 = vpop.xlane.xlu0 %664
        %666 = vadd.xlane.f32.xlu0 %v662
        %v667 = vpop.xlane.xlu0 %666
        %v668 = vsel %vm654, %v665, %v628
        %v669 = vsel %vm654, %v667, %v629
        %670 = xla_tuple %v650, %v651
        %671 = xla_tuple %v643, %v644
        %v672 = vmul.f32 %v650, %v643
        %v673 = vmul.f32 %v651, %v644
        %v674 = vsub.f32 %v672, %v673
        %v675 = vmul.f32 %v650, %v644
        %v676 = vmul.f32 %v651, %v643
        %v677 = vadd.f32 %v675, %v676
        %678 = xla_tuple %v674, %v677
        %679 = vadd.xlane.f32.xlu0 %v674
        %v680 = vpop.xlane.xlu0 %679
        %681 = vadd.xlane.f32.xlu0 %v677
        %v682 = vpop.xlane.xlu0 %681
        %v683 = vsel %vm654, %v680, %v643
        %v684 = vsel %vm654, %v682, %v644
        %685 = xla_tuple %v650, %v651
        %686 = xla_tuple %v142, 0.0
        %v687 = vmul.f32 %v650, %v142
        %v688 = vmul.f32 %v651, 0.0
        %v689 = vsub.f32 %v687, %v688
        %v690 = vmul.f32 %v650, 0.0
        %v691 = vmul.f32 %v651, %v142
        %v692 = vadd.f32 %v690, %v691
        %693 = xla_tuple %v689, %v692
        %694 = vadd.xlane.f32.xlu0 %v689
        %v695 = vpop.xlane.xlu0 %694
        %696 = vadd.xlane.f32.xlu0 %v692
        %v697 = vpop.xlane.xlu0 %696
        %v698 = vsel %vm654, %v695, %v142
        %v699 = vsel %vm654, %v697, 0.0
        %s700 = scalar_lea.vmem %s93, 17 [#allocation0]
        %s701 = scalar_lea.vmem %s97, 17 [#allocation1]
        %v702 = vld [vmem:[%s700] ss:$0 sm:$0xff]
        %v703 = vld [vmem:[%s701] ss:$0 sm:$0xff]
        %vm704 = vcmask 261120
        %v705 = vsel %vm704, %v702, 0.0
        %v706 = vsel %vm704, %v703, 0.0
        %v707 = vlaneseq
        %v708 = vand.u32 %v707, 127
        %vm709 = vcmp.eq.s32.totalorder %v708, 17
        %710 = xla_tuple %v705, %v706
        %711 = xla_tuple %v668, %v669
        %v712 = vmul.f32 %v705, %v668
        %v713 = vmul.f32 %v706, %v669
        %v714 = vsub.f32 %v712, %v713
        %v715 = vmul.f32 %v705, %v669
        %v716 = vmul.f32 %v706, %v668
        %v717 = vadd.f32 %v715, %v716
        %718 = xla_tuple %v714, %v717
        %719 = vadd.xlane.f32.xlu0 %v714
        %v720 = vpop.xlane.xlu0 %719
        %721 = vadd.xlane.f32.xlu0 %v717
        %v722 = vpop.xlane.xlu0 %721
        %v723 = vsel %vm709, %v720, %v668
        %v724 = vsel %vm709, %v722, %v669
        %725 = xla_tuple %v705, %v706
        %726 = xla_tuple %v683, %v684
        %v727 = vmul.f32 %v705, %v683
        %v728 = vmul.f32 %v706, %v684
        %v729 = vsub.f32 %v727, %v728
        %v730 = vmul.f32 %v705, %v684
        %v731 = vmul.f32 %v706, %v683
        %v732 = vadd.f32 %v730, %v731
        %733 = xla_tuple %v729, %v732
        %734 = vadd.xlane.f32.xlu0 %v729
        %v735 = vpop.xlane.xlu0 %734
        %736 = vadd.xlane.f32.xlu0 %v732
        %v737 = vpop.xlane.xlu0 %736
        %v738 = vsel %vm709, %v735, %v683
        %v739 = vsel %vm709, %v737, %v684
        %740 = xla_tuple %v705, %v706
        %741 = xla_tuple %v698, %v699
        %v742 = vmul.f32 %v705, %v698
        %v743 = vmul.f32 %v706, %v699
        %v744 = vsub.f32 %v742, %v743
        %v745 = vmul.f32 %v705, %v699
        %v746 = vmul.f32 %v706, %v698
        %v747 = vadd.f32 %v745, %v746
        %748 = xla_tuple %v744, %v747
        %749 = vadd.xlane.f32.xlu0 %v744
        %v750 = vpop.xlane.xlu0 %749
        %751 = vadd.xlane.f32.xlu0 %v747
        %v752 = vpop.xlane.xlu0 %751
        %v753 = vsel %vm709, %v750, %v698
        %v754 = vsel %vm709, %v752, %v699
        %s755 = scalar_lea.vmem %s93, 18 [#allocation0]
        %s756 = scalar_lea.vmem %s97, 18 [#allocation1]
        %v757 = vld [vmem:[%s755] ss:$0 sm:$0xff]
        %v758 = vld [vmem:[%s756] ss:$0 sm:$0xff]
        %vm759 = vcmask 261120
        %v760 = vsel %vm759, %v757, 0.0
        %v761 = vsel %vm759, %v758, 0.0
        %v762 = vlaneseq
        %v763 = vand.u32 %v762, 127
        %vm764 = vcmp.eq.s32.totalorder %v763, 18
        %765 = xla_tuple %v760, %v761
        %766 = xla_tuple %v723, %v724
        %v767 = vmul.f32 %v760, %v723
        %v768 = vmul.f32 %v761, %v724
        %v769 = vsub.f32 %v767, %v768
        %v770 = vmul.f32 %v760, %v724
        %v771 = vmul.f32 %v761, %v723
        %v772 = vadd.f32 %v770, %v771
        %773 = xla_tuple %v769, %v772
        %774 = vadd.xlane.f32.xlu0 %v769
        %v775 = vpop.xlane.xlu0 %774
        %776 = vadd.xlane.f32.xlu0 %v772
        %v777 = vpop.xlane.xlu0 %776
        %v778 = vsel %vm764, %v775, %v723
        %v779 = vsel %vm764, %v777, %v724
        %780 = xla_tuple %v760, %v761
        %781 = xla_tuple %v738, %v739
        %v782 = vmul.f32 %v760, %v738
        %v783 = vmul.f32 %v761, %v739
        %v784 = vsub.f32 %v782, %v783
        %v785 = vmul.f32 %v760, %v739
        %v786 = vmul.f32 %v761, %v738
        %v787 = vadd.f32 %v785, %v786
        %788 = xla_tuple %v784, %v787
        %789 = vadd.xlane.f32.xlu0 %v784
        %v790 = vpop.xlane.xlu0 %789
        %791 = vadd.xlane.f32.xlu0 %v787
        %v792 = vpop.xlane.xlu0 %791
        %v793 = vsel %vm764, %v790, %v738
        %v794 = vsel %vm764, %v792, %v739
        %795 = xla_tuple %v760, %v761
        %796 = xla_tuple %v753, %v754
        %v797 = vmul.f32 %v760, %v753
        %v798 = vmul.f32 %v761, %v754
        %v799 = vsub.f32 %v797, %v798
        %v800 = vmul.f32 %v760, %v754
        %v801 = vmul.f32 %v761, %v753
        %v802 = vadd.f32 %v800, %v801
        %803 = xla_tuple %v799, %v802
        %804 = vadd.xlane.f32.xlu0 %v799
        %v805 = vpop.xlane.xlu0 %804
        %806 = vadd.xlane.f32.xlu0 %v802
        %v807 = vpop.xlane.xlu0 %806
        %v808 = vsel %vm764, %v805, %v753
        %v809 = vsel %vm764, %v807, %v754
        %s810 = scalar_lea.vmem %s93, 19 [#allocation0]
        %s811 = scalar_lea.vmem %s97, 19 [#allocation1]
        %v812 = vld [vmem:[%s810] ss:$0 sm:$0xff]
        %v813 = vld [vmem:[%s811] ss:$0 sm:$0xff]
        %vm814 = vcmask 261120
        %v815 = vsel %vm814, %v812, 0.0
        %v816 = vsel %vm814, %v813, 0.0
        %v817 = vlaneseq
        %v818 = vand.u32 %v817, 127
        %vm819 = vcmp.eq.s32.totalorder %v818, 19
        %820 = xla_tuple %v815, %v816
        %821 = xla_tuple %v778, %v779
        %v822 = vmul.f32 %v815, %v778
        %v823 = vmul.f32 %v816, %v779
        %v824 = vsub.f32 %v822, %v823
        %v825 = vmul.f32 %v815, %v779
        %v826 = vmul.f32 %v816, %v778
        %v827 = vadd.f32 %v825, %v826
        %828 = xla_tuple %v824, %v827
        %829 = vadd.xlane.f32.xlu0 %v824
        %v830 = vpop.xlane.xlu0 %829
        %831 = vadd.xlane.f32.xlu0 %v827
        %v832 = vpop.xlane.xlu0 %831
        %v833 = vsel %vm819, %v830, %v778
        %v834 = vsel %vm819, %v832, %v779
        %835 = xla_tuple %v815, %v816
        %836 = xla_tuple %v793, %v794
        %v837 = vmul.f32 %v815, %v793
        %v838 = vmul.f32 %v816, %v794
        %v839 = vsub.f32 %v837, %v838
        %v840 = vmul.f32 %v815, %v794
        %v841 = vmul.f32 %v816, %v793
        %v842 = vadd.f32 %v840, %v841
        %843 = xla_tuple %v839, %v842
        %844 = vadd.xlane.f32.xlu0 %v839
        %v845 = vpop.xlane.xlu0 %844
        %846 = vadd.xlane.f32.xlu0 %v842
        %v847 = vpop.xlane.xlu0 %846
        %v848 = vsel %vm819, %v845, %v793
        %v849 = vsel %vm819, %v847, %v794
        %850 = xla_tuple %v815, %v816
        %851 = xla_tuple %v808, %v809
        %v852 = vmul.f32 %v815, %v808
        %v853 = vmul.f32 %v816, %v809
        %v854 = vsub.f32 %v852, %v853
        %v855 = vmul.f32 %v815, %v809
        %v856 = vmul.f32 %v816, %v808
        %v857 = vadd.f32 %v855, %v856
        %858 = xla_tuple %v854, %v857
        %859 = vadd.xlane.f32.xlu0 %v854
        %v860 = vpop.xlane.xlu0 %859
        %861 = vadd.xlane.f32.xlu0 %v857
        %v862 = vpop.xlane.xlu0 %861
        %v863 = vsel %vm819, %v860, %v808
        %v864 = vsel %vm819, %v862, %v809
        %s865 = scalar_lea.vmem %s93, 20 [#allocation0]
        %s866 = scalar_lea.vmem %s97, 20 [#allocation1]
        %v867 = vld [vmem:[%s865] ss:$0 sm:$0xff]
        %v868 = vld [vmem:[%s866] ss:$0 sm:$0xff]
        %vm869 = vcmask 261120
        %v870 = vsel %vm869, %v867, 0.0
        %v871 = vsel %vm869, %v868, 0.0
        %v872 = vlaneseq
        %v873 = vand.u32 %v872, 127
        %vm874 = vcmp.eq.s32.totalorder %v873, 20
        %875 = xla_tuple %v870, %v871
        %876 = xla_tuple %v833, %v834
        %v877 = vmul.f32 %v870, %v833
        %v878 = vmul.f32 %v871, %v834
        %v879 = vsub.f32 %v877, %v878
        %v880 = vmul.f32 %v870, %v834
        %v881 = vmul.f32 %v871, %v833
        %v882 = vadd.f32 %v880, %v881
        %883 = xla_tuple %v879, %v882
        %884 = vadd.xlane.f32.xlu0 %v879
        %v885 = vpop.xlane.xlu0 %884
        %886 = vadd.xlane.f32.xlu0 %v882
        %v887 = vpop.xlane.xlu0 %886
        %v888 = vsel %vm874, %v885, %v833
        %v889 = vsel %vm874, %v887, %v834
        %890 = xla_tuple %v870, %v871
        %891 = xla_tuple %v848, %v849
        %v892 = vmul.f32 %v870, %v848
        %v893 = vmul.f32 %v871, %v849
        %v894 = vsub.f32 %v892, %v893
        %v895 = vmul.f32 %v870, %v849
        %v896 = vmul.f32 %v871, %v848
        %v897 = vadd.f32 %v895, %v896
        %898 = xla_tuple %v894, %v897
        %899 = vadd.xlane.f32.xlu0 %v894
        %v900 = vpop.xlane.xlu0 %899
        %901 = vadd.xlane.f32.xlu0 %v897
        %v902 = vpop.xlane.xlu0 %901
        %v903 = vsel %vm874, %v900, %v848
        %v904 = vsel %vm874, %v902, %v849
        %905 = xla_tuple %v870, %v871
        %906 = xla_tuple %v863, %v864
        %v907 = vmul.f32 %v870, %v863
        %v908 = vmul.f32 %v871, %v864
        %v909 = vsub.f32 %v907, %v908
        %v910 = vmul.f32 %v870, %v864
        %v911 = vmul.f32 %v871, %v863
        %v912 = vadd.f32 %v910, %v911
        %913 = xla_tuple %v909, %v912
        %914 = vadd.xlane.f32.xlu0 %v909
        %v915 = vpop.xlane.xlu0 %914
        %916 = vadd.xlane.f32.xlu0 %v912
        %v917 = vpop.xlane.xlu0 %916
        %v918 = vsel %vm874, %v915, %v863
        %v919 = vsel %vm874, %v917, %v864
        %s920 = scalar_lea.vmem %s93, 21 [#allocation0]
        %s921 = scalar_lea.vmem %s97, 21 [#allocation1]
        %v922 = vld [vmem:[%s920] ss:$0 sm:$0xff]
        %v923 = vld [vmem:[%s921] ss:$0 sm:$0xff]
        %vm924 = vcmask 261120
        %v925 = vsel %vm924, %v922, 0.0
        %v926 = vsel %vm924, %v923, 0.0
        %v927 = vlaneseq
        %v928 = vand.u32 %v927, 127
        %vm929 = vcmp.eq.s32.totalorder %v928, 21
        %930 = xla_tuple %v925, %v926
        %931 = xla_tuple %v888, %v889
        %v932 = vmul.f32 %v925, %v888
        %v933 = vmul.f32 %v926, %v889
        %v934 = vsub.f32 %v932, %v933
        %v935 = vmul.f32 %v925, %v889
        %v936 = vmul.f32 %v926, %v888
        %v937 = vadd.f32 %v935, %v936
        %938 = xla_tuple %v934, %v937
        %939 = vadd.xlane.f32.xlu0 %v934
        %v940 = vpop.xlane.xlu0 %939
        %941 = vadd.xlane.f32.xlu0 %v937
        %v942 = vpop.xlane.xlu0 %941
        %v943 = vsel %vm929, %v940, %v888
        %v944 = vsel %vm929, %v942, %v889
        %945 = xla_tuple %v925, %v926
        %946 = xla_tuple %v903, %v904
        %v947 = vmul.f32 %v925, %v903
        %v948 = vmul.f32 %v926, %v904
        %v949 = vsub.f32 %v947, %v948
        %v950 = vmul.f32 %v925, %v904
        %v951 = vmul.f32 %v926, %v903
        %v952 = vadd.f32 %v950, %v951
        %953 = xla_tuple %v949, %v952
        %954 = vadd.xlane.f32.xlu0 %v949
        %v955 = vpop.xlane.xlu0 %954
        %956 = vadd.xlane.f32.xlu0 %v952
        %v957 = vpop.xlane.xlu0 %956
        %v958 = vsel %vm929, %v955, %v903
        %v959 = vsel %vm929, %v957, %v904
        %960 = xla_tuple %v925, %v926
        %961 = xla_tuple %v918, %v919
        %v962 = vmul.f32 %v925, %v918
        %v963 = vmul.f32 %v926, %v919
        %v964 = vsub.f32 %v962, %v963
        %v965 = vmul.f32 %v925, %v919
        %v966 = vmul.f32 %v926, %v918
        %v967 = vadd.f32 %v965, %v966
        %968 = xla_tuple %v964, %v967
        %969 = vadd.xlane.f32.xlu0 %v964
        %v970 = vpop.xlane.xlu0 %969
        %971 = vadd.xlane.f32.xlu0 %v967
        %v972 = vpop.xlane.xlu0 %971
        %v973 = vsel %vm929, %v970, %v918
        %v974 = vsel %vm929, %v972, %v919
        %s975 = scalar_lea.vmem %s93, 22 [#allocation0]
        %s976 = scalar_lea.vmem %s97, 22 [#allocation1]
        %v977 = vld [vmem:[%s975] ss:$0 sm:$0xff]
        %v978 = vld [vmem:[%s976] ss:$0 sm:$0xff]
        %vm979 = vcmask 261120
        %v980 = vsel %vm979, %v977, 0.0
        %v981 = vsel %vm979, %v978, 0.0
        %v982 = vlaneseq
        %v983 = vand.u32 %v982, 127
        %vm984 = vcmp.eq.s32.totalorder %v983, 22
        %985 = xla_tuple %v980, %v981
        %986 = xla_tuple %v943, %v944
        %v987 = vmul.f32 %v980, %v943
        %v988 = vmul.f32 %v981, %v944
        %v989 = vsub.f32 %v987, %v988
        %v990 = vmul.f32 %v980, %v944
        %v991 = vmul.f32 %v981, %v943
        %v992 = vadd.f32 %v990, %v991
        %993 = xla_tuple %v989, %v992
        %994 = vadd.xlane.f32.xlu0 %v989
        %v995 = vpop.xlane.xlu0 %994
        %996 = vadd.xlane.f32.xlu0 %v992
        %v997 = vpop.xlane.xlu0 %996
        %v998 = vsel %vm984, %v995, %v943
        %v999 = vsel %vm984, %v997, %v944
        %1000 = xla_tuple %v980, %v981
        %1001 = xla_tuple %v958, %v959
        %v1002 = vmul.f32 %v980, %v958
        %v1003 = vmul.f32 %v981, %v959
        %v1004 = vsub.f32 %v1002, %v1003
        %v1005 = vmul.f32 %v980, %v959
        %v1006 = vmul.f32 %v981, %v958
        %v1007 = vadd.f32 %v1005, %v1006
        %1008 = xla_tuple %v1004, %v1007
        %1009 = vadd.xlane.f32.xlu0 %v1004
        %v1010 = vpop.xlane.xlu0 %1009
        %1011 = vadd.xlane.f32.xlu0 %v1007
        %v1012 = vpop.xlane.xlu0 %1011
        %v1013 = vsel %vm984, %v1010, %v958
        %v1014 = vsel %vm984, %v1012, %v959
        %1015 = xla_tuple %v980, %v981
        %1016 = xla_tuple %v973, %v974
        %v1017 = vmul.f32 %v980, %v973
        %v1018 = vmul.f32 %v981, %v974
        %v1019 = vsub.f32 %v1017, %v1018
        %v1020 = vmul.f32 %v980, %v974
        %v1021 = vmul.f32 %v981, %v973
        %v1022 = vadd.f32 %v1020, %v1021
        %1023 = xla_tuple %v1019, %v1022
        %1024 = vadd.xlane.f32.xlu0 %v1019
        %v1025 = vpop.xlane.xlu0 %1024
        %1026 = vadd.xlane.f32.xlu0 %v1022
        %v1027 = vpop.xlane.xlu0 %1026
        %v1028 = vsel %vm984, %v1025, %v973
        %v1029 = vsel %vm984, %v1027, %v974
        %s1030 = scalar_lea.vmem %s93, 23 [#allocation0]
        %s1031 = scalar_lea.vmem %s97, 23 [#allocation1]
        %v1032 = vld [vmem:[%s1030] ss:$0 sm:$0xff]
        %v1033 = vld [vmem:[%s1031] ss:$0 sm:$0xff]
        %vm1034 = vcmask 261120
        %v1035 = vsel %vm1034, %v1032, 0.0
        %v1036 = vsel %vm1034, %v1033, 0.0
        %v1037 = vlaneseq
        %v1038 = vand.u32 %v1037, 127
        %vm1039 = vcmp.eq.s32.totalorder %v1038, 23
        %1040 = xla_tuple %v1035, %v1036
        %1041 = xla_tuple %v998, %v999
        %v1042 = vmul.f32 %v1035, %v998
        %v1043 = vmul.f32 %v1036, %v999
        %v1044 = vsub.f32 %v1042, %v1043
        %v1045 = vmul.f32 %v1035, %v999
        %v1046 = vmul.f32 %v1036, %v998
        %v1047 = vadd.f32 %v1045, %v1046
        %1048 = xla_tuple %v1044, %v1047
        %1049 = vadd.xlane.f32.xlu0 %v1044
        %v1050 = vpop.xlane.xlu0 %1049
        %1051 = vadd.xlane.f32.xlu0 %v1047
        %v1052 = vpop.xlane.xlu0 %1051
        %v1053 = vsel %vm1039, %v1050, %v998
        %v1054 = vsel %vm1039, %v1052, %v999
        %1055 = xla_tuple %v1035, %v1036
        %1056 = xla_tuple %v1013, %v1014
        %v1057 = vmul.f32 %v1035, %v1013
        %v1058 = vmul.f32 %v1036, %v1014
        %v1059 = vsub.f32 %v1057, %v1058
        %v1060 = vmul.f32 %v1035, %v1014
        %v1061 = vmul.f32 %v1036, %v1013
        %v1062 = vadd.f32 %v1060, %v1061
        %1063 = xla_tuple %v1059, %v1062
        %1064 = vadd.xlane.f32.xlu0 %v1059
        %v1065 = vpop.xlane.xlu0 %1064
        %1066 = vadd.xlane.f32.xlu0 %v1062
        %v1067 = vpop.xlane.xlu0 %1066
        %v1068 = vsel %vm1039, %v1065, %v1013
        %v1069 = vsel %vm1039, %v1067, %v1014
        %1070 = xla_tuple %v1035, %v1036
        %1071 = xla_tuple %v1028, %v1029
        %v1072 = vmul.f32 %v1035, %v1028
        %v1073 = vmul.f32 %v1036, %v1029
        %v1074 = vsub.f32 %v1072, %v1073
        %v1075 = vmul.f32 %v1035, %v1029
        %v1076 = vmul.f32 %v1036, %v1028
        %v1077 = vadd.f32 %v1075, %v1076
        %1078 = xla_tuple %v1074, %v1077
        %1079 = vadd.xlane.f32.xlu0 %v1074
        %v1080 = vpop.xlane.xlu0 %1079
        %1081 = vadd.xlane.f32.xlu0 %v1077
        %v1082 = vpop.xlane.xlu0 %1081
        %v1083 = vsel %vm1039, %v1080, %v1028
        %v1084 = vsel %vm1039, %v1082, %v1029
        %s1085 = scalar_lea.vmem %s93, 24 [#allocation0]
        %s1086 = scalar_lea.vmem %s97, 24 [#allocation1]
        %v1087 = vld [vmem:[%s1085] ss:$0 sm:$0xff]
        %v1088 = vld [vmem:[%s1086] ss:$0 sm:$0xff]
        %vm1089 = vcmask 261120
        %v1090 = vsel %vm1089, %v1087, 0.0
        %v1091 = vsel %vm1089, %v1088, 0.0
        %v1092 = vlaneseq
        %v1093 = vand.u32 %v1092, 127
        %vm1094 = vcmp.eq.s32.totalorder %v1093, 24
        %1095 = xla_tuple %v1090, %v1091
        %1096 = xla_tuple %v1053, %v1054
        %v1097 = vmul.f32 %v1090, %v1053
        %v1098 = vmul.f32 %v1091, %v1054
        %v1099 = vsub.f32 %v1097, %v1098
        %v1100 = vmul.f32 %v1090, %v1054
        %v1101 = vmul.f32 %v1091, %v1053
        %v1102 = vadd.f32 %v1100, %v1101
        %1103 = xla_tuple %v1099, %v1102
        %1104 = vadd.xlane.f32.xlu0 %v1099
        %v1105 = vpop.xlane.xlu0 %1104
        %1106 = vadd.xlane.f32.xlu0 %v1102
        %v1107 = vpop.xlane.xlu0 %1106
        %v1108 = vsel %vm1094, %v1105, %v1053
        %v1109 = vsel %vm1094, %v1107, %v1054
        %1110 = xla_tuple %v1090, %v1091
        %1111 = xla_tuple %v1068, %v1069
        %v1112 = vmul.f32 %v1090, %v1068
        %v1113 = vmul.f32 %v1091, %v1069
        %v1114 = vsub.f32 %v1112, %v1113
        %v1115 = vmul.f32 %v1090, %v1069
        %v1116 = vmul.f32 %v1091, %v1068
        %v1117 = vadd.f32 %v1115, %v1116
        %1118 = xla_tuple %v1114, %v1117
        %1119 = vadd.xlane.f32.xlu0 %v1114
        %v1120 = vpop.xlane.xlu0 %1119
        %1121 = vadd.xlane.f32.xlu0 %v1117
        %v1122 = vpop.xlane.xlu0 %1121
        %v1123 = vsel %vm1094, %v1120, %v1068
        %v1124 = vsel %vm1094, %v1122, %v1069
        %1125 = xla_tuple %v1090, %v1091
        %1126 = xla_tuple %v1083, %v1084
        %v1127 = vmul.f32 %v1090, %v1083
        %v1128 = vmul.f32 %v1091, %v1084
        %v1129 = vsub.f32 %v1127, %v1128
        %v1130 = vmul.f32 %v1090, %v1084
        %v1131 = vmul.f32 %v1091, %v1083
        %v1132 = vadd.f32 %v1130, %v1131
        %1133 = xla_tuple %v1129, %v1132
        %1134 = vadd.xlane.f32.xlu0 %v1129
        %v1135 = vpop.xlane.xlu0 %1134
        %1136 = vadd.xlane.f32.xlu0 %v1132
        %v1137 = vpop.xlane.xlu0 %1136
        %v1138 = vsel %vm1094, %v1135, %v1083
        %v1139 = vsel %vm1094, %v1137, %v1084
        %1140 = xla_tuple %v1090, %v1091
        %1141 = xla_tuple %v149, 0.0
        %v1142 = vmul.f32 %v1090, %v149
        %v1143 = vmul.f32 %v1091, 0.0
        %v1144 = vsub.f32 %v1142, %v1143
        %v1145 = vmul.f32 %v1090, 0.0
        %v1146 = vmul.f32 %v1091, %v149
        %v1147 = vadd.f32 %v1145, %v1146
        %1148 = xla_tuple %v1144, %v1147
        %1149 = vadd.xlane.f32.xlu0 %v1144
        %v1150 = vpop.xlane.xlu0 %1149
        %1151 = vadd.xlane.f32.xlu0 %v1147
        %v1152 = vpop.xlane.xlu0 %1151
        %v1153 = vsel %vm1094, %v1150, %v149
        %v1154 = vsel %vm1094, %v1152, 0.0
        %s1155 = scalar_lea.vmem %s93, 25 [#allocation0]
        %s1156 = scalar_lea.vmem %s97, 25 [#allocation1]
        %v1157 = vld [vmem:[%s1155] ss:$0 sm:$0xff]
        %v1158 = vld [vmem:[%s1156] ss:$0 sm:$0xff]
        %vm1159 = vcmask 261120
        %v1160 = vsel %vm1159, %v1157, 0.0
        %v1161 = vsel %vm1159, %v1158, 0.0
        %v1162 = vlaneseq
        %v1163 = vand.u32 %v1162, 127
        %vm1164 = vcmp.eq.s32.totalorder %v1163, 25
        %1165 = xla_tuple %v1160, %v1161
        %1166 = xla_tuple %v1108, %v1109
        %v1167 = vmul.f32 %v1160, %v1108
        %v1168 = vmul.f32 %v1161, %v1109
        %v1169 = vsub.f32 %v1167, %v1168
        %v1170 = vmul.f32 %v1160, %v1109
        %v1171 = vmul.f32 %v1161, %v1108
        %v1172 = vadd.f32 %v1170, %v1171
        %1173 = xla_tuple %v1169, %v1172
        %1174 = vadd.xlane.f32.xlu0 %v1169
        %v1175 = vpop.xlane.xlu0 %1174
        %1176 = vadd.xlane.f32.xlu0 %v1172
        %v1177 = vpop.xlane.xlu0 %1176
        %v1178 = vsel %vm1164, %v1175, %v1108
        %v1179 = vsel %vm1164, %v1177, %v1109
        %1180 = xla_tuple %v1160, %v1161
        %1181 = xla_tuple %v1123, %v1124
        %v1182 = vmul.f32 %v1160, %v1123
        %v1183 = vmul.f32 %v1161, %v1124
        %v1184 = vsub.f32 %v1182, %v1183
        %v1185 = vmul.f32 %v1160, %v1124
        %v1186 = vmul.f32 %v1161, %v1123
        %v1187 = vadd.f32 %v1185, %v1186
        %1188 = xla_tuple %v1184, %v1187
        %1189 = vadd.xlane.f32.xlu0 %v1184
        %v1190 = vpop.xlane.xlu0 %1189
        %1191 = vadd.xlane.f32.xlu0 %v1187
        %v1192 = vpop.xlane.xlu0 %1191
        %v1193 = vsel %vm1164, %v1190, %v1123
        %v1194 = vsel %vm1164, %v1192, %v1124
        %1195 = xla_tuple %v1160, %v1161
        %1196 = xla_tuple %v1138, %v1139
        %v1197 = vmul.f32 %v1160, %v1138
        %v1198 = vmul.f32 %v1161, %v1139
        %v1199 = vsub.f32 %v1197, %v1198
        %v1200 = vmul.f32 %v1160, %v1139
        %v1201 = vmul.f32 %v1161, %v1138
        %v1202 = vadd.f32 %v1200, %v1201
        %1203 = xla_tuple %v1199, %v1202
        %1204 = vadd.xlane.f32.xlu0 %v1199
        %v1205 = vpop.xlane.xlu0 %1204
        %1206 = vadd.xlane.f32.xlu0 %v1202
        %v1207 = vpop.xlane.xlu0 %1206
        %v1208 = vsel %vm1164, %v1205, %v1138
        %v1209 = vsel %vm1164, %v1207, %v1139
        %1210 = xla_tuple %v1160, %v1161
        %1211 = xla_tuple %v1153, %v1154
        %v1212 = vmul.f32 %v1160, %v1153
        %v1213 = vmul.f32 %v1161, %v1154
        %v1214 = vsub.f32 %v1212, %v1213
        %v1215 = vmul.f32 %v1160, %v1154
        %v1216 = vmul.f32 %v1161, %v1153
        %v1217 = vadd.f32 %v1215, %v1216
        %1218 = xla_tuple %v1214, %v1217
        %1219 = vadd.xlane.f32.xlu0 %v1214
        %v1220 = vpop.xlane.xlu0 %1219
        %1221 = vadd.xlane.f32.xlu0 %v1217
        %v1222 = vpop.xlane.xlu0 %1221
        %v1223 = vsel %vm1164, %v1220, %v1153
        %v1224 = vsel %vm1164, %v1222, %v1154
        %s1225 = scalar_lea.vmem %s93, 26 [#allocation0]
        %s1226 = scalar_lea.vmem %s97, 26 [#allocation1]
        %v1227 = vld [vmem:[%s1225] ss:$0 sm:$0xff]
        %v1228 = vld [vmem:[%s1226] ss:$0 sm:$0xff]
        %vm1229 = vcmask 261120
        %v1230 = vsel %vm1229, %v1227, 0.0
        %v1231 = vsel %vm1229, %v1228, 0.0
        %v1232 = vlaneseq
        %v1233 = vand.u32 %v1232, 127
        %vm1234 = vcmp.eq.s32.totalorder %v1233, 26
        %1235 = xla_tuple %v1230, %v1231
        %1236 = xla_tuple %v1178, %v1179
        %v1237 = vmul.f32 %v1230, %v1178
        %v1238 = vmul.f32 %v1231, %v1179
        %v1239 = vsub.f32 %v1237, %v1238
        %v1240 = vmul.f32 %v1230, %v1179
        %v1241 = vmul.f32 %v1231, %v1178
        %v1242 = vadd.f32 %v1240, %v1241
        %1243 = xla_tuple %v1239, %v1242
        %1244 = vadd.xlane.f32.xlu0 %v1239
        %v1245 = vpop.xlane.xlu0 %1244
        %1246 = vadd.xlane.f32.xlu0 %v1242
        %v1247 = vpop.xlane.xlu0 %1246
        %v1248 = vsel %vm1234, %v1245, %v1178
        %v1249 = vsel %vm1234, %v1247, %v1179
        %1250 = xla_tuple %v1230, %v1231
        %1251 = xla_tuple %v1193, %v1194
        %v1252 = vmul.f32 %v1230, %v1193
        %v1253 = vmul.f32 %v1231, %v1194
        %v1254 = vsub.f32 %v1252, %v1253
        %v1255 = vmul.f32 %v1230, %v1194
        %v1256 = vmul.f32 %v1231, %v1193
        %v1257 = vadd.f32 %v1255, %v1256
        %1258 = xla_tuple %v1254, %v1257
        %1259 = vadd.xlane.f32.xlu0 %v1254
        %v1260 = vpop.xlane.xlu0 %1259
        %1261 = vadd.xlane.f32.xlu0 %v1257
        %v1262 = vpop.xlane.xlu0 %1261
        %v1263 = vsel %vm1234, %v1260, %v1193
        %v1264 = vsel %vm1234, %v1262, %v1194
        %1265 = xla_tuple %v1230, %v1231
        %1266 = xla_tuple %v1208, %v1209
        %v1267 = vmul.f32 %v1230, %v1208
        %v1268 = vmul.f32 %v1231, %v1209
        %v1269 = vsub.f32 %v1267, %v1268
        %v1270 = vmul.f32 %v1230, %v1209
        %v1271 = vmul.f32 %v1231, %v1208
        %v1272 = vadd.f32 %v1270, %v1271
        %1273 = xla_tuple %v1269, %v1272
        %1274 = vadd.xlane.f32.xlu0 %v1269
        %v1275 = vpop.xlane.xlu0 %1274
        %1276 = vadd.xlane.f32.xlu0 %v1272
        %v1277 = vpop.xlane.xlu0 %1276
        %v1278 = vsel %vm1234, %v1275, %v1208
        %v1279 = vsel %vm1234, %v1277, %v1209
        %1280 = xla_tuple %v1230, %v1231
        %1281 = xla_tuple %v1223, %v1224
        %v1282 = vmul.f32 %v1230, %v1223
        %v1283 = vmul.f32 %v1231, %v1224
        %v1284 = vsub.f32 %v1282, %v1283
        %v1285 = vmul.f32 %v1230, %v1224
        %v1286 = vmul.f32 %v1231, %v1223
        %v1287 = vadd.f32 %v1285, %v1286
        %1288 = xla_tuple %v1284, %v1287
        %1289 = vadd.xlane.f32.xlu0 %v1284
        %v1290 = vpop.xlane.xlu0 %1289
        %1291 = vadd.xlane.f32.xlu0 %v1287
        %v1292 = vpop.xlane.xlu0 %1291
        %v1293 = vsel %vm1234, %v1290, %v1223
        %v1294 = vsel %vm1234, %v1292, %v1224
        %s1295 = scalar_lea.vmem %s93, 27 [#allocation0]
        %s1296 = scalar_lea.vmem %s97, 27 [#allocation1]
        %v1297 = vld [vmem:[%s1295] ss:$0 sm:$0xff]
        %v1298 = vld [vmem:[%s1296] ss:$0 sm:$0xff]
        %vm1299 = vcmask 261120
        %v1300 = vsel %vm1299, %v1297, 0.0
        %v1301 = vsel %vm1299, %v1298, 0.0
        %v1302 = vlaneseq
        %v1303 = vand.u32 %v1302, 127
        %vm1304 = vcmp.eq.s32.totalorder %v1303, 27
        %1305 = xla_tuple %v1300, %v1301
        %1306 = xla_tuple %v1248, %v1249
        %v1307 = vmul.f32 %v1300, %v1248
        %v1308 = vmul.f32 %v1301, %v1249
        %v1309 = vsub.f32 %v1307, %v1308
        %v1310 = vmul.f32 %v1300, %v1249
        %v1311 = vmul.f32 %v1301, %v1248
        %v1312 = vadd.f32 %v1310, %v1311
        %1313 = xla_tuple %v1309, %v1312
        %1314 = vadd.xlane.f32.xlu0 %v1309
        %v1315 = vpop.xlane.xlu0 %1314
        %1316 = vadd.xlane.f32.xlu0 %v1312
        %v1317 = vpop.xlane.xlu0 %1316
        %v1318 = vsel %vm1304, %v1315, %v1248
        %v1319 = vsel %vm1304, %v1317, %v1249
        %1320 = xla_tuple %v1300, %v1301
        %1321 = xla_tuple %v1263, %v1264
        %v1322 = vmul.f32 %v1300, %v1263
        %v1323 = vmul.f32 %v1301, %v1264
        %v1324 = vsub.f32 %v1322, %v1323
        %v1325 = vmul.f32 %v1300, %v1264
        %v1326 = vmul.f32 %v1301, %v1263
        %v1327 = vadd.f32 %v1325, %v1326
        %1328 = xla_tuple %v1324, %v1327
        %1329 = vadd.xlane.f32.xlu0 %v1324
        %v1330 = vpop.xlane.xlu0 %1329
        %1331 = vadd.xlane.f32.xlu0 %v1327
        %v1332 = vpop.xlane.xlu0 %1331
        %v1333 = vsel %vm1304, %v1330, %v1263
        %v1334 = vsel %vm1304, %v1332, %v1264
        %1335 = xla_tuple %v1300, %v1301
        %1336 = xla_tuple %v1278, %v1279
        %v1337 = vmul.f32 %v1300, %v1278
        %v1338 = vmul.f32 %v1301, %v1279
        %v1339 = vsub.f32 %v1337, %v1338
        %v1340 = vmul.f32 %v1300, %v1279
        %v1341 = vmul.f32 %v1301, %v1278
        %v1342 = vadd.f32 %v1340, %v1341
        %1343 = xla_tuple %v1339, %v1342
        %1344 = vadd.xlane.f32.xlu0 %v1339
        %v1345 = vpop.xlane.xlu0 %1344
        %1346 = vadd.xlane.f32.xlu0 %v1342
        %v1347 = vpop.xlane.xlu0 %1346
        %v1348 = vsel %vm1304, %v1345, %v1278
        %v1349 = vsel %vm1304, %v1347, %v1279
        %1350 = xla_tuple %v1300, %v1301
        %1351 = xla_tuple %v1293, %v1294
        %v1352 = vmul.f32 %v1300, %v1293
        %v1353 = vmul.f32 %v1301, %v1294
        %v1354 = vsub.f32 %v1352, %v1353
        %v1355 = vmul.f32 %v1300, %v1294
        %v1356 = vmul.f32 %v1301, %v1293
        %v1357 = vadd.f32 %v1355, %v1356
        %1358 = xla_tuple %v1354, %v1357
        %1359 = vadd.xlane.f32.xlu0 %v1354
        %v1360 = vpop.xlane.xlu0 %1359
        %1361 = vadd.xlane.f32.xlu0 %v1357
        %v1362 = vpop.xlane.xlu0 %1361
        %v1363 = vsel %vm1304, %v1360, %v1293
        %v1364 = vsel %vm1304, %v1362, %v1294
        %s1365 = scalar_lea.vmem %s93, 28 [#allocation0]
        %s1366 = scalar_lea.vmem %s97, 28 [#allocation1]
        %v1367 = vld [vmem:[%s1365] ss:$0 sm:$0xff]
        %v1368 = vld [vmem:[%s1366] ss:$0 sm:$0xff]
        %vm1369 = vcmask 261120
        %v1370 = vsel %vm1369, %v1367, 0.0
        %v1371 = vsel %vm1369, %v1368, 0.0
        %v1372 = vlaneseq
        %v1373 = vand.u32 %v1372, 127
        %vm1374 = vcmp.eq.s32.totalorder %v1373, 28
        %1375 = xla_tuple %v1370, %v1371
        %1376 = xla_tuple %v1318, %v1319
        %v1377 = vmul.f32 %v1370, %v1318
        %v1378 = vmul.f32 %v1371, %v1319
        %v1379 = vsub.f32 %v1377, %v1378
        %v1380 = vmul.f32 %v1370, %v1319
        %v1381 = vmul.f32 %v1371, %v1318
        %v1382 = vadd.f32 %v1380, %v1381
        %1383 = xla_tuple %v1379, %v1382
        %1384 = vadd.xlane.f32.xlu0 %v1379
        %v1385 = vpop.xlane.xlu0 %1384
        %1386 = vadd.xlane.f32.xlu0 %v1382
        %v1387 = vpop.xlane.xlu0 %1386
        %v1388 = vsel %vm1374, %v1385, %v1318
        %v1389 = vsel %vm1374, %v1387, %v1319
        %1390 = xla_tuple %v1370, %v1371
        %1391 = xla_tuple %v1333, %v1334
        %v1392 = vmul.f32 %v1370, %v1333
        %v1393 = vmul.f32 %v1371, %v1334
        %v1394 = vsub.f32 %v1392, %v1393
        %v1395 = vmul.f32 %v1370, %v1334
        %v1396 = vmul.f32 %v1371, %v1333
        %v1397 = vadd.f32 %v1395, %v1396
        %1398 = xla_tuple %v1394, %v1397
        %1399 = vadd.xlane.f32.xlu0 %v1394
        %v1400 = vpop.xlane.xlu0 %1399
        %1401 = vadd.xlane.f32.xlu0 %v1397
        %v1402 = vpop.xlane.xlu0 %1401
        %v1403 = vsel %vm1374, %v1400, %v1333
        %v1404 = vsel %vm1374, %v1402, %v1334
        %1405 = xla_tuple %v1370, %v1371
        %1406 = xla_tuple %v1348, %v1349
        %v1407 = vmul.f32 %v1370, %v1348
        %v1408 = vmul.f32 %v1371, %v1349
        %v1409 = vsub.f32 %v1407, %v1408
        %v1410 = vmul.f32 %v1370, %v1349
        %v1411 = vmul.f32 %v1371, %v1348
        %v1412 = vadd.f32 %v1410, %v1411
        %1413 = xla_tuple %v1409, %v1412
        %1414 = vadd.xlane.f32.xlu0 %v1409
        %v1415 = vpop.xlane.xlu0 %1414
        %1416 = vadd.xlane.f32.xlu0 %v1412
        %v1417 = vpop.xlane.xlu0 %1416
        %v1418 = vsel %vm1374, %v1415, %v1348
        %v1419 = vsel %vm1374, %v1417, %v1349
        %1420 = xla_tuple %v1370, %v1371
        %1421 = xla_tuple %v1363, %v1364
        %v1422 = vmul.f32 %v1370, %v1363
        %v1423 = vmul.f32 %v1371, %v1364
        %v1424 = vsub.f32 %v1422, %v1423
        %v1425 = vmul.f32 %v1370, %v1364
        %v1426 = vmul.f32 %v1371, %v1363
        %v1427 = vadd.f32 %v1425, %v1426
        %1428 = xla_tuple %v1424, %v1427
        %1429 = vadd.xlane.f32.xlu0 %v1424
        %v1430 = vpop.xlane.xlu0 %1429
        %1431 = vadd.xlane.f32.xlu0 %v1427
        %v1432 = vpop.xlane.xlu0 %1431
        %v1433 = vsel %vm1374, %v1430, %v1363
        %v1434 = vsel %vm1374, %v1432, %v1364
        %s1435 = scalar_lea.vmem %s93, 29 [#allocation0]
        %s1436 = scalar_lea.vmem %s97, 29 [#allocation1]
        %v1437 = vld [vmem:[%s1435] ss:$0 sm:$0xff]
        %v1438 = vld [vmem:[%s1436] ss:$0 sm:$0xff]
        %vm1439 = vcmask 261120
        %v1440 = vsel %vm1439, %v1437, 0.0
        %v1441 = vsel %vm1439, %v1438, 0.0
        %v1442 = vlaneseq
        %v1443 = vand.u32 %v1442, 127
        %vm1444 = vcmp.eq.s32.totalorder %v1443, 29
        %1445 = xla_tuple %v1440, %v1441
        %1446 = xla_tuple %v1388, %v1389
        %v1447 = vmul.f32 %v1440, %v1388
        %v1448 = vmul.f32 %v1441, %v1389
        %v1449 = vsub.f32 %v1447, %v1448
        %v1450 = vmul.f32 %v1440, %v1389
        %v1451 = vmul.f32 %v1441, %v1388
        %v1452 = vadd.f32 %v1450, %v1451
        %1453 = xla_tuple %v1449, %v1452
        %1454 = vadd.xlane.f32.xlu0 %v1449
        %v1455 = vpop.xlane.xlu0 %1454
        %1456 = vadd.xlane.f32.xlu0 %v1452
        %v1457 = vpop.xlane.xlu0 %1456
        %v1458 = vsel %vm1444, %v1455, %v1388
        %v1459 = vsel %vm1444, %v1457, %v1389
        %1460 = xla_tuple %v1440, %v1441
        %1461 = xla_tuple %v1403, %v1404
        %v1462 = vmul.f32 %v1440, %v1403
        %v1463 = vmul.f32 %v1441, %v1404
        %v1464 = vsub.f32 %v1462, %v1463
        %v1465 = vmul.f32 %v1440, %v1404
        %v1466 = vmul.f32 %v1441, %v1403
        %v1467 = vadd.f32 %v1465, %v1466
        %1468 = xla_tuple %v1464, %v1467
        %1469 = vadd.xlane.f32.xlu0 %v1464
        %v1470 = vpop.xlane.xlu0 %1469
        %1471 = vadd.xlane.f32.xlu0 %v1467
        %v1472 = vpop.xlane.xlu0 %1471
        %v1473 = vsel %vm1444, %v1470, %v1403
        %v1474 = vsel %vm1444, %v1472, %v1404
        %1475 = xla_tuple %v1440, %v1441
        %1476 = xla_tuple %v1418, %v1419
        %v1477 = vmul.f32 %v1440, %v1418
        %v1478 = vmul.f32 %v1441, %v1419
        %v1479 = vsub.f32 %v1477, %v1478
        %v1480 = vmul.f32 %v1440, %v1419
        %v1481 = vmul.f32 %v1441, %v1418
        %v1482 = vadd.f32 %v1480, %v1481
        %1483 = xla_tuple %v1479, %v1482
        %1484 = vadd.xlane.f32.xlu0 %v1479
        %v1485 = vpop.xlane.xlu0 %1484
        %1486 = vadd.xlane.f32.xlu0 %v1482
        %v1487 = vpop.xlane.xlu0 %1486
        %v1488 = vsel %vm1444, %v1485, %v1418
        %v1489 = vsel %vm1444, %v1487, %v1419
        %1490 = xla_tuple %v1440, %v1441
        %1491 = xla_tuple %v1433, %v1434
        %v1492 = vmul.f32 %v1440, %v1433
        %v1493 = vmul.f32 %v1441, %v1434
        %v1494 = vsub.f32 %v1492, %v1493
        %v1495 = vmul.f32 %v1440, %v1434
        %v1496 = vmul.f32 %v1441, %v1433
        %v1497 = vadd.f32 %v1495, %v1496
        %1498 = xla_tuple %v1494, %v1497
        %1499 = vadd.xlane.f32.xlu0 %v1494
        %v1500 = vpop.xlane.xlu0 %1499
        %1501 = vadd.xlane.f32.xlu0 %v1497
        %v1502 = vpop.xlane.xlu0 %1501
        %v1503 = vsel %vm1444, %v1500, %v1433
        %v1504 = vsel %vm1444, %v1502, %v1434
        %s1505 = scalar_lea.vmem %s93, 30 [#allocation0]
        %s1506 = scalar_lea.vmem %s97, 30 [#allocation1]
        %v1507 = vld [vmem:[%s1505] ss:$0 sm:$0xff]
        %v1508 = vld [vmem:[%s1506] ss:$0 sm:$0xff]
        %vm1509 = vcmask 261120
        %v1510 = vsel %vm1509, %v1507, 0.0
        %v1511 = vsel %vm1509, %v1508, 0.0
        %v1512 = vlaneseq
        %v1513 = vand.u32 %v1512, 127
        %vm1514 = vcmp.eq.s32.totalorder %v1513, 30
        %1515 = xla_tuple %v1510, %v1511
        %1516 = xla_tuple %v1458, %v1459
        %v1517 = vmul.f32 %v1510, %v1458
        %v1518 = vmul.f32 %v1511, %v1459
        %v1519 = vsub.f32 %v1517, %v1518
        %v1520 = vmul.f32 %v1510, %v1459
        %v1521 = vmul.f32 %v1511, %v1458
        %v1522 = vadd.f32 %v1520, %v1521
        %1523 = xla_tuple %v1519, %v1522
        %1524 = vadd.xlane.f32.xlu0 %v1519
        %v1525 = vpop.xlane.xlu0 %1524
        %1526 = vadd.xlane.f32.xlu0 %v1522
        %v1527 = vpop.xlane.xlu0 %1526
        %v1528 = vsel %vm1514, %v1525, %v1458
        %v1529 = vsel %vm1514, %v1527, %v1459
        %1530 = xla_tuple %v1510, %v1511
        %1531 = xla_tuple %v1473, %v1474
        %v1532 = vmul.f32 %v1510, %v1473
        %v1533 = vmul.f32 %v1511, %v1474
        %v1534 = vsub.f32 %v1532, %v1533
        %v1535 = vmul.f32 %v1510, %v1474
        %v1536 = vmul.f32 %v1511, %v1473
        %v1537 = vadd.f32 %v1535, %v1536
        %1538 = xla_tuple %v1534, %v1537
        %1539 = vadd.xlane.f32.xlu0 %v1534
        %v1540 = vpop.xlane.xlu0 %1539
        %1541 = vadd.xlane.f32.xlu0 %v1537
        %v1542 = vpop.xlane.xlu0 %1541
        %v1543 = vsel %vm1514, %v1540, %v1473
        %v1544 = vsel %vm1514, %v1542, %v1474
        %1545 = xla_tuple %v1510, %v1511
        %1546 = xla_tuple %v1488, %v1489
        %v1547 = vmul.f32 %v1510, %v1488
        %v1548 = vmul.f32 %v1511, %v1489
        %v1549 = vsub.f32 %v1547, %v1548
        %v1550 = vmul.f32 %v1510, %v1489
        %v1551 = vmul.f32 %v1511, %v1488
        %v1552 = vadd.f32 %v1550, %v1551
        %1553 = xla_tuple %v1549, %v1552
        %1554 = vadd.xlane.f32.xlu0 %v1549
        %v1555 = vpop.xlane.xlu0 %1554
        %1556 = vadd.xlane.f32.xlu0 %v1552
        %v1557 = vpop.xlane.xlu0 %1556
        %v1558 = vsel %vm1514, %v1555, %v1488
        %v1559 = vsel %vm1514, %v1557, %v1489
        %1560 = xla_tuple %v1510, %v1511
        %1561 = xla_tuple %v1503, %v1504
        %v1562 = vmul.f32 %v1510, %v1503
        %v1563 = vmul.f32 %v1511, %v1504
        %v1564 = vsub.f32 %v1562, %v1563
        %v1565 = vmul.f32 %v1510, %v1504
        %v1566 = vmul.f32 %v1511, %v1503
        %v1567 = vadd.f32 %v1565, %v1566
        %1568 = xla_tuple %v1564, %v1567
        %1569 = vadd.xlane.f32.xlu0 %v1564
        %v1570 = vpop.xlane.xlu0 %1569
        %1571 = vadd.xlane.f32.xlu0 %v1567
        %v1572 = vpop.xlane.xlu0 %1571
        %v1573 = vsel %vm1514, %v1570, %v1503
        %v1574 = vsel %vm1514, %v1572, %v1504
        %s1575 = scalar_lea.vmem %s93, 31 [#allocation0]
        %s1576 = scalar_lea.vmem %s97, 31 [#allocation1]
        %v1577 = vld [vmem:[%s1575] ss:$0 sm:$0xff]
        %v1578 = vld [vmem:[%s1576] ss:$0 sm:$0xff]
        %vm1579 = vcmask 261120
        %v1580 = vsel %vm1579, %v1577, 0.0
        %v1581 = vsel %vm1579, %v1578, 0.0
        %v1582 = vlaneseq
        %v1583 = vand.u32 %v1582, 127
        %vm1584 = vcmp.eq.s32.totalorder %v1583, 31
        %1585 = xla_tuple %v1580, %v1581
        %1586 = xla_tuple %v1528, %v1529
        %v1587 = vmul.f32 %v1580, %v1528
        %v1588 = vmul.f32 %v1581, %v1529
        %v1589 = vsub.f32 %v1587, %v1588
        %v1590 = vmul.f32 %v1580, %v1529
        %v1591 = vmul.f32 %v1581, %v1528
        %v1592 = vadd.f32 %v1590, %v1591
        %1593 = xla_tuple %v1589, %v1592
        %1594 = vadd.xlane.f32.xlu0 %v1589
        %v1595 = vpop.xlane.xlu0 %1594
        %1596 = vadd.xlane.f32.xlu0 %v1592
        %v1597 = vpop.xlane.xlu0 %1596
        %v1598 = vsel %vm1584, %v1595, %v1528
        %v1599 = vsel %vm1584, %v1597, %v1529
        %1600 = xla_tuple %v1580, %v1581
        %1601 = xla_tuple %v1543, %v1544
        %v1602 = vmul.f32 %v1580, %v1543
        %v1603 = vmul.f32 %v1581, %v1544
        %v1604 = vsub.f32 %v1602, %v1603
        %v1605 = vmul.f32 %v1580, %v1544
        %v1606 = vmul.f32 %v1581, %v1543
        %v1607 = vadd.f32 %v1605, %v1606
        %1608 = xla_tuple %v1604, %v1607
        %1609 = vadd.xlane.f32.xlu0 %v1604
        %v1610 = vpop.xlane.xlu0 %1609
        %1611 = vadd.xlane.f32.xlu0 %v1607
        %v1612 = vpop.xlane.xlu0 %1611
        %v1613 = vsel %vm1584, %v1610, %v1543
        %v1614 = vsel %vm1584, %v1612, %v1544
        %1615 = xla_tuple %v1580, %v1581
        %1616 = xla_tuple %v1558, %v1559
        %v1617 = vmul.f32 %v1580, %v1558
        %v1618 = vmul.f32 %v1581, %v1559
        %v1619 = vsub.f32 %v1617, %v1618
        %v1620 = vmul.f32 %v1580, %v1559
        %v1621 = vmul.f32 %v1581, %v1558
        %v1622 = vadd.f32 %v1620, %v1621
        %1623 = xla_tuple %v1619, %v1622
        %1624 = vadd.xlane.f32.xlu0 %v1619
        %v1625 = vpop.xlane.xlu0 %1624
        %1626 = vadd.xlane.f32.xlu0 %v1622
        %v1627 = vpop.xlane.xlu0 %1626
        %v1628 = vsel %vm1584, %v1625, %v1558
        %v1629 = vsel %vm1584, %v1627, %v1559
        %1630 = xla_tuple %v1580, %v1581
        %1631 = xla_tuple %v1573, %v1574
        %v1632 = vmul.f32 %v1580, %v1573
        %v1633 = vmul.f32 %v1581, %v1574
        %v1634 = vsub.f32 %v1632, %v1633
        %v1635 = vmul.f32 %v1580, %v1574
        %v1636 = vmul.f32 %v1581, %v1573
        %v1637 = vadd.f32 %v1635, %v1636
        %1638 = xla_tuple %v1634, %v1637
        %1639 = vadd.xlane.f32.xlu0 %v1634
        %v1640 = vpop.xlane.xlu0 %1639
        %1641 = vadd.xlane.f32.xlu0 %v1637
        %v1642 = vpop.xlane.xlu0 %1641
        %v1643 = vsel %vm1584, %v1640, %v1573
        %v1644 = vsel %vm1584, %v1642, %v1574
        %1645 = vst [vmem:[%s109] sm:$0xff] %v1598
        %1646 = vst [vmem:[%s113] sm:$0xff] %v1599
        %s1647 = scalar_lea.vmem %s109, 8 [#allocation2]
        %s1648 = scalar_lea.vmem %s113, 8 [#allocation3]
        %1649 = vst [vmem:[%s1647] sm:$0xff] %v1613
        %1650 = vst [vmem:[%s1648] sm:$0xff] %v1614
        %s1651 = scalar_lea.vmem %s109, 16 [#allocation2]
        %s1652 = scalar_lea.vmem %s113, 16 [#allocation3]
        %1653 = vst [vmem:[%s1651] sm:$0xff] %v1628
        %1654 = vst [vmem:[%s1652] sm:$0xff] %v1629
        %s1655 = scalar_lea.vmem %s109, 24 [#allocation2]
        %s1656 = scalar_lea.vmem %s113, 24 [#allocation3]
        %1657 = vst [vmem:[%s1655] sm:$0xff] %v1643
        %1658 = vst [vmem:[%s1656] sm:$0xff] %v1644
        %s1659 = sand.u32 %s11, 1
        %s1660 = sand.u32 %s11, 1
        %s1661 = smul.addr %s1660, 32
        %s1662 = scalar_lea.vmem [#allocation2], %s1661
        %s1663 = sand.u32 %s11, 1
        %s1664 = sand.u32 %s11, 1
        %s1665 = smul.addr %s1664, 32
        %s1666 = scalar_lea.vmem [#allocation3], %s1665
        %s1667 = smul.addr %s11, 32
        %s1668 = scalar_lea.vmem %s2, %s1667
        // Predicated region
        $region59: #{custom-call.8} parent=57 // pred_check
          _
        $region60: #{custom-call.8} parent=57 // pred_check_branch
          %1670 = sbr.rel (0) target = $region62
        $region61: #{custom-call.8} parent=57 // pred_region
          // Predicated region
          $region63: #{custom-call.8} parent=61 // pred_check
            _
          $region64: #{custom-call.8} parent=61 // pred_check_branch
            %1672 = sbr.rel (0) target = $region66
          $region65: #{custom-call.8} parent=61 // pred_region
            loop: start=0, step=1, limit=1
            $region67: #{custom-call.8} parent=65 // loop_pre_header
              _
            $region68: #{custom-call.8} parent=65 // loop_header
              %s1674 = sphi 0, %s1678
              %p1675 = scmp.ge.s32.totalorder %s1674, 1
              %s1679 = sphi %s1662, %s1662
              %s1680 = sphi %s1668, %s1668
            $region69: #{custom-call.8} parent=65 // loop_header_branch
              %1677 = sbr.rel (%p1675) target = $region73
            $region70: #{custom-call.8} parent=65 // loop_body
              %v1681 = vld [vmem:[%s1679] sm:$0xff]
              %1682 = vst [vmem:[%s1680] sm:$0xff] %v1681
              %v1683 = vld [vmem:[%s1679 + $0x8] sm:$0xff]
              %1684 = vst [vmem:[%s1680 + $0x8] sm:$0xff] %v1683
              %v1685 = vld [vmem:[%s1679 + $0x10] sm:$0xff]
              %1686 = vst [vmem:[%s1680 + $0x10] sm:$0xff] %v1685
              %v1687 = vld [vmem:[%s1679 + $0x18] sm:$0xff]
              %1688 = vst [vmem:[%s1680 + $0x18] sm:$0xff] %v1687
            $region71: #{custom-call.8} parent=65 // loop_footer
              %s1678 = sadd.s32 1, %s1674
            $region72: #{custom-call.8} parent=65 // loop_footer_branch
              %1673 = sbr.rel target = $region68
            $region73: #{custom-call.8} parent=65 // loop_exit
              _
          $region66: #{custom-call.8} parent=61 // pred_fallthru
            _
          // Predicated region
          $region74: #{custom-call.8} parent=61 // pred_check
            _
          $region75: #{custom-call.8} parent=61 // pred_check_branch
            %1690 = sbr.rel target = $region77
          $region76: #{custom-call.8} parent=61 // pred_region
            _
          $region77: #{custom-call.8} parent=61 // pred_fallthru
            _
        $region62: #{custom-call.8} parent=57 // pred_fallthru
          _
        %1691 = vnop
        %s1692 = smul.addr %s11, 32
        %s1693 = scalar_lea.vmem %s3, %s1692
        // Predicated region
        $region78: #{custom-call.8} parent=57 // pred_check
          _
        $region79: #{custom-call.8} parent=57 // pred_check_branch
          %1695 = sbr.rel (0) target = $region81
        $region80: #{custom-call.8} parent=57 // pred_region
          // Predicated region
          $region82: #{custom-call.8} parent=80 // pred_check
            _
          $region83: #{custom-call.8} parent=80 // pred_check_branch
            %1697 = sbr.rel (0) target = $region85
          $region84: #{custom-call.8} parent=80 // pred_region
            loop: start=0, step=1, limit=1
            $region86: #{custom-call.8} parent=84 // loop_pre_header
              _
            $region87: #{custom-call.8} parent=84 // loop_header
              %s1699 = sphi 0, %s1703
              %p1700 = scmp.ge.s32.totalorder %s1699, 1
              %s1704 = sphi %s1666, %s1666
              %s1705 = sphi %s1693, %s1693
            $region88: #{custom-call.8} parent=84 // loop_header_branch
              %1702 = sbr.rel (%p1700) target = $region92
            $region89: #{custom-call.8} parent=84 // loop_body
              %v1706 = vld [vmem:[%s1704] sm:$0xff]
              %1707 = vst [vmem:[%s1705] sm:$0xff] %v1706
              %v1708 = vld [vmem:[%s1704 + $0x8] sm:$0xff]
              %1709 = vst [vmem:[%s1705 + $0x8] sm:$0xff] %v1708
              %v1710 = vld [vmem:[%s1704 + $0x10] sm:$0xff]
              %1711 = vst [vmem:[%s1705 + $0x10] sm:$0xff] %v1710
              %v1712 = vld [vmem:[%s1704 + $0x18] sm:$0xff]
              %1713 = vst [vmem:[%s1705 + $0x18] sm:$0xff] %v1712
            $region90: #{custom-call.8} parent=84 // loop_footer
              %s1703 = sadd.s32 1, %s1699
            $region91: #{custom-call.8} parent=84 // loop_footer_branch
              %1698 = sbr.rel target = $region87
            $region92: #{custom-call.8} parent=84 // loop_exit
              _
          $region85: #{custom-call.8} parent=80 // pred_fallthru
            _
          // Predicated region
          $region93: #{custom-call.8} parent=80 // pred_check
            _
          $region94: #{custom-call.8} parent=80 // pred_check_branch
            %1715 = sbr.rel target = $region96
          $region95: #{custom-call.8} parent=80 // pred_region
            _
          $region96: #{custom-call.8} parent=80 // pred_fallthru
            _
        $region81: #{custom-call.8} parent=57 // pred_fallthru
          _
        %1716 = vnop
      $region58: #{custom-call.8} parent=5 // pred_fallthru
        _
      %p1717 = scmp.le.s32.totalorder 2, %s6
      // Predicated region
      $region97: #{custom-call.8} parent=5 // pred_check
        %p1718 = pneg %p1717
      $region98: #{custom-call.8} parent=5 // pred_check_branch
        %1720 = sbr.rel (%p1718) target = $region100
      $region99: #{custom-call.8} parent=5 // pred_region
        %s1721 = ssub.s32 %s6, 2
        %s1722 = sand.u32 %s12, 1
        %s1723 = sand.u32 %s12, 1
        %s1724 = smul.addr %s1723, 32
        %s1725 = scalar_lea.vmem [#allocation2], %s1724
        %s1726 = sand.u32 %s12, 1
        %s1727 = sand.u32 %s12, 1
        %s1728 = smul.addr %s1727, 32
        %s1729 = scalar_lea.vmem [#allocation3], %s1728
      $region100: #{custom-call.8} parent=5 // pred_fallthru
        _
    $region6: #{custom-call.8} parent=1 // loop_footer
      %s10 = sadd.s32 1, %s6
    $region7: #{custom-call.8} parent=1 // loop_footer_branch
      %5 = sbr.rel target = $region3
    $region8: #{custom-call.8} parent=1 // loop_exit
      _

</llo_original>
